<compile_context>
chip_gen: v7x
topology: tpu7x:2x2x1
jax: 0.10.0
libtpu: 0.0.40
codegen_flags: <defaults>
</compile_context>

<pallas_src>
import functools

import numpy as np
import jax
import jax.numpy as jnp
from jax import lax
from jax.experimental import pallas as pl
from jax.experimental.pallas import tpu as pltpu

H_DIM = 32    # params['h_dim']
LANE = 128    # lane-dense width: conv channels / fc2 output padded up to this


# ------------------------------ Pallas kernel -------------------------------

def _fused_encoder_kernel(x_ref, t1_ref, b1_ref, t2_ref, b2_ref,
                          wf1_ref, bf1_ref, wf2_ref, bf2_ref, o_ref):
    TB = x_ref.shape[2]
    dot_dtype = t1_ref.dtype

    # Bias broadcasts hoisted: read once per grid step (JAX does not CSE them).
    b1 = b1_ref[...]      # [1, 128] f32
    b2 = b2_ref[...]      # [1, 128] f32
    bf1 = bf1_ref[...]    # [1, 256] f32
    bf2 = bf2_ref[...]    # [1, 128] f32

    # x_ref[r, k, b, j] = image[b, 4*k + r, j]  (rows pre-split mod 4; batch on
    # the sublane axis so every row tap below is a leading-axis static slice).
    xv = x_ref[...].astype(dot_dtype)                            # [4, 7, TB, 28]

    # ---------- conv1 (5x5, 1->10ch, channels padded to 128 lanes) ----------
    # Conv row i = 4*half + t needs image rows i..i+4.  All 4 row parities t are
    # stacked on the leading axis so (4, 6, TB, 140) -> (4*6*TB, 140) is a free
    # re-tiling and conv1 is just 2 matmuls (one per pooled-column parity pj).
    xs = [xv[s % 4, (s // 4):(s // 4) + 6] for s in range(8)]    # each [6, TB, 28]
    lhs1 = jnp.stack(
        [jnp.concatenate([xs[t + ki] for ki in range(5)], axis=-1)
         for t in range(4)], axis=0)                             # [4, 6, TB, 140]
    lhs1 = lhs1.reshape(4 * 6 * TB, 5 * 28)
    z1 = jnp.maximum(                                            # max over col parity
        jnp.dot(lhs1, t1_ref[0], preferred_element_type=jnp.float32),
        jnp.dot(lhs1, t1_ref[1], preferred_element_type=jnp.float32),
    ).reshape(4, 6, TB, LANE)
    # 2x2 max-pool over row parity (t = 2*par + pi), then bias + ReLU in f32.
    a1 = [jnp.maximum(jnp.maximum(z1[2 * par], z1[2 * par + 1]) + b1,
                      0.0).astype(dot_dtype)
          for par in range(2)]                                   # 2 x [6, TB, 128]

    # ---------- conv2 (5x5, 10->20ch, padded to 128) + pool + ReLU ----------
    # (Dropout2d is identity in eval mode.)  Pooled-conv1 row 2*I2 + s lives at
    # a1[s % 2][s // 2 + I2]; slices are leading-axis and the ki lane-concat is
    # 128-aligned thanks to the channel padding.
    a1s = [a1[s % 2][(s // 2):(s // 2) + 4] for s in range(6)]   # each [4, TB, 128]
    lhs2 = jnp.stack(
        [jnp.concatenate([a1s[qi + ki] for ki in range(5)], axis=-1)
         for qi in range(2)], axis=0)                            # [2, 4, TB, 640]
    lhs2 = lhs2.reshape(2 * 4 * TB, 5 * LANE)
    z2 = jnp.maximum(
        jnp.dot(lhs2, t2_ref[0], preferred_element_type=jnp.float32),
        jnp.dot(lhs2, t2_ref[1], preferred_element_type=jnp.float32),
    ).reshape(2, 4, TB, LANE)
    a2 = jnp.maximum(jnp.maximum(z2[0], z2[1]) + b2,
                     0.0).astype(dot_dtype)                      # [4, TB, 128]

    # ---------- fc1 + ReLU (F.dropout identity) -----------------------------
    # Lane-concat the four 128-wide I2 slices -> one K=512 matmul; the NCHW
    # flatten permutation is folded into wf1 at prep time.
    h_in = jnp.concatenate([a2[i2] for i2 in range(4)], axis=-1)  # [TB, 512]
    h = jnp.maximum(
        jnp.dot(h_in, wf1_ref[...], preferred_element_type=jnp.float32) + bf1,
        0.0)                                                      # [TB, 256] f32

    # ---------- fc2 (h_dim zero-padded to 128 -> unmasked lane-dense store) --
    o_ref[...] = jnp.dot(h.astype(dot_dtype), wf2_ref[...],
                         preferred_element_type=jnp.float32) + bf2


# --------------------------- host-side weight prep --------------------------

def prepare_params(params, *, dot_dtype=jnp.bfloat16):
    """Build 128-lane-padded Toeplitz conv matrices, fold the flatten permutation
    into fc1, pad fc2's output to 128 lanes.  Matmul operands are stored in
    `dot_dtype` (bf16 by default), biases stay f32."""
    W1 = np.asarray(params["W1"], np.float32)    # [10, 1, 5, 5]
    b1 = np.asarray(params["b1"], np.float32)    # [10]
    W2 = np.asarray(params["W2"], np.float32)    # [20, 10, 5, 5]
    b2 = np.asarray(params["b2"], np.float32)    # [20]
    Wf1 = np.asarray(params["Wf1"], np.float32)  # [256, 320]
    bf1 = np.asarray(params["bf1"], np.float32)  # [256]
    Wf2 = np.asarray(params["Wf2"], np.float32)  # [h_dim, 256]
    bf2 = np.asarray(params["bf2"], np.float32)  # [h_dim]
    h_dim = Wf2.shape[0]
    assert h_dim <= LANE

    # conv1 Toeplitz (output cols J*10+c padded 120 -> 128):
    #   T1[pj, ki*28 + (2J + pj + kj), J*10 + c] = W1[c, 0, ki, kj]
    T1 = np.zeros((2, 5 * 28, LANE), np.float32)
    for pj in range(2):
        for ki in range(5):
            for kj in range(5):
                for J in range(12):
                    T1[pj, ki * 28 + 2 * J + pj + kj,
                       J * 10:(J + 1) * 10] = W1[:, 0, ki, kj]
    b1t = np.zeros((1, LANE), np.float32)
    b1t[0, :120] = np.tile(b1, 12)

    # conv2 Toeplitz over the 128-lane-padded conv1 activations:
    #   T2[qj, ki*128 + (2*J2 + qj + kj)*10 + ci, J2*20 + co] = W2[co, ci, ki, kj]
    T2 = np.zeros((2, 5 * LANE, LANE), np.float32)
    for qj in range(2):
        for ki in range(5):
            for kj in range(5):
                for J2 in range(4):
                    J = 2 * J2 + qj + kj
                    for ci in range(10):
                        T2[qj, ki * LANE + J * 10 + ci,
                           J2 * 20:(J2 + 1) * 20] = W2[:, ci, ki, kj]
    b2t = np.zeros((1, LANE), np.float32)
    b2t[0, :80] = np.tile(b2, 4)

    # fc1: fold PyTorch's NCHW .view(-1, 320) into the weight, laid out on the
    # kernel's 4 x 128-lane input (row m = i2*128 + J2*20 + co; padded rows = 0).
    Wf1p = np.zeros((4 * LANE, 256), np.float32)
    for i2 in range(4):
        for J2 in range(4):
            for co in range(20):
                Wf1p[i2 * LANE + J2 * 20 + co, :] = Wf1[:, co * 16 + i2 * 4 + J2]
    bf1r = bf1[None, :]

    # fc2: zero-pad output channels to LANE for an unmasked lane-dense store.
    Wf2p = np.zeros((256, LANE), np.float32)
    Wf2p[:, :h_dim] = Wf2.T
    bf2p = np.zeros((1, LANE), np.float32)
    bf2p[0, :h_dim] = bf2

    return {
        "t1": jnp.asarray(T1, dot_dtype),
        "t2": jnp.asarray(T2, dot_dtype),
        "wf1": jnp.asarray(Wf1p, dot_dtype),
        "wf2": jnp.asarray(Wf2p, dot_dtype),
        "b1t": jnp.asarray(b1t, jnp.float32),
        "b2t": jnp.asarray(b2t, jnp.float32),
        "bf1": jnp.asarray(bf1r, jnp.float32),
        "bf2": jnp.asarray(bf2p, jnp.float32),
        "h_dim": h_dim,                       # static Python int
    }


# --------------------------------- wrapper ----------------------------------

def _round_up(n, m):
    return ((n + m - 1) // m) * m


def mnist_encoder_forward(x, prep, *, batch_tile=256, vmem_limit_mb=48):
    """x: [B, 28, 28] float32 -> [B, h_dim] float32 (single fused Pallas kernel).

    batch_tile is the main tuning knob: ~256 on v5e/v7x, up to 512 on v6e.
    On v7x choose it so the grid has >= 2 balanced steps (2 TensorCores)."""
    B, H, W = x.shape
    assert (H, W) == (28, 28), "MNIST_encoder expects 28x28 inputs"

    # Balanced batch tile: as large as requested, no bigger than needed.
    num_steps = (B + batch_tile - 1) // batch_tile
    TB = max(8, _round_up((B + num_steps - 1) // num_steps, 8))
    Bp = TB * num_steps

    x = x.astype(jnp.float32)
    if Bp != B:
        x = jnp.pad(x, ((0, Bp - B), (0, 0), (0, 0)))

    # Split image rows mod 4 and put batch on the sublane axis:
    #   x_split[r, k, b, j] = x[b, 4*k + r, j]
    # One merged input array -> a single (strided) DMA per grid step; every conv
    # row tap inside the kernel becomes a leading-axis static slice.
    x_split = x.reshape(Bp, 7, 4, 28).transpose(2, 1, 0, 3)      # [4, 7, Bp, 28]

    out = pl.pallas_call(
        _fused_encoder_kernel,
        out_shape=jax.ShapeDtypeStruct((Bp, LANE), jnp.float32),
        grid=(num_steps,),
        in_specs=[
            pl.BlockSpec((4, 7, TB, 28), lambda i: (0, 0, i, 0)),   # images
            pl.BlockSpec((2, 140, LANE), lambda i: (0, 0, 0)),      # conv1 Toeplitz
            pl.BlockSpec((1, LANE), lambda i: (0, 0)),              # conv1 bias
            pl.BlockSpec((2, 640, LANE), lambda i: (0, 0, 0)),      # conv2 Toeplitz
            pl.BlockSpec((1, LANE), lambda i: (0, 0)),              # conv2 bias
            pl.BlockSpec((512, 256), lambda i: (0, 0)),             # fc1 (permuted, padded)
            pl.BlockSpec((1, 256), lambda i: (0, 0)),               # fc1 bias
            pl.BlockSpec((256, LANE), lambda i: (0, 0)),            # fc2 (padded)
            pl.BlockSpec((1, LANE), lambda i: (0, 0)),              # fc2 bias
        ],
        out_specs=pl.BlockSpec((TB, LANE), lambda i: (i, 0)),
        compiler_params=pltpu.CompilerParams(
            dimension_semantics=("parallel",),
            vmem_limit_bytes=vmem_limit_mb * 1024 * 1024),
    )(x_split, prep["t1"], prep["b1t"], prep["t2"], prep["b2t"],
      prep["wf1"], prep["bf1"], prep["wf2"], prep["bf2"])

    return out[:B, :prep["h_dim"]]


# ----------------------------- params / reference ---------------------------

def init_params(key, h_dim):
    ks = jax.random.split(key, 8)
    s = 0.1
    return {
        "W1":  s * jax.random.normal(ks[0], (10, 1, 5, 5), jnp.float32),
        "b1":  s * jax.random.normal(ks[1], (10,), jnp.float32),
        "W2":  s * jax.random.normal(ks[2], (20, 10, 5, 5), jnp.float32),
        "b2":  s * jax.random.normal(ks[3], (20,), jnp.float32),
        "Wf1": s * jax.random.normal(ks[4], (256, 320), jnp.float32),
        "bf1": s * jax.random.normal(ks[5], (256,), jnp.float32),
        "Wf2": s * jax.random.normal(ks[6], (h_dim, 256), jnp.float32),
        "bf2": s * jax.random.normal(ks[7], (h_dim,), jnp.float32),
    }


def ref_forward(x, p):
    """Pure-JAX reference (mirrors the PyTorch forward in eval mode, f32)."""
    hp = lax.Precision.HIGHEST
    xi = x[:, None, :, :]
    y = lax.conv_general_dilated(xi, p["W1"], (1, 1), "VALID",
                                 dimension_numbers=("NCHW", "OIHW", "NCHW"),
                                 precision=hp) + p["b1"][None, :, None, None]
    y = lax.reduce_window(y, -jnp.inf, lax.max, (1, 1, 2, 2), (1, 1, 2, 2), "VALID")
    y = jnp.maximum(y, 0.0)
    y = lax.conv_general_dilated(y, p["W2"], (1, 1), "VALID",
                                 dimension_numbers=("NCHW", "OIHW", "NCHW"),
                                 precision=hp) + p["b2"][None, :, None, None]
    y = lax.reduce_window(y, -jnp.inf, lax.max, (1, 1, 2, 2), (1, 1, 2, 2), "VALID")
    y = jnp.maximum(y, 0.0)
    flat = y.reshape(y.shape[0], 320)
    h = jnp.maximum(jnp.dot(flat, p["Wf1"].T, precision=hp) + p["bf1"], 0.0)
    return jnp.dot(h, p["Wf2"].T, precision=hp) + p["bf2"]


if __name__ == "__main__":
    key = jax.random.PRNGKey(0)
    pkey, xkey = jax.random.split(key)
    params = init_params(pkey, H_DIM)

    # B*N = 12 images of 28x28 (wrapper pads the batch to the tile internally).
    x = jax.random.normal(xkey, (12, 28, 28), jnp.float32)
    ref = np.asarray(ref_forward(x, params))

    # 1) f32-operand path: tight check of the fused-kernel structure/math.
    prep_f32 = prepare_params(params, dot_dtype=jnp.float32)
    out_f32 = jax.jit(functools.partial(mnist_encoder_forward, prep=prep_f32))(x)
    jax.block_until_ready(out_f32)
    assert out_f32.shape == (12, H_DIM) and out_f32.dtype == jnp.float32
    err_f32 = float(np.max(np.abs(np.asarray(out_f32) - ref)))
    assert np.allclose(np.asarray(out_f32), ref, rtol=1e-2, atol=1e-2), (
        "f32 path max abs err = %g" % err_f32)

    # 2) bf16-operand path (default; the recommended fast path on v6e/v7x).
    prep_bf16 = prepare_params(params)
    out_bf16 = jax.jit(functools.partial(mnist_encoder_forward, prep=prep_bf16))(x)
    jax.block_until_ready(out_bf16)
    assert out_bf16.shape == (12, H_DIM) and out_bf16.dtype == jnp.float32
    err_bf16 = float(np.max(np.abs(np.asarray(out_bf16) - ref)))
    assert np.allclose(np.asarray(out_bf16), ref, rtol=1e-1, atol=1e-1), (
        "bf16 path max abs err = %g" % err_bf16)

    print("KERNEL_OK")
</pallas_src>

<mosaic_0001>
module attributes {stable_mosaic.version = 11 : i64} {
  func.func @_fused_encoder_kernel(%arg0: i32, %arg1: memref<4x7x16x28xf32, #tpu.memory_space<vmem>>, %arg2: memref<2x140x128xf32, #tpu.memory_space<vmem>>, %arg3: memref<1x128xf32, #tpu.memory_space<vmem>>, %arg4: memref<2x640x128xf32, #tpu.memory_space<vmem>>, %arg5: memref<1x128xf32, #tpu.memory_space<vmem>>, %arg6: memref<512x256xf32, #tpu.memory_space<vmem>>, %arg7: memref<1x256xf32, #tpu.memory_space<vmem>>, %arg8: memref<256x128xf32, #tpu.memory_space<vmem>>, %arg9: memref<1x128xf32, #tpu.memory_space<vmem>>, %arg10: memref<16x128xf32, #tpu.memory_space<vmem>>) attributes {dimension_semantics = [#tpu.dimension_semantics<parallel>], iteration_bounds = array<i64: 1>, scalar_prefetch = 0 : i64, scratch_operands = 0 : i64, tpu.core_type = #tpu.core_type<tc>, window_params = [{transform_indices = @transform_0, window_bounds = array<i64: 4, 7, 16, 28>}, {pipeline_mode = #tpu.pipeline_mode<synchronous>, transform_indices = @transform_1, window_bounds = array<i64: 2, 140, 128>}, {pipeline_mode = #tpu.pipeline_mode<synchronous>, transform_indices = @transform_2, window_bounds = array<i64: 1, 128>}, {pipeline_mode = #tpu.pipeline_mode<synchronous>, transform_indices = @transform_3, window_bounds = array<i64: 2, 640, 128>}, {pipeline_mode = #tpu.pipeline_mode<synchronous>, transform_indices = @transform_4, window_bounds = array<i64: 1, 128>}, {pipeline_mode = #tpu.pipeline_mode<synchronous>, transform_indices = @transform_5, window_bounds = array<i64: 512, 256>}, {pipeline_mode = #tpu.pipeline_mode<synchronous>, transform_indices = @transform_6, window_bounds = array<i64: 1, 256>}, {pipeline_mode = #tpu.pipeline_mode<synchronous>, transform_indices = @transform_7, window_bounds = array<i64: 256, 128>}, {pipeline_mode = #tpu.pipeline_mode<synchronous>, transform_indices = @transform_8, window_bounds = array<i64: 1, 128>}, {transform_indices = @transform_9, window_bounds = array<i64: 16, 128>}]} {
    %c0 = arith.constant 0 : index
    %c0_0 = arith.constant 0 : index
    %0 = vector.load %arg3[%c0, %c0_0] : memref<1x128xf32, #tpu.memory_space<vmem>>, vector<1x128xf32>
    %c0_1 = arith.constant 0 : index
    %c0_2 = arith.constant 0 : index
    %1 = vector.load %arg5[%c0_1, %c0_2] : memref<1x128xf32, #tpu.memory_space<vmem>>, vector<1x128xf32>
    %c0_3 = arith.constant 0 : index
    %c0_4 = arith.constant 0 : index
    %2 = vector.load %arg7[%c0_3, %c0_4] : memref<1x256xf32, #tpu.memory_space<vmem>>, vector<1x256xf32>
    %c0_5 = arith.constant 0 : index
    %c0_6 = arith.constant 0 : index
    %3 = vector.load %arg9[%c0_5, %c0_6] : memref<1x128xf32, #tpu.memory_space<vmem>>, vector<1x128xf32>
    %c0_7 = arith.constant 0 : index
    %c0_8 = arith.constant 0 : index
    %c0_9 = arith.constant 0 : index
    %c0_10 = arith.constant 0 : index
    %4 = vector.load %arg1[%c0_7, %c0_8, %c0_9, %c0_10] : memref<4x7x16x28xf32, #tpu.memory_space<vmem>>, vector<4x7x16x28xf32>
    %5 = vector.extract_strided_slice %4 {offsets = [0, 0, 0, 0], sizes = [1, 6, 16, 28], strides = [1, 1, 1, 1]} : vector<4x7x16x28xf32> to vector<1x6x16x28xf32>
    %6 = vector.shape_cast %5 : vector<1x6x16x28xf32> to vector<6x16x28xf32>
    %7 = vector.extract_strided_slice %4 {offsets = [1, 0, 0, 0], sizes = [1, 6, 16, 28], strides = [1, 1, 1, 1]} : vector<4x7x16x28xf32> to vector<1x6x16x28xf32>
    %8 = vector.shape_cast %7 : vector<1x6x16x28xf32> to vector<6x16x28xf32>
    %9 = vector.extract_strided_slice %4 {offsets = [2, 0, 0, 0], sizes = [1, 6, 16, 28], strides = [1, 1, 1, 1]} : vector<4x7x16x28xf32> to vector<1x6x16x28xf32>
    %10 = vector.shape_cast %9 : vector<1x6x16x28xf32> to vector<6x16x28xf32>
    %11 = vector.extract_strided_slice %4 {offsets = [3, 0, 0, 0], sizes = [1, 6, 16, 28], strides = [1, 1, 1, 1]} : vector<4x7x16x28xf32> to vector<1x6x16x28xf32>
    %12 = vector.shape_cast %11 : vector<1x6x16x28xf32> to vector<6x16x28xf32>
    %13 = vector.extract_strided_slice %4 {offsets = [0, 1, 0, 0], sizes = [1, 6, 16, 28], strides = [1, 1, 1, 1]} : vector<4x7x16x28xf32> to vector<1x6x16x28xf32>
    %14 = vector.shape_cast %13 : vector<1x6x16x28xf32> to vector<6x16x28xf32>
    %15 = vector.extract_strided_slice %4 {offsets = [1, 1, 0, 0], sizes = [1, 6, 16, 28], strides = [1, 1, 1, 1]} : vector<4x7x16x28xf32> to vector<1x6x16x28xf32>
    %16 = vector.shape_cast %15 : vector<1x6x16x28xf32> to vector<6x16x28xf32>
    %17 = vector.extract_strided_slice %4 {offsets = [2, 1, 0, 0], sizes = [1, 6, 16, 28], strides = [1, 1, 1, 1]} : vector<4x7x16x28xf32> to vector<1x6x16x28xf32>
    %18 = vector.shape_cast %17 : vector<1x6x16x28xf32> to vector<6x16x28xf32>
    %19 = vector.extract_strided_slice %4 {offsets = [3, 1, 0, 0], sizes = [1, 6, 16, 28], strides = [1, 1, 1, 1]} : vector<4x7x16x28xf32> to vector<1x6x16x28xf32>
    %20 = vector.shape_cast %19 : vector<1x6x16x28xf32> to vector<6x16x28xf32>
    %21 = tpu.concatenate %6, %8, %10, %12, %14 in 2 : vector<6x16x28xf32>, vector<6x16x28xf32>, vector<6x16x28xf32>, vector<6x16x28xf32>, vector<6x16x28xf32> -> vector<6x16x140xf32>
    %22 = tpu.concatenate %8, %10, %12, %14, %16 in 2 : vector<6x16x28xf32>, vector<6x16x28xf32>, vector<6x16x28xf32>, vector<6x16x28xf32>, vector<6x16x28xf32> -> vector<6x16x140xf32>
    %23 = tpu.concatenate %10, %12, %14, %16, %18 in 2 : vector<6x16x28xf32>, vector<6x16x28xf32>, vector<6x16x28xf32>, vector<6x16x28xf32>, vector<6x16x28xf32> -> vector<6x16x140xf32>
    %24 = tpu.concatenate %12, %14, %16, %18, %20 in 2 : vector<6x16x28xf32>, vector<6x16x28xf32>, vector<6x16x28xf32>, vector<6x16x28xf32>, vector<6x16x28xf32> -> vector<6x16x140xf32>
    %25 = vector.shape_cast %21 : vector<6x16x140xf32> to vector<1x6x16x140xf32>
    %26 = vector.shape_cast %22 : vector<6x16x140xf32> to vector<1x6x16x140xf32>
    %27 = vector.shape_cast %23 : vector<6x16x140xf32> to vector<1x6x16x140xf32>
    %28 = vector.shape_cast %24 : vector<6x16x140xf32> to vector<1x6x16x140xf32>
    %29 = tpu.concatenate %25, %26, %27, %28 in 0 : vector<1x6x16x140xf32>, vector<1x6x16x140xf32>, vector<1x6x16x140xf32>, vector<1x6x16x140xf32> -> vector<4x6x16x140xf32>
    %30 = vector.shape_cast %29 : vector<4x6x16x140xf32> to vector<384x140xf32>
    %c0_11 = arith.constant 0 : index
    %c0_12 = arith.constant 0 : index
    %c0_13 = arith.constant 0 : index
    %31 = vector.load %arg2[%c0_11, %c0_12, %c0_13] : memref<2x140x128xf32, #tpu.memory_space<vmem>>, vector<1x140x128xf32>
    %32 = vector.shape_cast %31 : vector<1x140x128xf32> to vector<140x128xf32>
    %cst = arith.constant dense<0.000000e+00> : vector<384x128xf32>
    %33 = tpu.matmul %30, %32, %cst {dimension_numbers = #tpu.dot_dimension_numbers<[1], [0], [0], [1], [0, 0, 1, 1], [], []>} : vector<384x140xf32>, vector<140x128xf32>, vector<384x128xf32> -> vector<384x128xf32>
    %c1 = arith.constant 1 : index
    %c0_14 = arith.constant 0 : index
    %c0_15 = arith.constant 0 : index
    %34 = vector.load %arg2[%c1, %c0_14, %c0_15] : memref<2x140x128xf32, #tpu.memory_space<vmem>>, vector<1x140x128xf32>
    %35 = vector.shape_cast %34 : vector<1x140x128xf32> to vector<140x128xf32>
    %cst_16 = arith.constant dense<0.000000e+00> : vector<384x128xf32>
    %36 = tpu.matmul %30, %35, %cst_16 {dimension_numbers = #tpu.dot_dimension_numbers<[1], [0], [0], [1], [0, 0, 1, 1], [], []>} : vector<384x140xf32>, vector<140x128xf32>, vector<384x128xf32> -> vector<384x128xf32>
    %37 = arith.maximumf %33, %36 : vector<384x128xf32>
    %38 = vector.shape_cast %37 : vector<384x128xf32> to vector<4x6x16x128xf32>
    %39 = vector.extract_strided_slice %38 {offsets = [0, 0, 0, 0], sizes = [1, 6, 16, 128], strides = [1, 1, 1, 1]} : vector<4x6x16x128xf32> to vector<1x6x16x128xf32>
    %40 = vector.shape_cast %39 : vector<1x6x16x128xf32> to vector<6x16x128xf32>
    %41 = vector.extract_strided_slice %38 {offsets = [1, 0, 0, 0], sizes = [1, 6, 16, 128], strides = [1, 1, 1, 1]} : vector<4x6x16x128xf32> to vector<1x6x16x128xf32>
    %42 = vector.shape_cast %41 : vector<1x6x16x128xf32> to vector<6x16x128xf32>
    %43 = arith.maximumf %40, %42 : vector<6x16x128xf32>
    %44 = vector.shape_cast %0 : vector<1x128xf32> to vector<1x1x128xf32>
    %45 = vector.broadcast %44 : vector<1x1x128xf32> to vector<6x16x128xf32>
    %46 = arith.addf %43, %45 : vector<6x16x128xf32>
    %cst_17 = arith.constant 0.000000e+00 : f32
    %47 = vector.broadcast %cst_17 : f32 to vector<6x16x128xf32>
    %48 = arith.maximumf %46, %47 : vector<6x16x128xf32>
    %49 = vector.extract_strided_slice %38 {offsets = [2, 0, 0, 0], sizes = [1, 6, 16, 128], strides = [1, 1, 1, 1]} : vector<4x6x16x128xf32> to vector<1x6x16x128xf32>
    %50 = vector.shape_cast %49 : vector<1x6x16x128xf32> to vector<6x16x128xf32>
    %51 = vector.extract_strided_slice %38 {offsets = [3, 0, 0, 0], sizes = [1, 6, 16, 128], strides = [1, 1, 1, 1]} : vector<4x6x16x128xf32> to vector<1x6x16x128xf32>
    %52 = vector.shape_cast %51 : vector<1x6x16x128xf32> to vector<6x16x128xf32>
    %53 = arith.maximumf %50, %52 : vector<6x16x128xf32>
    %54 = vector.shape_cast %0 : vector<1x128xf32> to vector<1x1x128xf32>
    %55 = vector.broadcast %54 : vector<1x1x128xf32> to vector<6x16x128xf32>
    %56 = arith.addf %53, %55 : vector<6x16x128xf32>
    %cst_18 = arith.constant 0.000000e+00 : f32
    %57 = vector.broadcast %cst_18 : f32 to vector<6x16x128xf32>
    %58 = arith.maximumf %56, %57 : vector<6x16x128xf32>
    %59 = vector.extract_strided_slice %48 {offsets = [0, 0, 0], sizes = [4, 16, 128], strides = [1, 1, 1]} : vector<6x16x128xf32> to vector<4x16x128xf32>
    %60 = vector.extract_strided_slice %58 {offsets = [0, 0, 0], sizes = [4, 16, 128], strides = [1, 1, 1]} : vector<6x16x128xf32> to vector<4x16x128xf32>
    %61 = vector.extract_strided_slice %48 {offsets = [1, 0, 0], sizes = [4, 16, 128], strides = [1, 1, 1]} : vector<6x16x128xf32> to vector<4x16x128xf32>
    %62 = vector.extract_strided_slice %58 {offsets = [1, 0, 0], sizes = [4, 16, 128], strides = [1, 1, 1]} : vector<6x16x128xf32> to vector<4x16x128xf32>
    %63 = vector.extract_strided_slice %48 {offsets = [2, 0, 0], sizes = [4, 16, 128], strides = [1, 1, 1]} : vector<6x16x128xf32> to vector<4x16x128xf32>
    %64 = vector.extract_strided_slice %58 {offsets = [2, 0, 0], sizes = [4, 16, 128], strides = [1, 1, 1]} : vector<6x16x128xf32> to vector<4x16x128xf32>
    %65 = tpu.concatenate %59, %60, %61, %62, %63 in 2 : vector<4x16x128xf32>, vector<4x16x128xf32>, vector<4x16x128xf32>, vector<4x16x128xf32>, vector<4x16x128xf32> -> vector<4x16x640xf32>
    %66 = tpu.concatenate %60, %61, %62, %63, %64 in 2 : vector<4x16x128xf32>, vector<4x16x128xf32>, vector<4x16x128xf32>, vector<4x16x128xf32>, vector<4x16x128xf32> -> vector<4x16x640xf32>
    %67 = vector.shape_cast %65 : vector<4x16x640xf32> to vector<1x4x16x640xf32>
    %68 = vector.shape_cast %66 : vector<4x16x640xf32> to vector<1x4x16x640xf32>
    %69 = tpu.concatenate %67, %68 in 0 : vector<1x4x16x640xf32>, vector<1x4x16x640xf32> -> vector<2x4x16x640xf32>
    %70 = vector.shape_cast %69 : vector<2x4x16x640xf32> to vector<128x640xf32>
    %c0_19 = arith.constant 0 : index
    %c0_20 = arith.constant 0 : index
    %c0_21 = arith.constant 0 : index
    %71 = vector.load %arg4[%c0_19, %c0_20, %c0_21] : memref<2x640x128xf32, #tpu.memory_space<vmem>>, vector<1x640x128xf32>
    %72 = vector.shape_cast %71 : vector<1x640x128xf32> to vector<640x128xf32>
    %cst_22 = arith.constant dense<0.000000e+00> : vector<128x128xf32>
    %73 = tpu.matmul %70, %72, %cst_22 {dimension_numbers = #tpu.dot_dimension_numbers<[1], [0], [0], [1], [0, 0, 1, 1], [], []>} : vector<128x640xf32>, vector<640x128xf32>, vector<128x128xf32> -> vector<128x128xf32>
    %c1_23 = arith.constant 1 : index
    %c0_24 = arith.constant 0 : index
    %c0_25 = arith.constant 0 : index
    %74 = vector.load %arg4[%c1_23, %c0_24, %c0_25] : memref<2x640x128xf32, #tpu.memory_space<vmem>>, vector<1x640x128xf32>
    %75 = vector.shape_cast %74 : vector<1x640x128xf32> to vector<640x128xf32>
    %cst_26 = arith.constant dense<0.000000e+00> : vector<128x128xf32>
    %76 = tpu.matmul %70, %75, %cst_26 {dimension_numbers = #tpu.dot_dimension_numbers<[1], [0], [0], [1], [0, 0, 1, 1], [], []>} : vector<128x640xf32>, vector<640x128xf32>, vector<128x128xf32> -> vector<128x128xf32>
    %77 = arith.maximumf %73, %76 : vector<128x128xf32>
    %78 = vector.shape_cast %77 : vector<128x128xf32> to vector<2x4x16x128xf32>
    %79 = vector.extract_strided_slice %78 {offsets = [0, 0, 0, 0], sizes = [1, 4, 16, 128], strides = [1, 1, 1, 1]} : vector<2x4x16x128xf32> to vector<1x4x16x128xf32>
    %80 = vector.shape_cast %79 : vector<1x4x16x128xf32> to vector<4x16x128xf32>
    %81 = vector.extract_strided_slice %78 {offsets = [1, 0, 0, 0], sizes = [1, 4, 16, 128], strides = [1, 1, 1, 1]} : vector<2x4x16x128xf32> to vector<1x4x16x128xf32>
    %82 = vector.shape_cast %81 : vector<1x4x16x128xf32> to vector<4x16x128xf32>
    %83 = arith.maximumf %80, %82 : vector<4x16x128xf32>
    %84 = vector.shape_cast %1 : vector<1x128xf32> to vector<1x1x128xf32>
    %85 = vector.broadcast %84 : vector<1x1x128xf32> to vector<4x16x128xf32>
    %86 = arith.addf %83, %85 : vector<4x16x128xf32>
    %cst_27 = arith.constant 0.000000e+00 : f32
    %87 = vector.broadcast %cst_27 : f32 to vector<4x16x128xf32>
    %88 = arith.maximumf %86, %87 : vector<4x16x128xf32>
    %89 = vector.extract_strided_slice %88 {offsets = [0, 0, 0], sizes = [1, 16, 128], strides = [1, 1, 1]} : vector<4x16x128xf32> to vector<1x16x128xf32>
    %90 = vector.shape_cast %89 : vector<1x16x128xf32> to vector<16x128xf32>
    %91 = vector.extract_strided_slice %88 {offsets = [1, 0, 0], sizes = [1, 16, 128], strides = [1, 1, 1]} : vector<4x16x128xf32> to vector<1x16x128xf32>
    %92 = vector.shape_cast %91 : vector<1x16x128xf32> to vector<16x128xf32>
    %93 = vector.extract_strided_slice %88 {offsets = [2, 0, 0], sizes = [1, 16, 128], strides = [1, 1, 1]} : vector<4x16x128xf32> to vector<1x16x128xf32>
    %94 = vector.shape_cast %93 : vector<1x16x128xf32> to vector<16x128xf32>
    %95 = vector.extract_strided_slice %88 {offsets = [3, 0, 0], sizes = [1, 16, 128], strides = [1, 1, 1]} : vector<4x16x128xf32> to vector<1x16x128xf32>
    %96 = vector.shape_cast %95 : vector<1x16x128xf32> to vector<16x128xf32>
    %97 = tpu.concatenate %90, %92, %94, %96 in 1 : vector<16x128xf32>, vector<16x128xf32>, vector<16x128xf32>, vector<16x128xf32> -> vector<16x512xf32>
    %c0_28 = arith.constant 0 : index
    %c0_29 = arith.constant 0 : index
    %98 = vector.load %arg6[%c0_28, %c0_29] : memref<512x256xf32, #tpu.memory_space<vmem>>, vector<512x256xf32>
    %cst_30 = arith.constant dense<0.000000e+00> : vector<16x256xf32>
    %99 = tpu.matmul %97, %98, %cst_30 {dimension_numbers = #tpu.dot_dimension_numbers<[1], [0], [0], [1], [0, 0, 1, 1], [], []>} : vector<16x512xf32>, vector<512x256xf32>, vector<16x256xf32> -> vector<16x256xf32>
    %100 = vector.broadcast %2 : vector<1x256xf32> to vector<16x256xf32>
    %101 = arith.addf %99, %100 : vector<16x256xf32>
    %cst_31 = arith.constant 0.000000e+00 : f32
    %102 = vector.broadcast %cst_31 : f32 to vector<16x256xf32>
    %103 = arith.maximumf %101, %102 : vector<16x256xf32>
    %c0_32 = arith.constant 0 : index
    %c0_33 = arith.constant 0 : index
    %104 = vector.load %arg8[%c0_32, %c0_33] : memref<256x128xf32, #tpu.memory_space<vmem>>, vector<256x128xf32>
    %cst_34 = arith.constant dense<0.000000e+00> : vector<16x128xf32>
    %105 = tpu.matmul %103, %104, %cst_34 {dimension_numbers = #tpu.dot_dimension_numbers<[1], [0], [0], [1], [0, 0, 1, 1], [], []>} : vector<16x256xf32>, vector<256x128xf32>, vector<16x128xf32> -> vector<16x128xf32>
    %106 = vector.broadcast %3 : vector<1x128xf32> to vector<16x128xf32>
    %107 = arith.addf %105, %106 : vector<16x128xf32>
    %c0_35 = arith.constant 0 : index
    %c0_36 = arith.constant 0 : index
    %108 = vector.load %arg10[%c0_35, %c0_36] : memref<16x128xf32, #tpu.memory_space<vmem>>, vector<16x128xf32>
    tpu.vector_store %arg10[%c0_35, %c0_36], %107 {strides = array<i32>} : memref<16x128xf32, #tpu.memory_space<vmem>>, vector<16x128xf32>,
    return
  }
  func.func @transform_0(%arg0: i32) -> (i32, i32, i32, i32) {
    %c0_i32 = arith.constant 0 : i32
    %c0_i32_0 = arith.constant 0 : i32
    %c0_i32_1 = arith.constant 0 : i32
    %c0_i32_2 = arith.constant 0 : i32
    return %c0_i32, %c0_i32_0, %arg0, %c0_i32_1 : i32, i32, i32, i32
  }
  func.func @transform_1(%arg0: i32) -> (i32, i32, i32) {
    %c0_i32 = arith.constant 0 : i32
    %c0_i32_0 = arith.constant 0 : i32
    %c0_i32_1 = arith.constant 0 : i32
    %c0_i32_2 = arith.constant 0 : i32
    return %c0_i32, %c0_i32_0, %c0_i32_1 : i32, i32, i32
  }
  func.func @transform_2(%arg0: i32) -> (i32, i32) {
    %c0_i32 = arith.constant 0 : i32
    %c0_i32_0 = arith.constant 0 : i32
    %c0_i32_1 = arith.constant 0 : i32
    return %c0_i32, %c0_i32_0 : i32, i32
  }
  func.func @transform_3(%arg0: i32) -> (i32, i32, i32) {
    %c0_i32 = arith.constant 0 : i32
    %c0_i32_0 = arith.constant 0 : i32
    %c0_i32_1 = arith.constant 0 : i32
    %c0_i32_2 = arith.constant 0 : i32
    return %c0_i32, %c0_i32_0, %c0_i32_1 : i32, i32, i32
  }
  func.func @transform_4(%arg0: i32) -> (i32, i32) {
    %c0_i32 = arith.constant 0 : i32
    %c0_i32_0 = arith.constant 0 : i32
    %c0_i32_1 = arith.constant 0 : i32
    return %c0_i32, %c0_i32_0 : i32, i32
  }
  func.func @transform_5(%arg0: i32) -> (i32, i32) {
    %c0_i32 = arith.constant 0 : i32
    %c0_i32_0 = arith.constant 0 : i32
    %c0_i32_1 = arith.constant 0 : i32
    return %c0_i32, %c0_i32_0 : i32, i32
  }
  func.func @transform_6(%arg0: i32) -> (i32, i32) {
    %c0_i32 = arith.constant 0 : i32
    %c0_i32_0 = arith.constant 0 : i32
    %c0_i32_1 = arith.constant 0 : i32
    return %c0_i32, %c0_i32_0 : i32, i32
  }
  func.func @transform_7(%arg0: i32) -> (i32, i32) {
    %c0_i32 = arith.constant 0 : i32
    %c0_i32_0 = arith.constant 0 : i32
    %c0_i32_1 = arith.constant 0 : i32
    return %c0_i32, %c0_i32_0 : i32, i32
  }
  func.func @transform_8(%arg0: i32) -> (i32, i32) {
    %c0_i32 = arith.constant 0 : i32
    %c0_i32_0 = arith.constant 0 : i32
    %c0_i32_1 = arith.constant 0 : i32
    return %c0_i32, %c0_i32_0 : i32, i32
  }
  func.func @transform_9(%arg0: i32) -> (i32, i32) {
    %c0_i32 = arith.constant 0 : i32
    %c0_i32_0 = arith.constant 0 : i32
    return %arg0, %c0_i32 : i32, i32
  }
}

</mosaic_0001>

<llo_original>
// kernel: mnist_encoder_forward.1
$region0: #{mnist_encoder_forward.1}
  #allocation0 [shape = 'u32[]', space=smem, size = 0x4, offset = 0x4, fixed_abs, tag = 'smem constant byte address 0x4 - core index']
  #allocation1 [shape = 'u32[144,128]{1,0:T(1,128)}', space=vmem, size = 0x12000, scoped, tag = 'internal scratch']
  %s0 = inlined_call_operand.vmem [shape: f32[4,7,16,28], index: 0, kind: input, shape index: {}]
  %s1 = inlined_call_operand.vmem [shape: f32[2,140,128], index: 1, kind: input, shape index: {}]
  %s2 = inlined_call_operand.vmem [shape: f32[1,128], index: 2, kind: input, shape index: {}]
  %s3 = inlined_call_operand.vmem [shape: f32[2,640,128], index: 3, kind: input, shape index: {}]
  %s4 = inlined_call_operand.vmem [shape: f32[1,128], index: 4, kind: input, shape index: {}]
  %s5 = inlined_call_operand.vmem [shape: f32[512,256], index: 5, kind: input, shape index: {}]
  %s6 = inlined_call_operand.vmem [shape: f32[1,256], index: 6, kind: input, shape index: {}]
  %s7 = inlined_call_operand.hbm [shape: f32[256,128], index: 7, kind: input, shape index: {}]
  %s8 = inlined_call_operand.vmem [shape: f32[1,128], index: 8, kind: input, shape index: {}]
  %s9 = inlined_call_operand.hbm [shape: f32[16,128], index: 9, kind: output, shape index: {}]
  %s10 = sld [smem:[#allocation0]]
  $region50: #{mnist_encoder_forward.1} parent=0
    _
  %s12 = ssub.s32 1, %s10
  %s13 = scalar_select 0, %s12, %s10
  $region1: #{mnist_encoder_forward.1} parent=0
    #allocation2 [shape = 'u8[131072]{0}', space=vmem, size = 0x20000, scoped, tag = 'input window, operand 7, single buffered']
    #allocation3 [shape = 's32[1]{0}', space=sflag, size = 0x4, scoped, tag = 'scoped memory for mnist_encoder_forward.1']
    #allocation4 [shape = 's32[1]{0}', space=sflag, size = 0x4, scoped, tag = 'scoped memory for mnist_encoder_forward.1']
    #allocation5 [shape = 'u8[8192]{0}', space=vmem, size = 0x2000, scoped, tag = 'output window, operand 0, single buffered']
    %14 = vsyncpa [#allocation3], 0
    %15 = vsyncpa [#allocation4], 0
    // Predicated region
    $region2: #{mnist_encoder_forward.1} parent=1 // pred_check
      _
    $region3: #{mnist_encoder_forward.1} parent=1 // pred_check_branch
      %17 = sbr.rel (0) target = $region5
    $region4: #{mnist_encoder_forward.1} parent=1 // pred_region
      _
    $region5: #{mnist_encoder_forward.1} parent=1 // pred_fallthru
      _
    // Predicated region
    $region6: #{mnist_encoder_forward.1} parent=1 // pred_check
      _
    $region7: #{mnist_encoder_forward.1} parent=1 // pred_check_branch
      %19 = sbr.rel (0) target = $region9
    $region8: #{mnist_encoder_forward.1} parent=1 // pred_region
      _
    $region9: #{mnist_encoder_forward.1} parent=1 // pred_fallthru
      _
    // Predicated region
    $region10: #{mnist_encoder_forward.1} parent=1 // pred_check
      _
    $region11: #{mnist_encoder_forward.1} parent=1 // pred_check_branch
      %21 = sbr.rel (0) target = $region13
    $region12: #{mnist_encoder_forward.1} parent=1 // pred_region
      _
    $region13: #{mnist_encoder_forward.1} parent=1 // pred_fallthru
      _
    // Predicated region
    $region14: #{mnist_encoder_forward.1} parent=1 // pred_check
      _
    $region15: #{mnist_encoder_forward.1} parent=1 // pred_check_branch
      %23 = sbr.rel (0) target = $region17
    $region16: #{mnist_encoder_forward.1} parent=1 // pred_region
      _
    $region17: #{mnist_encoder_forward.1} parent=1 // pred_fallthru
      _
    // Predicated region
    $region18: #{mnist_encoder_forward.1} parent=1 // pred_check
      _
    $region19: #{mnist_encoder_forward.1} parent=1 // pred_check_branch
      %25 = sbr.rel (0) target = $region21
    $region20: #{mnist_encoder_forward.1} parent=1 // pred_region
      _
    $region21: #{mnist_encoder_forward.1} parent=1 // pred_fallthru
      _
    // Predicated region
    $region22: #{mnist_encoder_forward.1} parent=1 // pred_check
      _
    $region23: #{mnist_encoder_forward.1} parent=1 // pred_check_branch
      %27 = sbr.rel (0) target = $region25
    $region24: #{mnist_encoder_forward.1} parent=1 // pred_region
      _
    $region25: #{mnist_encoder_forward.1} parent=1 // pred_fallthru
      _
    // Predicated region
    $region26: #{mnist_encoder_forward.1} parent=1 // pred_check
      _
    $region27: #{mnist_encoder_forward.1} parent=1 // pred_check_branch
      %29 = sbr.rel (0) target = $region29
    $region28: #{mnist_encoder_forward.1} parent=1 // pred_region
      _
    $region29: #{mnist_encoder_forward.1} parent=1 // pred_fallthru
      _
    // Predicated region
    $region30: #{mnist_encoder_forward.1} parent=1 // pred_check
      _
    $region31: #{mnist_encoder_forward.1} parent=1 // pred_check_branch
      %31 = sbr.rel (0) target = $region33
    $region32: #{mnist_encoder_forward.1} parent=1 // pred_region
      %s33 = ssub.s32 4096, 4096
      %34 = vsyncadd [#allocation3], %s33
      %s35 = sshll.u32 [#allocation2], 4
      %s36 = int_to_ptr.vmem [resolvable:$true] %s35
      %41 = dma.hbm_to_vmem [thread:$0]  %s7, 4096, %s36, [#allocation3], 128, 128, 8
    $region33: #{mnist_encoder_forward.1} parent=1 // pred_fallthru
      _
    // Predicated region
    $region34: #{mnist_encoder_forward.1} parent=1 // pred_check
      _
    $region35: #{mnist_encoder_forward.1} parent=1 // pred_check_branch
      %43 = sbr.rel (0) target = $region37
    $region36: #{mnist_encoder_forward.1} parent=1 // pred_region
      _
    $region37: #{mnist_encoder_forward.1} parent=1 // pred_fallthru
      _
    // Predicated region
    $region38: #{mnist_encoder_forward.1} parent=1 // pred_check
      _
    $region39: #{mnist_encoder_forward.1} parent=1 // pred_check_branch
      %45 = sbr.rel (0) target = $region41
    $region40: #{mnist_encoder_forward.1} parent=1 // pred_region
      %46 = dma.done [#allocation3], 4096
    $region41: #{mnist_encoder_forward.1} parent=1 // pred_fallthru
      _
    %v47 = vld [vmem:[%s2] sm:$0x1]
    %v48 = vld [vmem:[%s4] sm:$0x1]
    %v49 = vld [vmem:[%s6] sm:$0x3]
    %v50 = vld [vmem:[%s8] sm:$0x1]
    %v51 = vld [vmem:[%s0] sm:$0xff]
    %v52 = vld [vmem:[%s0 + $0x8] sm:$0xff]
    %v53 = vld [vmem:[%s0 + $0x10] sm:$0xff]
    %v54 = vld [vmem:[%s0 + $0x18] sm:$0xff]
    %v55 = vld [vmem:[%s0 + $0x20] sm:$0xff]
    %v56 = vld [vmem:[%s0 + $0x28] sm:$0xff]
    %v57 = vld [vmem:[%s0 + $0x30] sm:$0xff]
    %v58 = vld [vmem:[%s0 + $0x38] sm:$0xff]
    %v59 = vld [vmem:[%s0 + $0x40] sm:$0xff]
    %v60 = vld [vmem:[%s0 + $0x48] sm:$0xff]
    %v61 = vld [vmem:[%s0 + $0x50] sm:$0xff]
    %v62 = vld [vmem:[%s0 + $0x58] sm:$0xff]
    %v63 = vld [vmem:[%s0 + $0x60] sm:$0xff]
    %v64 = vld [vmem:[%s0 + $0x68] sm:$0xff]
    %v65 = vld [vmem:[%s0 + $0x70] sm:$0xff]
    %v66 = vld [vmem:[%s0 + $0x78] sm:$0xff]
    %v67 = vld [vmem:[%s0 + $0x80] sm:$0xff]
    %v68 = vld [vmem:[%s0 + $0x88] sm:$0xff]
    %v69 = vld [vmem:[%s0 + $0x90] sm:$0xff]
    %v70 = vld [vmem:[%s0 + $0x98] sm:$0xff]
    %v71 = vld [vmem:[%s0 + $0xa0] sm:$0xff]
    %v72 = vld [vmem:[%s0 + $0xa8] sm:$0xff]
    %v73 = vld [vmem:[%s0 + $0xb0] sm:$0xff]
    %v74 = vld [vmem:[%s0 + $0xb8] sm:$0xff]
    %v75 = vld [vmem:[%s0 + $0xc0] sm:$0xff]
    %v76 = vld [vmem:[%s0 + $0xc8] sm:$0xff]
    %v77 = vld [vmem:[%s0 + $0xd0] sm:$0xff]
    %v78 = vld [vmem:[%s0 + $0xd8] sm:$0xff]
    %v79 = vld [vmem:[%s0 + $0xe0] sm:$0xff]
    %v80 = vld [vmem:[%s0 + $0xe8] sm:$0xff]
    %v81 = vld [vmem:[%s0 + $0xf0] sm:$0xff]
    %v82 = vld [vmem:[%s0 + $0xf8] sm:$0xff]
    %v83 = vld [vmem:[%s0 + $0x100] sm:$0xff]
    %v84 = vld [vmem:[%s0 + $0x108] sm:$0xff]
    %v85 = vld [vmem:[%s0 + $0x110] sm:$0xff]
    %v86 = vld [vmem:[%s0 + $0x118] sm:$0xff]
    %v87 = vld [vmem:[%s0 + $0x120] sm:$0xff]
    %v88 = vld [vmem:[%s0 + $0x128] sm:$0xff]
    %v89 = vld [vmem:[%s0 + $0x130] sm:$0xff]
    %v90 = vld [vmem:[%s0 + $0x138] sm:$0xff]
    %v91 = vld [vmem:[%s0 + $0x140] sm:$0xff]
    %v92 = vld [vmem:[%s0 + $0x148] sm:$0xff]
    %v93 = vld [vmem:[%s0 + $0x150] sm:$0xff]
    %v94 = vld [vmem:[%s0 + $0x158] sm:$0xff]
    %v95 = vld [vmem:[%s0 + $0x160] sm:$0xff]
    %v96 = vld [vmem:[%s0 + $0x168] sm:$0xff]
    %v97 = vld [vmem:[%s0 + $0x170] sm:$0xff]
    %v98 = vld [vmem:[%s0 + $0x178] sm:$0xff]
    %v99 = vld [vmem:[%s0 + $0x180] sm:$0xff]
    %v100 = vld [vmem:[%s0 + $0x188] sm:$0xff]
    %v101 = vld [vmem:[%s0 + $0x190] sm:$0xff]
    %v102 = vld [vmem:[%s0 + $0x198] sm:$0xff]
    %v103 = vld [vmem:[%s0 + $0x1a0] sm:$0xff]
    %v104 = vld [vmem:[%s0 + $0x1a8] sm:$0xff]
    %v105 = vld [vmem:[%s0 + $0x1b0] sm:$0xff]
    %v106 = vld [vmem:[%s0 + $0x1b8] sm:$0xff]
    %119 = vrot.lane.b32.xlu0 %v65, 28
    %v120 = vpop.permute.xlu0 %119
    %121 = vrot.lane.b32.xlu0 %v66, 28
    %v122 = vpop.permute.xlu0 %121
    %123 = vrot.lane.b32.xlu0 %v67, 28
    %v124 = vpop.permute.xlu0 %123
    %125 = vrot.lane.b32.xlu0 %v68, 28
    %v126 = vpop.permute.xlu0 %125
    %127 = vrot.lane.b32.xlu0 %v69, 28
    %v128 = vpop.permute.xlu0 %127
    %129 = vrot.lane.b32.xlu0 %v70, 28
    %v130 = vpop.permute.xlu0 %129
    %131 = vrot.lane.b32.xlu0 %v71, 28
    %v132 = vpop.permute.xlu0 %131
    %133 = vrot.lane.b32.xlu0 %v72, 28
    %v134 = vpop.permute.xlu0 %133
    %135 = vrot.lane.b32.xlu0 %v73, 28
    %v136 = vpop.permute.xlu0 %135
    %137 = vrot.lane.b32.xlu0 %v74, 28
    %v138 = vpop.permute.xlu0 %137
    %139 = vrot.lane.b32.xlu0 %v75, 28
    %v140 = vpop.permute.xlu0 %139
    %141 = vrot.lane.b32.xlu0 %v76, 28
    %v142 = vpop.permute.xlu0 %141
    %167 = vrot.lane.b32.xlu0 %v79, 56
    %v168 = vpop.permute.xlu0 %167
    %169 = vrot.lane.b32.xlu0 %v80, 56
    %v170 = vpop.permute.xlu0 %169
    %171 = vrot.lane.b32.xlu0 %v81, 56
    %v172 = vpop.permute.xlu0 %171
    %173 = vrot.lane.b32.xlu0 %v82, 56
    %v174 = vpop.permute.xlu0 %173
    %175 = vrot.lane.b32.xlu0 %v83, 56
    %v176 = vpop.permute.xlu0 %175
    %177 = vrot.lane.b32.xlu0 %v84, 56
    %v178 = vpop.permute.xlu0 %177
    %179 = vrot.lane.b32.xlu0 %v85, 56
    %v180 = vpop.permute.xlu0 %179
    %181 = vrot.lane.b32.xlu0 %v86, 56
    %v182 = vpop.permute.xlu0 %181
    %183 = vrot.lane.b32.xlu0 %v87, 56
    %v184 = vpop.permute.xlu0 %183
    %185 = vrot.lane.b32.xlu0 %v88, 56
    %v186 = vpop.permute.xlu0 %185
    %187 = vrot.lane.b32.xlu0 %v89, 56
    %v188 = vpop.permute.xlu0 %187
    %189 = vrot.lane.b32.xlu0 %v90, 56
    %v190 = vpop.permute.xlu0 %189
    %215 = vrot.lane.b32.xlu0 %v93, 84
    %v216 = vpop.permute.xlu0 %215
    %217 = vrot.lane.b32.xlu0 %v94, 84
    %v218 = vpop.permute.xlu0 %217
    %219 = vrot.lane.b32.xlu0 %v95, 84
    %v220 = vpop.permute.xlu0 %219
    %221 = vrot.lane.b32.xlu0 %v96, 84
    %v222 = vpop.permute.xlu0 %221
    %223 = vrot.lane.b32.xlu0 %v97, 84
    %v224 = vpop.permute.xlu0 %223
    %225 = vrot.lane.b32.xlu0 %v98, 84
    %v226 = vpop.permute.xlu0 %225
    %227 = vrot.lane.b32.xlu0 %v99, 84
    %v228 = vpop.permute.xlu0 %227
    %229 = vrot.lane.b32.xlu0 %v100, 84
    %v230 = vpop.permute.xlu0 %229
    %231 = vrot.lane.b32.xlu0 %v101, 84
    %v232 = vpop.permute.xlu0 %231
    %233 = vrot.lane.b32.xlu0 %v102, 84
    %v234 = vpop.permute.xlu0 %233
    %235 = vrot.lane.b32.xlu0 %v103, 84
    %v236 = vpop.permute.xlu0 %235
    %237 = vrot.lane.b32.xlu0 %v104, 84
    %v238 = vpop.permute.xlu0 %237
    %263 = vrot.lane.b32.xlu0 %v53, 112
    %v264 = vpop.permute.xlu0 %263
    %265 = vrot.lane.b32.xlu0 %v54, 112
    %v266 = vpop.permute.xlu0 %265
    %267 = vrot.lane.b32.xlu0 %v55, 112
    %v268 = vpop.permute.xlu0 %267
    %269 = vrot.lane.b32.xlu0 %v56, 112
    %v270 = vpop.permute.xlu0 %269
    %271 = vrot.lane.b32.xlu0 %v57, 112
    %v272 = vpop.permute.xlu0 %271
    %273 = vrot.lane.b32.xlu0 %v58, 112
    %v274 = vpop.permute.xlu0 %273
    %275 = vrot.lane.b32.xlu0 %v59, 112
    %v276 = vpop.permute.xlu0 %275
    %277 = vrot.lane.b32.xlu0 %v60, 112
    %v278 = vpop.permute.xlu0 %277
    %279 = vrot.lane.b32.xlu0 %v61, 112
    %v280 = vpop.permute.xlu0 %279
    %281 = vrot.lane.b32.xlu0 %v62, 112
    %v282 = vpop.permute.xlu0 %281
    %283 = vrot.lane.b32.xlu0 %v63, 112
    %v284 = vpop.permute.xlu0 %283
    %285 = vrot.lane.b32.xlu0 %v64, 112
    %v286 = vpop.permute.xlu0 %285
    %vm299 = vcmask 228352
    %v300 = vsel %vm299, %v51, %v120
    %v301 = vsel %vm299, %v52, %v122
    %v302 = vsel %vm299, %v53, %v124
    %v303 = vsel %vm299, %v54, %v126
    %v304 = vsel %vm299, %v55, %v128
    %v305 = vsel %vm299, %v56, %v130
    %v306 = vsel %vm299, %v57, %v132
    %v307 = vsel %vm299, %v58, %v134
    %v308 = vsel %vm299, %v59, %v136
    %v309 = vsel %vm299, %v60, %v138
    %v310 = vsel %vm299, %v61, %v140
    %v311 = vsel %vm299, %v62, %v142
    %vm312 = vcmask 457728
    %v313 = vsel %vm312, %v300, %v168
    %v314 = vsel %vm312, %v301, %v170
    %v315 = vsel %vm312, %v302, %v172
    %v316 = vsel %vm312, %v303, %v174
    %v317 = vsel %vm312, %v304, %v176
    %v318 = vsel %vm312, %v305, %v178
    %v319 = vsel %vm312, %v306, %v180
    %v320 = vsel %vm312, %v307, %v182
    %v321 = vsel %vm312, %v308, %v184
    %v322 = vsel %vm312, %v309, %v186
    %v323 = vsel %vm312, %v310, %v188
    %v324 = vsel %vm312, %v311, %v190
    %vm325 = vcmask 687104
    %v326 = vsel %vm325, %v313, %v216
    %v327 = vsel %vm325, %v314, %v218
    %v328 = vsel %vm325, %v315, %v220
    %v329 = vsel %vm325, %v316, %v222
    %v330 = vsel %vm325, %v317, %v224
    %v331 = vsel %vm325, %v318, %v226
    %v332 = vsel %vm325, %v319, %v228
    %v333 = vsel %vm325, %v320, %v230
    %v334 = vsel %vm325, %v321, %v232
    %v335 = vsel %vm325, %v322, %v234
    %v336 = vsel %vm325, %v323, %v236
    %v337 = vsel %vm325, %v324, %v238
    %vm338 = vcmask 916480
    %v339 = vsel %vm338, %v326, %v264
    %v340 = vsel %vm338, %v327, %v266
    %v341 = vsel %vm338, %v328, %v268
    %v342 = vsel %vm338, %v329, %v270
    %v343 = vsel %vm338, %v330, %v272
    %v344 = vsel %vm338, %v331, %v274
    %v345 = vsel %vm338, %v332, %v276
    %v346 = vsel %vm338, %v333, %v278
    %v347 = vsel %vm338, %v334, %v280
    %v348 = vsel %vm338, %v335, %v282
    %v349 = vsel %vm338, %v336, %v284
    %v350 = vsel %vm338, %v337, %v286
    %351 = vrot.lane.b32.xlu0 %v79, 28
    %v352 = vpop.permute.xlu0 %351
    %353 = vrot.lane.b32.xlu0 %v80, 28
    %v354 = vpop.permute.xlu0 %353
    %355 = vrot.lane.b32.xlu0 %v81, 28
    %v356 = vpop.permute.xlu0 %355
    %357 = vrot.lane.b32.xlu0 %v82, 28
    %v358 = vpop.permute.xlu0 %357
    %359 = vrot.lane.b32.xlu0 %v83, 28
    %v360 = vpop.permute.xlu0 %359
    %361 = vrot.lane.b32.xlu0 %v84, 28
    %v362 = vpop.permute.xlu0 %361
    %363 = vrot.lane.b32.xlu0 %v85, 28
    %v364 = vpop.permute.xlu0 %363
    %365 = vrot.lane.b32.xlu0 %v86, 28
    %v366 = vpop.permute.xlu0 %365
    %367 = vrot.lane.b32.xlu0 %v87, 28
    %v368 = vpop.permute.xlu0 %367
    %369 = vrot.lane.b32.xlu0 %v88, 28
    %v370 = vpop.permute.xlu0 %369
    %371 = vrot.lane.b32.xlu0 %v89, 28
    %v372 = vpop.permute.xlu0 %371
    %373 = vrot.lane.b32.xlu0 %v90, 28
    %v374 = vpop.permute.xlu0 %373
    %387 = vrot.lane.b32.xlu0 %v93, 56
    %v388 = vpop.permute.xlu0 %387
    %389 = vrot.lane.b32.xlu0 %v94, 56
    %v390 = vpop.permute.xlu0 %389
    %391 = vrot.lane.b32.xlu0 %v95, 56
    %v392 = vpop.permute.xlu0 %391
    %393 = vrot.lane.b32.xlu0 %v96, 56
    %v394 = vpop.permute.xlu0 %393
    %395 = vrot.lane.b32.xlu0 %v97, 56
    %v396 = vpop.permute.xlu0 %395
    %397 = vrot.lane.b32.xlu0 %v98, 56
    %v398 = vpop.permute.xlu0 %397
    %399 = vrot.lane.b32.xlu0 %v99, 56
    %v400 = vpop.permute.xlu0 %399
    %401 = vrot.lane.b32.xlu0 %v100, 56
    %v402 = vpop.permute.xlu0 %401
    %403 = vrot.lane.b32.xlu0 %v101, 56
    %v404 = vpop.permute.xlu0 %403
    %405 = vrot.lane.b32.xlu0 %v102, 56
    %v406 = vpop.permute.xlu0 %405
    %407 = vrot.lane.b32.xlu0 %v103, 56
    %v408 = vpop.permute.xlu0 %407
    %409 = vrot.lane.b32.xlu0 %v104, 56
    %v410 = vpop.permute.xlu0 %409
    %423 = vrot.lane.b32.xlu0 %v53, 84
    %v424 = vpop.permute.xlu0 %423
    %425 = vrot.lane.b32.xlu0 %v54, 84
    %v426 = vpop.permute.xlu0 %425
    %427 = vrot.lane.b32.xlu0 %v55, 84
    %v428 = vpop.permute.xlu0 %427
    %429 = vrot.lane.b32.xlu0 %v56, 84
    %v430 = vpop.permute.xlu0 %429
    %431 = vrot.lane.b32.xlu0 %v57, 84
    %v432 = vpop.permute.xlu0 %431
    %433 = vrot.lane.b32.xlu0 %v58, 84
    %v434 = vpop.permute.xlu0 %433
    %435 = vrot.lane.b32.xlu0 %v59, 84
    %v436 = vpop.permute.xlu0 %435
    %437 = vrot.lane.b32.xlu0 %v60, 84
    %v438 = vpop.permute.xlu0 %437
    %439 = vrot.lane.b32.xlu0 %v61, 84
    %v440 = vpop.permute.xlu0 %439
    %441 = vrot.lane.b32.xlu0 %v62, 84
    %v442 = vpop.permute.xlu0 %441
    %443 = vrot.lane.b32.xlu0 %v63, 84
    %v444 = vpop.permute.xlu0 %443
    %445 = vrot.lane.b32.xlu0 %v64, 84
    %v446 = vpop.permute.xlu0 %445
    %461 = vrot.lane.b32.xlu0 %v67, 112
    %v462 = vpop.permute.xlu0 %461
    %463 = vrot.lane.b32.xlu0 %v68, 112
    %v464 = vpop.permute.xlu0 %463
    %465 = vrot.lane.b32.xlu0 %v69, 112
    %v466 = vpop.permute.xlu0 %465
    %467 = vrot.lane.b32.xlu0 %v70, 112
    %v468 = vpop.permute.xlu0 %467
    %469 = vrot.lane.b32.xlu0 %v71, 112
    %v470 = vpop.permute.xlu0 %469
    %471 = vrot.lane.b32.xlu0 %v72, 112
    %v472 = vpop.permute.xlu0 %471
    %473 = vrot.lane.b32.xlu0 %v73, 112
    %v474 = vpop.permute.xlu0 %473
    %475 = vrot.lane.b32.xlu0 %v74, 112
    %v476 = vpop.permute.xlu0 %475
    %477 = vrot.lane.b32.xlu0 %v75, 112
    %v478 = vpop.permute.xlu0 %477
    %479 = vrot.lane.b32.xlu0 %v76, 112
    %v480 = vpop.permute.xlu0 %479
    %481 = vrot.lane.b32.xlu0 %v77, 112
    %v482 = vpop.permute.xlu0 %481
    %483 = vrot.lane.b32.xlu0 %v78, 112
    %v484 = vpop.permute.xlu0 %483
    %v497 = vsel %vm299, %v65, %v352
    %v498 = vsel %vm299, %v66, %v354
    %v499 = vsel %vm299, %v67, %v356
    %v500 = vsel %vm299, %v68, %v358
    %v501 = vsel %vm299, %v69, %v360
    %v502 = vsel %vm299, %v70, %v362
    %v503 = vsel %vm299, %v71, %v364
    %v504 = vsel %vm299, %v72, %v366
    %v505 = vsel %vm299, %v73, %v368
    %v506 = vsel %vm299, %v74, %v370
    %v507 = vsel %vm299, %v75, %v372
    %v508 = vsel %vm299, %v76, %v374
    %v509 = vsel %vm312, %v497, %v388
    %v510 = vsel %vm312, %v498, %v390
    %v511 = vsel %vm312, %v499, %v392
    %v512 = vsel %vm312, %v500, %v394
    %v513 = vsel %vm312, %v501, %v396
    %v514 = vsel %vm312, %v502, %v398
    %v515 = vsel %vm312, %v503, %v400
    %v516 = vsel %vm312, %v504, %v402
    %v517 = vsel %vm312, %v505, %v404
    %v518 = vsel %vm312, %v506, %v406
    %v519 = vsel %vm312, %v507, %v408
    %v520 = vsel %vm312, %v508, %v410
    %v521 = vsel %vm325, %v509, %v424
    %v522 = vsel %vm325, %v510, %v426
    %v523 = vsel %vm325, %v511, %v428
    %v524 = vsel %vm325, %v512, %v430
    %v525 = vsel %vm325, %v513, %v432
    %v526 = vsel %vm325, %v514, %v434
    %v527 = vsel %vm325, %v515, %v436
    %v528 = vsel %vm325, %v516, %v438
    %v529 = vsel %vm325, %v517, %v440
    %v530 = vsel %vm325, %v518, %v442
    %v531 = vsel %vm325, %v519, %v444
    %v532 = vsel %vm325, %v520, %v446
    %v533 = vsel %vm338, %v521, %v462
    %v534 = vsel %vm338, %v522, %v464
    %v535 = vsel %vm338, %v523, %v466
    %v536 = vsel %vm338, %v524, %v468
    %v537 = vsel %vm338, %v525, %v470
    %v538 = vsel %vm338, %v526, %v472
    %v539 = vsel %vm338, %v527, %v474
    %v540 = vsel %vm338, %v528, %v476
    %v541 = vsel %vm338, %v529, %v478
    %v542 = vsel %vm338, %v530, %v480
    %v543 = vsel %vm338, %v531, %v482
    %v544 = vsel %vm338, %v532, %v484
    %545 = vrot.lane.b32.xlu0 %v93, 28
    %v546 = vpop.permute.xlu0 %545
    %547 = vrot.lane.b32.xlu0 %v94, 28
    %v548 = vpop.permute.xlu0 %547
    %549 = vrot.lane.b32.xlu0 %v95, 28
    %v550 = vpop.permute.xlu0 %549
    %551 = vrot.lane.b32.xlu0 %v96, 28
    %v552 = vpop.permute.xlu0 %551
    %553 = vrot.lane.b32.xlu0 %v97, 28
    %v554 = vpop.permute.xlu0 %553
    %555 = vrot.lane.b32.xlu0 %v98, 28
    %v556 = vpop.permute.xlu0 %555
    %557 = vrot.lane.b32.xlu0 %v99, 28
    %v558 = vpop.permute.xlu0 %557
    %559 = vrot.lane.b32.xlu0 %v100, 28
    %v560 = vpop.permute.xlu0 %559
    %561 = vrot.lane.b32.xlu0 %v101, 28
    %v562 = vpop.permute.xlu0 %561
    %563 = vrot.lane.b32.xlu0 %v102, 28
    %v564 = vpop.permute.xlu0 %563
    %565 = vrot.lane.b32.xlu0 %v103, 28
    %v566 = vpop.permute.xlu0 %565
    %567 = vrot.lane.b32.xlu0 %v104, 28
    %v568 = vpop.permute.xlu0 %567
    %581 = vrot.lane.b32.xlu0 %v53, 56
    %v582 = vpop.permute.xlu0 %581
    %583 = vrot.lane.b32.xlu0 %v54, 56
    %v584 = vpop.permute.xlu0 %583
    %585 = vrot.lane.b32.xlu0 %v55, 56
    %v586 = vpop.permute.xlu0 %585
    %587 = vrot.lane.b32.xlu0 %v56, 56
    %v588 = vpop.permute.xlu0 %587
    %589 = vrot.lane.b32.xlu0 %v57, 56
    %v590 = vpop.permute.xlu0 %589
    %591 = vrot.lane.b32.xlu0 %v58, 56
    %v592 = vpop.permute.xlu0 %591
    %593 = vrot.lane.b32.xlu0 %v59, 56
    %v594 = vpop.permute.xlu0 %593
    %595 = vrot.lane.b32.xlu0 %v60, 56
    %v596 = vpop.permute.xlu0 %595
    %597 = vrot.lane.b32.xlu0 %v61, 56
    %v598 = vpop.permute.xlu0 %597
    %599 = vrot.lane.b32.xlu0 %v62, 56
    %v600 = vpop.permute.xlu0 %599
    %601 = vrot.lane.b32.xlu0 %v63, 56
    %v602 = vpop.permute.xlu0 %601
    %603 = vrot.lane.b32.xlu0 %v64, 56
    %v604 = vpop.permute.xlu0 %603
    %617 = vrot.lane.b32.xlu0 %v67, 84
    %v618 = vpop.permute.xlu0 %617
    %619 = vrot.lane.b32.xlu0 %v68, 84
    %v620 = vpop.permute.xlu0 %619
    %621 = vrot.lane.b32.xlu0 %v69, 84
    %v622 = vpop.permute.xlu0 %621
    %623 = vrot.lane.b32.xlu0 %v70, 84
    %v624 = vpop.permute.xlu0 %623
    %625 = vrot.lane.b32.xlu0 %v71, 84
    %v626 = vpop.permute.xlu0 %625
    %627 = vrot.lane.b32.xlu0 %v72, 84
    %v628 = vpop.permute.xlu0 %627
    %629 = vrot.lane.b32.xlu0 %v73, 84
    %v630 = vpop.permute.xlu0 %629
    %631 = vrot.lane.b32.xlu0 %v74, 84
    %v632 = vpop.permute.xlu0 %631
    %633 = vrot.lane.b32.xlu0 %v75, 84
    %v634 = vpop.permute.xlu0 %633
    %635 = vrot.lane.b32.xlu0 %v76, 84
    %v636 = vpop.permute.xlu0 %635
    %637 = vrot.lane.b32.xlu0 %v77, 84
    %v638 = vpop.permute.xlu0 %637
    %639 = vrot.lane.b32.xlu0 %v78, 84
    %v640 = vpop.permute.xlu0 %639
    %655 = vrot.lane.b32.xlu0 %v81, 112
    %v656 = vpop.permute.xlu0 %655
    %657 = vrot.lane.b32.xlu0 %v82, 112
    %v658 = vpop.permute.xlu0 %657
    %659 = vrot.lane.b32.xlu0 %v83, 112
    %v660 = vpop.permute.xlu0 %659
    %661 = vrot.lane.b32.xlu0 %v84, 112
    %v662 = vpop.permute.xlu0 %661
    %663 = vrot.lane.b32.xlu0 %v85, 112
    %v664 = vpop.permute.xlu0 %663
    %665 = vrot.lane.b32.xlu0 %v86, 112
    %v666 = vpop.permute.xlu0 %665
    %667 = vrot.lane.b32.xlu0 %v87, 112
    %v668 = vpop.permute.xlu0 %667
    %669 = vrot.lane.b32.xlu0 %v88, 112
    %v670 = vpop.permute.xlu0 %669
    %671 = vrot.lane.b32.xlu0 %v89, 112
    %v672 = vpop.permute.xlu0 %671
    %673 = vrot.lane.b32.xlu0 %v90, 112
    %v674 = vpop.permute.xlu0 %673
    %675 = vrot.lane.b32.xlu0 %v91, 112
    %v676 = vpop.permute.xlu0 %675
    %677 = vrot.lane.b32.xlu0 %v92, 112
    %v678 = vpop.permute.xlu0 %677
    %v691 = vsel %vm299, %v79, %v546
    %v692 = vsel %vm299, %v80, %v548
    %v693 = vsel %vm299, %v81, %v550
    %v694 = vsel %vm299, %v82, %v552
    %v695 = vsel %vm299, %v83, %v554
    %v696 = vsel %vm299, %v84, %v556
    %v697 = vsel %vm299, %v85, %v558
    %v698 = vsel %vm299, %v86, %v560
    %v699 = vsel %vm299, %v87, %v562
    %v700 = vsel %vm299, %v88, %v564
    %v701 = vsel %vm299, %v89, %v566
    %v702 = vsel %vm299, %v90, %v568
    %v703 = vsel %vm312, %v691, %v582
    %v704 = vsel %vm312, %v692, %v584
    %v705 = vsel %vm312, %v693, %v586
    %v706 = vsel %vm312, %v694, %v588
    %v707 = vsel %vm312, %v695, %v590
    %v708 = vsel %vm312, %v696, %v592
    %v709 = vsel %vm312, %v697, %v594
    %v710 = vsel %vm312, %v698, %v596
    %v711 = vsel %vm312, %v699, %v598
    %v712 = vsel %vm312, %v700, %v600
    %v713 = vsel %vm312, %v701, %v602
    %v714 = vsel %vm312, %v702, %v604
    %v715 = vsel %vm325, %v703, %v618
    %v716 = vsel %vm325, %v704, %v620
    %v717 = vsel %vm325, %v705, %v622
    %v718 = vsel %vm325, %v706, %v624
    %v719 = vsel %vm325, %v707, %v626
    %v720 = vsel %vm325, %v708, %v628
    %v721 = vsel %vm325, %v709, %v630
    %v722 = vsel %vm325, %v710, %v632
    %v723 = vsel %vm325, %v711, %v634
    %v724 = vsel %vm325, %v712, %v636
    %v725 = vsel %vm325, %v713, %v638
    %v726 = vsel %vm325, %v714, %v640
    %v727 = vsel %vm338, %v715, %v656
    %v728 = vsel %vm338, %v716, %v658
    %v729 = vsel %vm338, %v717, %v660
    %v730 = vsel %vm338, %v718, %v662
    %v731 = vsel %vm338, %v719, %v664
    %v732 = vsel %vm338, %v720, %v666
    %v733 = vsel %vm338, %v721, %v668
    %v734 = vsel %vm338, %v722, %v670
    %v735 = vsel %vm338, %v723, %v672
    %v736 = vsel %vm338, %v724, %v674
    %v737 = vsel %vm338, %v725, %v676
    %v738 = vsel %vm338, %v726, %v678
    %739 = vrot.lane.b32.xlu0 %v53, 28
    %v740 = vpop.permute.xlu0 %739
    %741 = vrot.lane.b32.xlu0 %v54, 28
    %v742 = vpop.permute.xlu0 %741
    %743 = vrot.lane.b32.xlu0 %v55, 28
    %v744 = vpop.permute.xlu0 %743
    %745 = vrot.lane.b32.xlu0 %v56, 28
    %v746 = vpop.permute.xlu0 %745
    %747 = vrot.lane.b32.xlu0 %v57, 28
    %v748 = vpop.permute.xlu0 %747
    %749 = vrot.lane.b32.xlu0 %v58, 28
    %v750 = vpop.permute.xlu0 %749
    %751 = vrot.lane.b32.xlu0 %v59, 28
    %v752 = vpop.permute.xlu0 %751
    %753 = vrot.lane.b32.xlu0 %v60, 28
    %v754 = vpop.permute.xlu0 %753
    %755 = vrot.lane.b32.xlu0 %v61, 28
    %v756 = vpop.permute.xlu0 %755
    %757 = vrot.lane.b32.xlu0 %v62, 28
    %v758 = vpop.permute.xlu0 %757
    %759 = vrot.lane.b32.xlu0 %v63, 28
    %v760 = vpop.permute.xlu0 %759
    %761 = vrot.lane.b32.xlu0 %v64, 28
    %v762 = vpop.permute.xlu0 %761
    %775 = vrot.lane.b32.xlu0 %v67, 56
    %v776 = vpop.permute.xlu0 %775
    %777 = vrot.lane.b32.xlu0 %v68, 56
    %v778 = vpop.permute.xlu0 %777
    %779 = vrot.lane.b32.xlu0 %v69, 56
    %v780 = vpop.permute.xlu0 %779
    %781 = vrot.lane.b32.xlu0 %v70, 56
    %v782 = vpop.permute.xlu0 %781
    %783 = vrot.lane.b32.xlu0 %v71, 56
    %v784 = vpop.permute.xlu0 %783
    %785 = vrot.lane.b32.xlu0 %v72, 56
    %v786 = vpop.permute.xlu0 %785
    %787 = vrot.lane.b32.xlu0 %v73, 56
    %v788 = vpop.permute.xlu0 %787
    %789 = vrot.lane.b32.xlu0 %v74, 56
    %v790 = vpop.permute.xlu0 %789
    %791 = vrot.lane.b32.xlu0 %v75, 56
    %v792 = vpop.permute.xlu0 %791
    %793 = vrot.lane.b32.xlu0 %v76, 56
    %v794 = vpop.permute.xlu0 %793
    %795 = vrot.lane.b32.xlu0 %v77, 56
    %v796 = vpop.permute.xlu0 %795
    %797 = vrot.lane.b32.xlu0 %v78, 56
    %v798 = vpop.permute.xlu0 %797
    %811 = vrot.lane.b32.xlu0 %v81, 84
    %v812 = vpop.permute.xlu0 %811
    %813 = vrot.lane.b32.xlu0 %v82, 84
    %v814 = vpop.permute.xlu0 %813
    %815 = vrot.lane.b32.xlu0 %v83, 84
    %v816 = vpop.permute.xlu0 %815
    %817 = vrot.lane.b32.xlu0 %v84, 84
    %v818 = vpop.permute.xlu0 %817
    %819 = vrot.lane.b32.xlu0 %v85, 84
    %v820 = vpop.permute.xlu0 %819
    %821 = vrot.lane.b32.xlu0 %v86, 84
    %v822 = vpop.permute.xlu0 %821
    %823 = vrot.lane.b32.xlu0 %v87, 84
    %v824 = vpop.permute.xlu0 %823
    %825 = vrot.lane.b32.xlu0 %v88, 84
    %v826 = vpop.permute.xlu0 %825
    %827 = vrot.lane.b32.xlu0 %v89, 84
    %v828 = vpop.permute.xlu0 %827
    %829 = vrot.lane.b32.xlu0 %v90, 84
    %v830 = vpop.permute.xlu0 %829
    %831 = vrot.lane.b32.xlu0 %v91, 84
    %v832 = vpop.permute.xlu0 %831
    %833 = vrot.lane.b32.xlu0 %v92, 84
    %v834 = vpop.permute.xlu0 %833
    %849 = vrot.lane.b32.xlu0 %v95, 112
    %v850 = vpop.permute.xlu0 %849
    %851 = vrot.lane.b32.xlu0 %v96, 112
    %v852 = vpop.permute.xlu0 %851
    %853 = vrot.lane.b32.xlu0 %v97, 112
    %v854 = vpop.permute.xlu0 %853
    %855 = vrot.lane.b32.xlu0 %v98, 112
    %v856 = vpop.permute.xlu0 %855
    %857 = vrot.lane.b32.xlu0 %v99, 112
    %v858 = vpop.permute.xlu0 %857
    %859 = vrot.lane.b32.xlu0 %v100, 112
    %v860 = vpop.permute.xlu0 %859
    %861 = vrot.lane.b32.xlu0 %v101, 112
    %v862 = vpop.permute.xlu0 %861
    %863 = vrot.lane.b32.xlu0 %v102, 112
    %v864 = vpop.permute.xlu0 %863
    %865 = vrot.lane.b32.xlu0 %v103, 112
    %v866 = vpop.permute.xlu0 %865
    %867 = vrot.lane.b32.xlu0 %v104, 112
    %v868 = vpop.permute.xlu0 %867
    %869 = vrot.lane.b32.xlu0 %v105, 112
    %v870 = vpop.permute.xlu0 %869
    %871 = vrot.lane.b32.xlu0 %v106, 112
    %v872 = vpop.permute.xlu0 %871
    %v885 = vsel %vm299, %v93, %v740
    %v886 = vsel %vm299, %v94, %v742
    %v887 = vsel %vm299, %v95, %v744
    %v888 = vsel %vm299, %v96, %v746
    %v889 = vsel %vm299, %v97, %v748
    %v890 = vsel %vm299, %v98, %v750
    %v891 = vsel %vm299, %v99, %v752
    %v892 = vsel %vm299, %v100, %v754
    %v893 = vsel %vm299, %v101, %v756
    %v894 = vsel %vm299, %v102, %v758
    %v895 = vsel %vm299, %v103, %v760
    %v896 = vsel %vm299, %v104, %v762
    %v897 = vsel %vm312, %v885, %v776
    %v898 = vsel %vm312, %v886, %v778
    %v899 = vsel %vm312, %v887, %v780
    %v900 = vsel %vm312, %v888, %v782
    %v901 = vsel %vm312, %v889, %v784
    %v902 = vsel %vm312, %v890, %v786
    %v903 = vsel %vm312, %v891, %v788
    %v904 = vsel %vm312, %v892, %v790
    %v905 = vsel %vm312, %v893, %v792
    %v906 = vsel %vm312, %v894, %v794
    %v907 = vsel %vm312, %v895, %v796
    %v908 = vsel %vm312, %v896, %v798
    %v909 = vsel %vm325, %v897, %v812
    %v910 = vsel %vm325, %v898, %v814
    %v911 = vsel %vm325, %v899, %v816
    %v912 = vsel %vm325, %v900, %v818
    %v913 = vsel %vm325, %v901, %v820
    %v914 = vsel %vm325, %v902, %v822
    %v915 = vsel %vm325, %v903, %v824
    %v916 = vsel %vm325, %v904, %v826
    %v917 = vsel %vm325, %v905, %v828
    %v918 = vsel %vm325, %v906, %v830
    %v919 = vsel %vm325, %v907, %v832
    %v920 = vsel %vm325, %v908, %v834
    %v921 = vsel %vm338, %v909, %v850
    %v922 = vsel %vm338, %v910, %v852
    %v923 = vsel %vm338, %v911, %v854
    %v924 = vsel %vm338, %v912, %v856
    %v925 = vsel %vm338, %v913, %v858
    %v926 = vsel %vm338, %v914, %v860
    %v927 = vsel %vm338, %v915, %v862
    %v928 = vsel %vm338, %v916, %v864
    %v929 = vsel %vm338, %v917, %v866
    %v930 = vsel %vm338, %v918, %v868
    %v931 = vsel %vm338, %v919, %v870
    %v932 = vsel %vm338, %v920, %v872
    %v933 = vld [vmem:[%s1] sm:$0xff]
    %v934 = vld [vmem:[%s1 + $0x8] sm:$0xff]
    %v935 = vld [vmem:[%s1 + $0x10] sm:$0xff]
    %v936 = vld [vmem:[%s1 + $0x18] sm:$0xff]
    %v937 = vld [vmem:[%s1 + $0x20] sm:$0xff]
    %v938 = vld [vmem:[%s1 + $0x28] sm:$0xff]
    %v939 = vld [vmem:[%s1 + $0x30] sm:$0xff]
    %v940 = vld [vmem:[%s1 + $0x38] sm:$0xff]
    %v941 = vld [vmem:[%s1 + $0x40] sm:$0xff]
    %v942 = vld [vmem:[%s1 + $0x48] sm:$0xff]
    %v943 = vld [vmem:[%s1 + $0x50] sm:$0xff]
    %v944 = vld [vmem:[%s1 + $0x58] sm:$0xff]
    %v945 = vld [vmem:[%s1 + $0x60] sm:$0xff]
    %v946 = vld [vmem:[%s1 + $0x68] sm:$0xff]
    %v947 = vld [vmem:[%s1 + $0x70] sm:$0xff]
    %v948 = vld [vmem:[%s1 + $0x78] sm:$0xff]
    %v949 = vld [vmem:[%s1 + $0x80] sm:$0xff]
    %v950 = vld [vmem:[%s1 + $0x88] sm:$0xf]
    %vm951 = vcmask 97280
    %v952 = vsel %vm951, %v264, 0
    %v954 = vsel %vm951, %v266, 0
    %v956 = vsel %vm951, %v268, 0
    %v958 = vsel %vm951, %v270, 0
    %v960 = vsel %vm951, %v272, 0
    %v962 = vsel %vm951, %v274, 0
    %v964 = vsel %vm951, %v276, 0
    %v966 = vsel %vm951, %v278, 0
    %v968 = vsel %vm951, %v280, 0
    %v970 = vsel %vm951, %v282, 0
    %v972 = vsel %vm951, %v284, 0
    %v974 = vsel %vm951, %v286, 0
    %v976 = vsel %vm951, %v462, 0
    %v978 = vsel %vm951, %v464, 0
    %v980 = vsel %vm951, %v466, 0
    %v982 = vsel %vm951, %v468, 0
    %v984 = vsel %vm951, %v470, 0
    %v986 = vsel %vm951, %v472, 0
    %v988 = vsel %vm951, %v474, 0
    %v990 = vsel %vm951, %v476, 0
    %v992 = vsel %vm951, %v478, 0
    %v994 = vsel %vm951, %v480, 0
    %v996 = vsel %vm951, %v482, 0
    %v998 = vsel %vm951, %v484, 0
    %v1000 = vsel %vm951, %v656, 0
    %v1002 = vsel %vm951, %v658, 0
    %v1004 = vsel %vm951, %v660, 0
    %v1006 = vsel %vm951, %v662, 0
    %v1008 = vsel %vm951, %v664, 0
    %v1010 = vsel %vm951, %v666, 0
    %v1012 = vsel %vm951, %v668, 0
    %v1014 = vsel %vm951, %v670, 0
    %v1016 = vsel %vm951, %v672, 0
    %v1018 = vsel %vm951, %v674, 0
    %v1020 = vsel %vm951, %v676, 0
    %v1022 = vsel %vm951, %v678, 0
    %v1024 = vsel %vm951, %v850, 0
    %v1026 = vsel %vm951, %v852, 0
    %v1028 = vsel %vm951, %v854, 0
    %v1030 = vsel %vm951, %v856, 0
    %v1032 = vsel %vm951, %v858, 0
    %v1034 = vsel %vm951, %v860, 0
    %v1036 = vsel %vm951, %v862, 0
    %v1038 = vsel %vm951, %v864, 0
    %v1040 = vsel %vm951, %v866, 0
    %v1042 = vsel %vm951, %v868, 0
    %v1044 = vsel %vm951, %v870, 0
    %v1046 = vsel %vm951, %v872, 0
    %vm1048 = vcmask 1043456
    %v1050 = vsel %vm1048, %v950, 0
    %1052 = vmatprep.subr.mxu0 0.0
    %1053 = vmatpush1.msra.mxu0 %v933
    %1054 = vmatprep.subr.mxu0 0.0
    %1055 = vmatpush1.msra.mxu0 %v934
    %1056 = vmatprep.subr.mxu0 0.0
    %1057 = vmatpush1.msra.mxu0 %v935
    %1058 = vmatprep.subr.mxu0 0.0
    %1059 = vmatpush1.msra.mxu0 %v936
    %1060 = vmatprep.subr.mxu0 0.0
    %1061 = vmatpush1.msra.mxu0 %v937
    %1062 = vmatprep.subr.mxu0 0.0
    %1063 = vmatpush1.msra.mxu0 %v938
    %1064 = vmatprep.subr.mxu0 0.0
    %1065 = vmatpush1.msra.mxu0 %v939
    %1066 = vmatprep.subr.mxu0 0.0
    %1067 = vmatpush1.msra.mxu0 %v940
    %1068 = vmatprep.subr.mxu0 0.0
    %1069 = vmatpush1.msra.mxu0 %v941
    %1070 = vmatprep.subr.mxu0 0.0
    %1071 = vmatpush1.msra.mxu0 %v942
    %1072 = vmatprep.subr.mxu0 0.0
    %1073 = vmatpush1.msra.mxu0 %v943
    %1074 = vmatprep.subr.mxu0 0.0
    %1075 = vmatpush1.msra.mxu0 %v944
    %1076 = vmatprep.subr.mxu0 0.0
    %1077 = vmatpush1.msra.mxu0 %v945
    %1078 = vmatprep.subr.mxu0 0.0
    %1079 = vmatpush1.msra.mxu0 %v946
    %1080 = vmatprep.subr.mxu0 0.0
    %1081 = vmatpush1.msra.mxu0 %v947
    %1082 = vmatprep.subr.mxu0 0.0
    %1083 = vmatpush1.msra.mxu0 %v948
    %1084 = vmatprep.subr.mxu0 0.0
    %1085 = vmatpush1.msra.mxu0 %v949
    %1086 = vmatprep.subr.mxu0 0.0
    %1087 = vmatpush1.msra.mxu0 %v1050
    %1088 = vmatprep.subr.mxu0 0.0
    %1089 = vmatpush1.msra.mxu0 0.0
    %1090 = vmatprep.subr.mxu0 0.0
    %1091 = vmatpush1.msra.mxu0 0.0
    %1092 = vmatprep.subr.mxu0 0.0
    %1093 = vmatpush1.msra.mxu0 0.0
    %1094 = vmatprep.subr.mxu0 0.0
    %1095 = vmatpush1.msra.mxu0 0.0
    %1096 = vmatprep.subr.mxu0 0.0
    %1097 = vmatpush1.msra.mxu0 0.0
    %1098 = vmatprep.subr.mxu0 0.0
    %1099 = vmatpush1.msra.mxu0 0.0
    %1100 = vmatprep.subr.mxu0 0.0
    %1101 = vmatpush1.msra.mxu0 0.0
    %1102 = vmatprep.subr.mxu0 0.0
    %1103 = vmatpush1.msra.mxu0 0.0
    %1104 = vmatprep.subr.mxu0 0.0
    %1105 = vmatpush1.msra.mxu0 0.0
    %1106 = vmatprep.subr.mxu0 0.0
    %1107 = vmatpush1.msra.mxu0 0.0
    %1108 = vmatprep.subr.mxu0 0.0
    %1109 = vmatpush1.msra.mxu0 0.0
    %1110 = vmatprep.subr.mxu0 0.0
    %1111 = vmatpush1.msra.mxu0 0.0
    %1112 = vmatprep.subr.mxu0 0.0
    %1113 = vmatpush1.msra.mxu0 0.0
    %1114 = vmatprep.subr.mxu0 0.0
    %1115 = vmatpush1.msra.mxu0 0.0
    %1116 = vmatprep.mubr.f32.mxu0 %v952
    %1117 = vmatmul.mubr.f32.gmra.mrb[0].mxu0 %v339
    %v1118 = vpop.f32.mrb[0].mxu0
    %v1119 = vadd.f32 0.0, %v1118
    %v1120 = vpop.f32.mrb[0].mxu0
    %1121 = vmatprep.mubr.f32.mxu0 %v954
    %1122 = vmatmul.mubr.f32.gmra.mrb[0].mxu0 %v340
    %v1123 = vpop.f32.mrb[0].mxu0
    %v1124 = vadd.f32 0.0, %v1123
    %v1125 = vpop.f32.mrb[0].mxu0
    %1126 = vmatprep.mubr.f32.mxu0 %v956
    %1127 = vmatmul.mubr.f32.gmra.mrb[0].mxu0 %v341
    %v1128 = vpop.f32.mrb[0].mxu0
    %v1129 = vadd.f32 0.0, %v1128
    %v1130 = vpop.f32.mrb[0].mxu0
    %1131 = vmatprep.mubr.f32.mxu0 %v958
    %1132 = vmatmul.mubr.f32.gmra.mrb[0].mxu0 %v342
    %v1133 = vpop.f32.mrb[0].mxu0
    %v1134 = vadd.f32 0.0, %v1133
    %v1135 = vpop.f32.mrb[0].mxu0
    %1136 = vmatprep.mubr.f32.mxu0 %v960
    %1137 = vmatmul.mubr.f32.gmra.mrb[0].mxu0 %v343
    %v1138 = vpop.f32.mrb[0].mxu0
    %v1139 = vadd.f32 0.0, %v1138
    %v1140 = vpop.f32.mrb[0].mxu0
    %1141 = vmatprep.mubr.f32.mxu0 %v962
    %1142 = vmatmul.mubr.f32.gmra.mrb[0].mxu0 %v344
    %v1143 = vpop.f32.mrb[0].mxu0
    %v1144 = vadd.f32 0.0, %v1143
    %v1145 = vpop.f32.mrb[0].mxu0
    %1146 = vmatprep.mubr.f32.mxu0 %v964
    %1147 = vmatmul.mubr.f32.gmra.mrb[0].mxu0 %v345
    %v1148 = vpop.f32.mrb[0].mxu0
    %v1149 = vadd.f32 0.0, %v1148
    %v1150 = vpop.f32.mrb[0].mxu0
    %1151 = vmatprep.mubr.f32.mxu0 %v966
    %1152 = vmatmul.mubr.f32.gmra.mrb[0].mxu0 %v346
    %v1153 = vpop.f32.mrb[0].mxu0
    %v1154 = vadd.f32 0.0, %v1153
    %v1155 = vpop.f32.mrb[0].mxu0
    %1156 = vmatprep.mubr.f32.mxu0 %v968
    %1157 = vmatmul.mubr.f32.gmra.mrb[0].mxu0 %v347
    %v1158 = vpop.f32.mrb[0].mxu0
    %v1159 = vadd.f32 0.0, %v1158
    %v1160 = vpop.f32.mrb[0].mxu0
    %1161 = vmatprep.mubr.f32.mxu0 %v970
    %1162 = vmatmul.mubr.f32.gmra.mrb[0].mxu0 %v348
    %v1163 = vpop.f32.mrb[0].mxu0
    %v1164 = vadd.f32 0.0, %v1163
    %v1165 = vpop.f32.mrb[0].mxu0
    %1166 = vmatprep.mubr.f32.mxu0 %v972
    %1167 = vmatmul.mubr.f32.gmra.mrb[0].mxu0 %v349
    %v1168 = vpop.f32.mrb[0].mxu0
    %v1169 = vadd.f32 0.0, %v1168
    %v1170 = vpop.f32.mrb[0].mxu0
    %1171 = vmatprep.mubr.f32.mxu0 %v974
    %1172 = vmatmul.mubr.f32.gmra.mrb[0].mxu0 %v350
    %v1173 = vpop.f32.mrb[0].mxu0
    %v1174 = vadd.f32 0.0, %v1173
    %v1175 = vpop.f32.mrb[0].mxu0
    %1176 = vmatprep.mubr.f32.mxu0 %v976
    %1177 = vmatmul.mubr.f32.gmra.mrb[0].mxu0 %v533
    %v1178 = vpop.f32.mrb[0].mxu0
    %v1179 = vadd.f32 0.0, %v1178
    %v1180 = vpop.f32.mrb[0].mxu0
    %1181 = vmatprep.mubr.f32.mxu0 %v978
    %1182 = vmatmul.mubr.f32.gmra.mrb[0].mxu0 %v534
    %v1183 = vpop.f32.mrb[0].mxu0
    %v1184 = vadd.f32 0.0, %v1183
    %v1185 = vpop.f32.mrb[0].mxu0
    %1186 = vmatprep.mubr.f32.mxu0 %v980
    %1187 = vmatmul.mubr.f32.gmra.mrb[0].mxu0 %v535
    %v1188 = vpop.f32.mrb[0].mxu0
    %v1189 = vadd.f32 0.0, %v1188
    %v1190 = vpop.f32.mrb[0].mxu0
    %1191 = vmatprep.mubr.f32.mxu0 %v982
    %1192 = vmatmul.mubr.f32.gmra.mrb[0].mxu0 %v536
    %v1193 = vpop.f32.mrb[0].mxu0
    %v1194 = vadd.f32 0.0, %v1193
    %v1195 = vpop.f32.mrb[0].mxu0
    %1196 = vmatprep.mubr.f32.mxu0 %v984
    %1197 = vmatmul.mubr.f32.gmra.mrb[0].mxu0 %v537
    %v1198 = vpop.f32.mrb[0].mxu0
    %v1199 = vadd.f32 0.0, %v1198
    %v1200 = vpop.f32.mrb[0].mxu0
    %1201 = vmatprep.mubr.f32.mxu0 %v986
    %1202 = vmatmul.mubr.f32.gmra.mrb[0].mxu0 %v538
    %v1203 = vpop.f32.mrb[0].mxu0
    %v1204 = vadd.f32 0.0, %v1203
    %v1205 = vpop.f32.mrb[0].mxu0
    %1206 = vmatprep.mubr.f32.mxu0 %v988
    %1207 = vmatmul.mubr.f32.gmra.mrb[0].mxu0 %v539
    %v1208 = vpop.f32.mrb[0].mxu0
    %v1209 = vadd.f32 0.0, %v1208
    %v1210 = vpop.f32.mrb[0].mxu0
    %1211 = vmatprep.mubr.f32.mxu0 %v990
    %1212 = vmatmul.mubr.f32.gmra.mrb[0].mxu0 %v540
    %v1213 = vpop.f32.mrb[0].mxu0
    %v1214 = vadd.f32 0.0, %v1213
    %v1215 = vpop.f32.mrb[0].mxu0
    %1216 = vmatprep.mubr.f32.mxu0 %v992
    %1217 = vmatmul.mubr.f32.gmra.mrb[0].mxu0 %v541
    %v1218 = vpop.f32.mrb[0].mxu0
    %v1219 = vadd.f32 0.0, %v1218
    %v1220 = vpop.f32.mrb[0].mxu0
    %1221 = vmatprep.mubr.f32.mxu0 %v994
    %1222 = vmatmul.mubr.f32.gmra.mrb[0].mxu0 %v542
    %v1223 = vpop.f32.mrb[0].mxu0
    %v1224 = vadd.f32 0.0, %v1223
    %v1225 = vpop.f32.mrb[0].mxu0
    %1226 = vmatprep.mubr.f32.mxu0 %v996
    %1227 = vmatmul.mubr.f32.gmra.mrb[0].mxu0 %v543
    %v1228 = vpop.f32.mrb[0].mxu0
    %v1229 = vadd.f32 0.0, %v1228
    %v1230 = vpop.f32.mrb[0].mxu0
    %1231 = vmatprep.mubr.f32.mxu0 %v998
    %1232 = vmatmul.mubr.f32.gmra.mrb[0].mxu0 %v544
    %v1233 = vpop.f32.mrb[0].mxu0
    %v1234 = vadd.f32 0.0, %v1233
    %v1235 = vpop.f32.mrb[0].mxu0
    %1236 = vmatprep.mubr.f32.mxu0 %v1000
    %1237 = vmatmul.mubr.f32.gmra.mrb[0].mxu0 %v727
    %v1238 = vpop.f32.mrb[0].mxu0
    %v1239 = vadd.f32 0.0, %v1238
    %v1240 = vpop.f32.mrb[0].mxu0
    %1241 = vmatprep.mubr.f32.mxu0 %v1002
    %1242 = vmatmul.mubr.f32.gmra.mrb[0].mxu0 %v728
    %v1243 = vpop.f32.mrb[0].mxu0
    %v1244 = vadd.f32 0.0, %v1243
    %v1245 = vpop.f32.mrb[0].mxu0
    %1246 = vmatprep.mubr.f32.mxu0 %v1004
    %1247 = vmatmul.mubr.f32.gmra.mrb[0].mxu0 %v729
    %v1248 = vpop.f32.mrb[0].mxu0
    %v1249 = vadd.f32 0.0, %v1248
    %v1250 = vpop.f32.mrb[0].mxu0
    %1251 = vmatprep.mubr.f32.mxu0 %v1006
    %1252 = vmatmul.mubr.f32.gmra.mrb[0].mxu0 %v730
    %v1253 = vpop.f32.mrb[0].mxu0
    %v1254 = vadd.f32 0.0, %v1253
    %v1255 = vpop.f32.mrb[0].mxu0
    %1256 = vmatprep.mubr.f32.mxu0 %v1008
    %1257 = vmatmul.mubr.f32.gmra.mrb[0].mxu0 %v731
    %v1258 = vpop.f32.mrb[0].mxu0
    %v1259 = vadd.f32 0.0, %v1258
    %v1260 = vpop.f32.mrb[0].mxu0
    %1261 = vmatprep.mubr.f32.mxu0 %v1010
    %1262 = vmatmul.mubr.f32.gmra.mrb[0].mxu0 %v732
    %v1263 = vpop.f32.mrb[0].mxu0
    %v1264 = vadd.f32 0.0, %v1263
    %v1265 = vpop.f32.mrb[0].mxu0
    %1266 = vmatprep.mubr.f32.mxu0 %v1012
    %1267 = vmatmul.mubr.f32.gmra.mrb[0].mxu0 %v733
    %v1268 = vpop.f32.mrb[0].mxu0
    %v1269 = vadd.f32 0.0, %v1268
    %v1270 = vpop.f32.mrb[0].mxu0
    %1271 = vmatprep.mubr.f32.mxu0 %v1014
    %1272 = vmatmul.mubr.f32.gmra.mrb[0].mxu0 %v734
    %v1273 = vpop.f32.mrb[0].mxu0
    %v1274 = vadd.f32 0.0, %v1273
    %v1275 = vpop.f32.mrb[0].mxu0
    %1276 = vmatprep.mubr.f32.mxu0 %v1016
    %1277 = vmatmul.mubr.f32.gmra.mrb[0].mxu0 %v735
    %v1278 = vpop.f32.mrb[0].mxu0
    %v1279 = vadd.f32 0.0, %v1278
    %v1280 = vpop.f32.mrb[0].mxu0
    %1281 = vmatprep.mubr.f32.mxu0 %v1018
    %1282 = vmatmul.mubr.f32.gmra.mrb[0].mxu0 %v736
    %v1283 = vpop.f32.mrb[0].mxu0
    %v1284 = vadd.f32 0.0, %v1283
    %v1285 = vpop.f32.mrb[0].mxu0
    %1286 = vmatprep.mubr.f32.mxu0 %v1020
    %1287 = vmatmul.mubr.f32.gmra.mrb[0].mxu0 %v737
    %v1288 = vpop.f32.mrb[0].mxu0
    %v1289 = vadd.f32 0.0, %v1288
    %v1290 = vpop.f32.mrb[0].mxu0
    %1291 = vmatprep.mubr.f32.mxu0 %v1022
    %1292 = vmatmul.mubr.f32.gmra.mrb[0].mxu0 %v738
    %v1293 = vpop.f32.mrb[0].mxu0
    %v1294 = vadd.f32 0.0, %v1293
    %v1295 = vpop.f32.mrb[0].mxu0
    %1296 = vmatprep.mubr.f32.mxu0 %v1024
    %1297 = vmatmul.mubr.f32.gmra.mrb[0].mxu0 %v921
    %v1298 = vpop.f32.mrb[0].mxu0
    %v1299 = vadd.f32 0.0, %v1298
    %v1300 = vpop.f32.mrb[0].mxu0
    %1301 = vmatprep.mubr.f32.mxu0 %v1026
    %1302 = vmatmul.mubr.f32.gmra.mrb[0].mxu0 %v922
    %v1303 = vpop.f32.mrb[0].mxu0
    %v1304 = vadd.f32 0.0, %v1303
    %v1305 = vpop.f32.mrb[0].mxu0
    %1306 = vmatprep.mubr.f32.mxu0 %v1028
    %1307 = vmatmul.mubr.f32.gmra.mrb[0].mxu0 %v923
    %v1308 = vpop.f32.mrb[0].mxu0
    %v1309 = vadd.f32 0.0, %v1308
    %v1310 = vpop.f32.mrb[0].mxu0
    %1311 = vmatprep.mubr.f32.mxu0 %v1030
    %1312 = vmatmul.mubr.f32.gmra.mrb[0].mxu0 %v924
    %v1313 = vpop.f32.mrb[0].mxu0
    %v1314 = vadd.f32 0.0, %v1313
    %v1315 = vpop.f32.mrb[0].mxu0
    %1316 = vmatprep.mubr.f32.mxu0 %v1032
    %1317 = vmatmul.mubr.f32.gmra.mrb[0].mxu0 %v925
    %v1318 = vpop.f32.mrb[0].mxu0
    %v1319 = vadd.f32 0.0, %v1318
    %v1320 = vpop.f32.mrb[0].mxu0
    %1321 = vmatprep.mubr.f32.mxu0 %v1034
    %1322 = vmatmul.mubr.f32.gmra.mrb[0].mxu0 %v926
    %v1323 = vpop.f32.mrb[0].mxu0
    %v1324 = vadd.f32 0.0, %v1323
    %v1325 = vpop.f32.mrb[0].mxu0
    %1326 = vmatprep.mubr.f32.mxu0 %v1036
    %1327 = vmatmul.mubr.f32.gmra.mrb[0].mxu0 %v927
    %v1328 = vpop.f32.mrb[0].mxu0
    %v1329 = vadd.f32 0.0, %v1328
    %v1330 = vpop.f32.mrb[0].mxu0
    %1331 = vmatprep.mubr.f32.mxu0 %v1038
    %1332 = vmatmul.mubr.f32.gmra.mrb[0].mxu0 %v928
    %v1333 = vpop.f32.mrb[0].mxu0
    %v1334 = vadd.f32 0.0, %v1333
    %v1335 = vpop.f32.mrb[0].mxu0
    %1336 = vmatprep.mubr.f32.mxu0 %v1040
    %1337 = vmatmul.mubr.f32.gmra.mrb[0].mxu0 %v929
    %v1338 = vpop.f32.mrb[0].mxu0
    %v1339 = vadd.f32 0.0, %v1338
    %v1340 = vpop.f32.mrb[0].mxu0
    %1341 = vmatprep.mubr.f32.mxu0 %v1042
    %1342 = vmatmul.mubr.f32.gmra.mrb[0].mxu0 %v930
    %v1343 = vpop.f32.mrb[0].mxu0
    %v1344 = vadd.f32 0.0, %v1343
    %v1345 = vpop.f32.mrb[0].mxu0
    %1346 = vmatprep.mubr.f32.mxu0 %v1044
    %1347 = vmatmul.mubr.f32.gmra.mrb[0].mxu0 %v931
    %v1348 = vpop.f32.mrb[0].mxu0
    %v1349 = vadd.f32 0.0, %v1348
    %v1350 = vpop.f32.mrb[0].mxu0
    %1351 = vmatprep.mubr.f32.mxu0 %v1046
    %1352 = vmatmul.mubr.f32.gmra.mrb[0].mxu0 %v932
    %v1353 = vpop.f32.mrb[0].mxu0
    %v1354 = vadd.f32 0.0, %v1353
    %v1355 = vpop.f32.mrb[0].mxu0
    %1356 = vdwg.mxu0
    %s1357 = scalar_lea.vmem %s1, 144
    %v1358 = vld [vmem:[%s1357] sm:$0xff]
    %v1359 = vld [vmem:[%s1357 + $0x8] sm:$0xff]
    %v1360 = vld [vmem:[%s1357 + $0x10] sm:$0xff]
    %v1361 = vld [vmem:[%s1357 + $0x18] sm:$0xff]
    %v1362 = vld [vmem:[%s1357 + $0x20] sm:$0xff]
    %v1363 = vld [vmem:[%s1357 + $0x28] sm:$0xff]
    %v1364 = vld [vmem:[%s1357 + $0x30] sm:$0xff]
    %v1365 = vld [vmem:[%s1357 + $0x38] sm:$0xff]
    %v1366 = vld [vmem:[%s1357 + $0x40] sm:$0xff]
    %v1367 = vld [vmem:[%s1357 + $0x48] sm:$0xff]
    %v1368 = vld [vmem:[%s1357 + $0x50] sm:$0xff]
    %v1369 = vld [vmem:[%s1357 + $0x58] sm:$0xff]
    %v1370 = vld [vmem:[%s1357 + $0x60] sm:$0xff]
    %v1371 = vld [vmem:[%s1357 + $0x68] sm:$0xff]
    %v1372 = vld [vmem:[%s1357 + $0x70] sm:$0xff]
    %v1373 = vld [vmem:[%s1357 + $0x78] sm:$0xff]
    %v1374 = vld [vmem:[%s1357 + $0x80] sm:$0xff]
    %v1375 = vld [vmem:[%s1357 + $0x88] sm:$0xf]
    %v1377 = vsel %vm1048, %v1375, 0
    %1379 = vmatprep.subr.mxu0 0.0
    %1380 = vmatpush1.msra.mxu0 %v1358
    %1381 = vmatprep.subr.mxu0 0.0
    %1382 = vmatpush1.msra.mxu0 %v1359
    %1383 = vmatprep.subr.mxu0 0.0
    %1384 = vmatpush1.msra.mxu0 %v1360
    %1385 = vmatprep.subr.mxu0 0.0
    %1386 = vmatpush1.msra.mxu0 %v1361
    %1387 = vmatprep.subr.mxu0 0.0
    %1388 = vmatpush1.msra.mxu0 %v1362
    %1389 = vmatprep.subr.mxu0 0.0
    %1390 = vmatpush1.msra.mxu0 %v1363
    %1391 = vmatprep.subr.mxu0 0.0
    %1392 = vmatpush1.msra.mxu0 %v1364
    %1393 = vmatprep.subr.mxu0 0.0
    %1394 = vmatpush1.msra.mxu0 %v1365
    %1395 = vmatprep.subr.mxu0 0.0
    %1396 = vmatpush1.msra.mxu0 %v1366
    %1397 = vmatprep.subr.mxu0 0.0
    %1398 = vmatpush1.msra.mxu0 %v1367
    %1399 = vmatprep.subr.mxu0 0.0
    %1400 = vmatpush1.msra.mxu0 %v1368
    %1401 = vmatprep.subr.mxu0 0.0
    %1402 = vmatpush1.msra.mxu0 %v1369
    %1403 = vmatprep.subr.mxu0 0.0
    %1404 = vmatpush1.msra.mxu0 %v1370
    %1405 = vmatprep.subr.mxu0 0.0
    %1406 = vmatpush1.msra.mxu0 %v1371
    %1407 = vmatprep.subr.mxu0 0.0
    %1408 = vmatpush1.msra.mxu0 %v1372
    %1409 = vmatprep.subr.mxu0 0.0
    %1410 = vmatpush1.msra.mxu0 %v1373
    %1411 = vmatprep.subr.mxu0 0.0
    %1412 = vmatpush1.msra.mxu0 %v1374
    %1413 = vmatprep.subr.mxu0 0.0
    %1414 = vmatpush1.msra.mxu0 %v1377
    %1415 = vmatprep.subr.mxu0 0.0
    %1416 = vmatpush1.msra.mxu0 0.0
    %1417 = vmatprep.subr.mxu0 0.0
    %1418 = vmatpush1.msra.mxu0 0.0
    %1419 = vmatprep.subr.mxu0 0.0
    %1420 = vmatpush1.msra.mxu0 0.0
    %1421 = vmatprep.subr.mxu0 0.0
    %1422 = vmatpush1.msra.mxu0 0.0
    %1423 = vmatprep.subr.mxu0 0.0
    %1424 = vmatpush1.msra.mxu0 0.0
    %1425 = vmatprep.subr.mxu0 0.0
    %1426 = vmatpush1.msra.mxu0 0.0
    %1427 = vmatprep.subr.mxu0 0.0
    %1428 = vmatpush1.msra.mxu0 0.0
    %1429 = vmatprep.subr.mxu0 0.0
    %1430 = vmatpush1.msra.mxu0 0.0
    %1431 = vmatprep.subr.mxu0 0.0
    %1432 = vmatpush1.msra.mxu0 0.0
    %1433 = vmatprep.subr.mxu0 0.0
    %1434 = vmatpush1.msra.mxu0 0.0
    %1435 = vmatprep.subr.mxu0 0.0
    %1436 = vmatpush1.msra.mxu0 0.0
    %1437 = vmatprep.subr.mxu0 0.0
    %1438 = vmatpush1.msra.mxu0 0.0
    %1439 = vmatprep.subr.mxu0 0.0
    %1440 = vmatpush1.msra.mxu0 0.0
    %1441 = vmatprep.subr.mxu0 0.0
    %1442 = vmatpush1.msra.mxu0 0.0
    %1443 = vmatprep.mubr.f32.mxu0 %v952
    %1444 = vmatmul.mubr.f32.gmra.mrb[0].mxu0 %v339
    %v1445 = vpop.f32.mrb[0].mxu0
    %v1446 = vadd.f32 0.0, %v1445
    %v1447 = vpop.f32.mrb[0].mxu0
    %1448 = vmatprep.mubr.f32.mxu0 %v954
    %1449 = vmatmul.mubr.f32.gmra.mrb[0].mxu0 %v340
    %v1450 = vpop.f32.mrb[0].mxu0
    %v1451 = vadd.f32 0.0, %v1450
    %v1452 = vpop.f32.mrb[0].mxu0
    %1453 = vmatprep.mubr.f32.mxu0 %v956
    %1454 = vmatmul.mubr.f32.gmra.mrb[0].mxu0 %v341
    %v1455 = vpop.f32.mrb[0].mxu0
    %v1456 = vadd.f32 0.0, %v1455
    %v1457 = vpop.f32.mrb[0].mxu0
    %1458 = vmatprep.mubr.f32.mxu0 %v958
    %1459 = vmatmul.mubr.f32.gmra.mrb[0].mxu0 %v342
    %v1460 = vpop.f32.mrb[0].mxu0
    %v1461 = vadd.f32 0.0, %v1460
    %v1462 = vpop.f32.mrb[0].mxu0
    %1463 = vmatprep.mubr.f32.mxu0 %v960
    %1464 = vmatmul.mubr.f32.gmra.mrb[0].mxu0 %v343
    %v1465 = vpop.f32.mrb[0].mxu0
    %v1466 = vadd.f32 0.0, %v1465
    %v1467 = vpop.f32.mrb[0].mxu0
    %1468 = vmatprep.mubr.f32.mxu0 %v962
    %1469 = vmatmul.mubr.f32.gmra.mrb[0].mxu0 %v344
    %v1470 = vpop.f32.mrb[0].mxu0
    %v1471 = vadd.f32 0.0, %v1470
    %v1472 = vpop.f32.mrb[0].mxu0
    %1473 = vmatprep.mubr.f32.mxu0 %v964
    %1474 = vmatmul.mubr.f32.gmra.mrb[0].mxu0 %v345
    %v1475 = vpop.f32.mrb[0].mxu0
    %v1476 = vadd.f32 0.0, %v1475
    %v1477 = vpop.f32.mrb[0].mxu0
    %1478 = vmatprep.mubr.f32.mxu0 %v966
    %1479 = vmatmul.mubr.f32.gmra.mrb[0].mxu0 %v346
    %v1480 = vpop.f32.mrb[0].mxu0
    %v1481 = vadd.f32 0.0, %v1480
    %v1482 = vpop.f32.mrb[0].mxu0
    %1483 = vmatprep.mubr.f32.mxu0 %v968
    %1484 = vmatmul.mubr.f32.gmra.mrb[0].mxu0 %v347
    %v1485 = vpop.f32.mrb[0].mxu0
    %v1486 = vadd.f32 0.0, %v1485
    %v1487 = vpop.f32.mrb[0].mxu0
    %1488 = vmatprep.mubr.f32.mxu0 %v970
    %1489 = vmatmul.mubr.f32.gmra.mrb[0].mxu0 %v348
    %v1490 = vpop.f32.mrb[0].mxu0
    %v1491 = vadd.f32 0.0, %v1490
    %v1492 = vpop.f32.mrb[0].mxu0
    %1493 = vmatprep.mubr.f32.mxu0 %v972
    %1494 = vmatmul.mubr.f32.gmra.mrb[0].mxu0 %v349
    %v1495 = vpop.f32.mrb[0].mxu0
    %v1496 = vadd.f32 0.0, %v1495
    %v1497 = vpop.f32.mrb[0].mxu0
    %1498 = vmatprep.mubr.f32.mxu0 %v974
    %1499 = vmatmul.mubr.f32.gmra.mrb[0].mxu0 %v350
    %v1500 = vpop.f32.mrb[0].mxu0
    %v1501 = vadd.f32 0.0, %v1500
    %v1502 = vpop.f32.mrb[0].mxu0
    %1503 = vmatprep.mubr.f32.mxu0 %v976
    %1504 = vmatmul.mubr.f32.gmra.mrb[0].mxu0 %v533
    %v1505 = vpop.f32.mrb[0].mxu0
    %v1506 = vadd.f32 0.0, %v1505
    %v1507 = vpop.f32.mrb[0].mxu0
    %1508 = vmatprep.mubr.f32.mxu0 %v978
    %1509 = vmatmul.mubr.f32.gmra.mrb[0].mxu0 %v534
    %v1510 = vpop.f32.mrb[0].mxu0
    %v1511 = vadd.f32 0.0, %v1510
    %v1512 = vpop.f32.mrb[0].mxu0
    %1513 = vmatprep.mubr.f32.mxu0 %v980
    %1514 = vmatmul.mubr.f32.gmra.mrb[0].mxu0 %v535
    %v1515 = vpop.f32.mrb[0].mxu0
    %v1516 = vadd.f32 0.0, %v1515
    %v1517 = vpop.f32.mrb[0].mxu0
    %1518 = vmatprep.mubr.f32.mxu0 %v982
    %1519 = vmatmul.mubr.f32.gmra.mrb[0].mxu0 %v536
    %v1520 = vpop.f32.mrb[0].mxu0
    %v1521 = vadd.f32 0.0, %v1520
    %v1522 = vpop.f32.mrb[0].mxu0
    %1523 = vmatprep.mubr.f32.mxu0 %v984
    %1524 = vmatmul.mubr.f32.gmra.mrb[0].mxu0 %v537
    %v1525 = vpop.f32.mrb[0].mxu0
    %v1526 = vadd.f32 0.0, %v1525
    %v1527 = vpop.f32.mrb[0].mxu0
    %1528 = vmatprep.mubr.f32.mxu0 %v986
    %1529 = vmatmul.mubr.f32.gmra.mrb[0].mxu0 %v538
    %v1530 = vpop.f32.mrb[0].mxu0
    %v1531 = vadd.f32 0.0, %v1530
    %v1532 = vpop.f32.mrb[0].mxu0
    %1533 = vmatprep.mubr.f32.mxu0 %v988
    %1534 = vmatmul.mubr.f32.gmra.mrb[0].mxu0 %v539
    %v1535 = vpop.f32.mrb[0].mxu0
    %v1536 = vadd.f32 0.0, %v1535
    %v1537 = vpop.f32.mrb[0].mxu0
    %1538 = vmatprep.mubr.f32.mxu0 %v990
    %1539 = vmatmul.mubr.f32.gmra.mrb[0].mxu0 %v540
    %v1540 = vpop.f32.mrb[0].mxu0
    %v1541 = vadd.f32 0.0, %v1540
    %v1542 = vpop.f32.mrb[0].mxu0
    %1543 = vmatprep.mubr.f32.mxu0 %v992
    %1544 = vmatmul.mubr.f32.gmra.mrb[0].mxu0 %v541
    %v1545 = vpop.f32.mrb[0].mxu0
    %v1546 = vadd.f32 0.0, %v1545
    %v1547 = vpop.f32.mrb[0].mxu0
    %1548 = vmatprep.mubr.f32.mxu0 %v994
    %1549 = vmatmul.mubr.f32.gmra.mrb[0].mxu0 %v542
    %v1550 = vpop.f32.mrb[0].mxu0
    %v1551 = vadd.f32 0.0, %v1550
    %v1552 = vpop.f32.mrb[0].mxu0
    %1553 = vmatprep.mubr.f32.mxu0 %v996
    %1554 = vmatmul.mubr.f32.gmra.mrb[0].mxu0 %v543
    %v1555 = vpop.f32.mrb[0].mxu0
    %v1556 = vadd.f32 0.0, %v1555
    %v1557 = vpop.f32.mrb[0].mxu0
    %1558 = vmatprep.mubr.f32.mxu0 %v998
    %1559 = vmatmul.mubr.f32.gmra.mrb[0].mxu0 %v544
    %v1560 = vpop.f32.mrb[0].mxu0
    %v1561 = vadd.f32 0.0, %v1560
    %v1562 = vpop.f32.mrb[0].mxu0
    %1563 = vmatprep.mubr.f32.mxu0 %v1000
    %1564 = vmatmul.mubr.f32.gmra.mrb[0].mxu0 %v727
    %v1565 = vpop.f32.mrb[0].mxu0
    %v1566 = vadd.f32 0.0, %v1565
    %v1567 = vpop.f32.mrb[0].mxu0
    %1568 = vmatprep.mubr.f32.mxu0 %v1002
    %1569 = vmatmul.mubr.f32.gmra.mrb[0].mxu0 %v728
    %v1570 = vpop.f32.mrb[0].mxu0
    %v1571 = vadd.f32 0.0, %v1570
    %v1572 = vpop.f32.mrb[0].mxu0
    %1573 = vmatprep.mubr.f32.mxu0 %v1004
    %1574 = vmatmul.mubr.f32.gmra.mrb[0].mxu0 %v729
    %v1575 = vpop.f32.mrb[0].mxu0
    %v1576 = vadd.f32 0.0, %v1575
    %v1577 = vpop.f32.mrb[0].mxu0
    %1578 = vmatprep.mubr.f32.mxu0 %v1006
    %1579 = vmatmul.mubr.f32.gmra.mrb[0].mxu0 %v730
    %v1580 = vpop.f32.mrb[0].mxu0
    %v1581 = vadd.f32 0.0, %v1580
    %v1582 = vpop.f32.mrb[0].mxu0
    %1583 = vmatprep.mubr.f32.mxu0 %v1008
    %1584 = vmatmul.mubr.f32.gmra.mrb[0].mxu0 %v731
    %v1585 = vpop.f32.mrb[0].mxu0
    %v1586 = vadd.f32 0.0, %v1585
    %v1587 = vpop.f32.mrb[0].mxu0
    %1588 = vmatprep.mubr.f32.mxu0 %v1010
    %1589 = vmatmul.mubr.f32.gmra.mrb[0].mxu0 %v732
    %v1590 = vpop.f32.mrb[0].mxu0
    %v1591 = vadd.f32 0.0, %v1590
    %v1592 = vpop.f32.mrb[0].mxu0
    %1593 = vmatprep.mubr.f32.mxu0 %v1012
    %1594 = vmatmul.mubr.f32.gmra.mrb[0].mxu0 %v733
    %v1595 = vpop.f32.mrb[0].mxu0
    %v1596 = vadd.f32 0.0, %v1595
    %v1597 = vpop.f32.mrb[0].mxu0
    %1598 = vmatprep.mubr.f32.mxu0 %v1014
    %1599 = vmatmul.mubr.f32.gmra.mrb[0].mxu0 %v734
    %v1600 = vpop.f32.mrb[0].mxu0
    %v1601 = vadd.f32 0.0, %v1600
    %v1602 = vpop.f32.mrb[0].mxu0
    %1603 = vmatprep.mubr.f32.mxu0 %v1016
    %1604 = vmatmul.mubr.f32.gmra.mrb[0].mxu0 %v735
    %v1605 = vpop.f32.mrb[0].mxu0
    %v1606 = vadd.f32 0.0, %v1605
    %v1607 = vpop.f32.mrb[0].mxu0
    %1608 = vmatprep.mubr.f32.mxu0 %v1018
    %1609 = vmatmul.mubr.f32.gmra.mrb[0].mxu0 %v736
    %v1610 = vpop.f32.mrb[0].mxu0
    %v1611 = vadd.f32 0.0, %v1610
    %v1612 = vpop.f32.mrb[0].mxu0
    %1613 = vmatprep.mubr.f32.mxu0 %v1020
    %1614 = vmatmul.mubr.f32.gmra.mrb[0].mxu0 %v737
    %v1615 = vpop.f32.mrb[0].mxu0
    %v1616 = vadd.f32 0.0, %v1615
    %v1617 = vpop.f32.mrb[0].mxu0
    %1618 = vmatprep.mubr.f32.mxu0 %v1022
    %1619 = vmatmul.mubr.f32.gmra.mrb[0].mxu0 %v738
    %v1620 = vpop.f32.mrb[0].mxu0
    %v1621 = vadd.f32 0.0, %v1620
    %v1622 = vpop.f32.mrb[0].mxu0
    %1623 = vmatprep.mubr.f32.mxu0 %v1024
    %1624 = vmatmul.mubr.f32.gmra.mrb[0].mxu0 %v921
    %v1625 = vpop.f32.mrb[0].mxu0
    %v1626 = vadd.f32 0.0, %v1625
    %v1627 = vpop.f32.mrb[0].mxu0
    %1628 = vmatprep.mubr.f32.mxu0 %v1026
    %1629 = vmatmul.mubr.f32.gmra.mrb[0].mxu0 %v922
    %v1630 = vpop.f32.mrb[0].mxu0
    %v1631 = vadd.f32 0.0, %v1630
    %v1632 = vpop.f32.mrb[0].mxu0
    %1633 = vmatprep.mubr.f32.mxu0 %v1028
    %1634 = vmatmul.mubr.f32.gmra.mrb[0].mxu0 %v923
    %v1635 = vpop.f32.mrb[0].mxu0
    %v1636 = vadd.f32 0.0, %v1635
    %v1637 = vpop.f32.mrb[0].mxu0
    %1638 = vmatprep.mubr.f32.mxu0 %v1030
    %1639 = vmatmul.mubr.f32.gmra.mrb[0].mxu0 %v924
    %v1640 = vpop.f32.mrb[0].mxu0
    %v1641 = vadd.f32 0.0, %v1640
    %v1642 = vpop.f32.mrb[0].mxu0
    %1643 = vmatprep.mubr.f32.mxu0 %v1032
    %1644 = vmatmul.mubr.f32.gmra.mrb[0].mxu0 %v925
    %v1645 = vpop.f32.mrb[0].mxu0
    %v1646 = vadd.f32 0.0, %v1645
    %v1647 = vpop.f32.mrb[0].mxu0
    %1648 = vmatprep.mubr.f32.mxu0 %v1034
    %1649 = vmatmul.mubr.f32.gmra.mrb[0].mxu0 %v926
    %v1650 = vpop.f32.mrb[0].mxu0
    %v1651 = vadd.f32 0.0, %v1650
    %v1652 = vpop.f32.mrb[0].mxu0
    %1653 = vmatprep.mubr.f32.mxu0 %v1036
    %1654 = vmatmul.mubr.f32.gmra.mrb[0].mxu0 %v927
    %v1655 = vpop.f32.mrb[0].mxu0
    %v1656 = vadd.f32 0.0, %v1655
    %v1657 = vpop.f32.mrb[0].mxu0
    %1658 = vmatprep.mubr.f32.mxu0 %v1038
    %1659 = vmatmul.mubr.f32.gmra.mrb[0].mxu0 %v928
    %v1660 = vpop.f32.mrb[0].mxu0
    %v1661 = vadd.f32 0.0, %v1660
    %v1662 = vpop.f32.mrb[0].mxu0
    %1663 = vmatprep.mubr.f32.mxu0 %v1040
    %1664 = vmatmul.mubr.f32.gmra.mrb[0].mxu0 %v929
    %v1665 = vpop.f32.mrb[0].mxu0
    %v1666 = vadd.f32 0.0, %v1665
    %v1667 = vpop.f32.mrb[0].mxu0
    %1668 = vmatprep.mubr.f32.mxu0 %v1042
    %1669 = vmatmul.mubr.f32.gmra.mrb[0].mxu0 %v930
    %v1670 = vpop.f32.mrb[0].mxu0
    %v1671 = vadd.f32 0.0, %v1670
    %v1672 = vpop.f32.mrb[0].mxu0
    %1673 = vmatprep.mubr.f32.mxu0 %v1044
    %1674 = vmatmul.mubr.f32.gmra.mrb[0].mxu0 %v931
    %v1675 = vpop.f32.mrb[0].mxu0
    %v1676 = vadd.f32 0.0, %v1675
    %v1677 = vpop.f32.mrb[0].mxu0
    %1678 = vmatprep.mubr.f32.mxu0 %v1046
    %1679 = vmatmul.mubr.f32.gmra.mrb[0].mxu0 %v932
    %v1680 = vpop.f32.mrb[0].mxu0
    %v1681 = vadd.f32 0.0, %v1680
    %v1682 = vpop.f32.mrb[0].mxu0
    %1683 = vdwg.mxu0
    %v1684 = vmax.f32 %v1119, %v1446
    %v1685 = vmax.f32 %v1124, %v1451
    %v1686 = vmax.f32 %v1129, %v1456
    %v1687 = vmax.f32 %v1134, %v1461
    %v1688 = vmax.f32 %v1139, %v1466
    %v1689 = vmax.f32 %v1144, %v1471
    %v1690 = vmax.f32 %v1149, %v1476
    %v1691 = vmax.f32 %v1154, %v1481
    %v1692 = vmax.f32 %v1159, %v1486
    %v1693 = vmax.f32 %v1164, %v1491
    %v1694 = vmax.f32 %v1169, %v1496
    %v1695 = vmax.f32 %v1174, %v1501
    %v1696 = vmax.f32 %v1179, %v1506
    %v1697 = vmax.f32 %v1184, %v1511
    %v1698 = vmax.f32 %v1189, %v1516
    %v1699 = vmax.f32 %v1194, %v1521
    %v1700 = vmax.f32 %v1199, %v1526
    %v1701 = vmax.f32 %v1204, %v1531
    %v1702 = vmax.f32 %v1209, %v1536
    %v1703 = vmax.f32 %v1214, %v1541
    %v1704 = vmax.f32 %v1219, %v1546
    %v1705 = vmax.f32 %v1224, %v1551
    %v1706 = vmax.f32 %v1229, %v1556
    %v1707 = vmax.f32 %v1234, %v1561
    %v1708 = vmax.f32 %v1239, %v1566
    %v1709 = vmax.f32 %v1244, %v1571
    %v1710 = vmax.f32 %v1249, %v1576
    %v1711 = vmax.f32 %v1254, %v1581
    %v1712 = vmax.f32 %v1259, %v1586
    %v1713 = vmax.f32 %v1264, %v1591
    %v1714 = vmax.f32 %v1269, %v1596
    %v1715 = vmax.f32 %v1274, %v1601
    %v1716 = vmax.f32 %v1279, %v1606
    %v1717 = vmax.f32 %v1284, %v1611
    %v1718 = vmax.f32 %v1289, %v1616
    %v1719 = vmax.f32 %v1294, %v1621
    %v1720 = vmax.f32 %v1299, %v1626
    %v1721 = vmax.f32 %v1304, %v1631
    %v1722 = vmax.f32 %v1309, %v1636
    %v1723 = vmax.f32 %v1314, %v1641
    %v1724 = vmax.f32 %v1319, %v1646
    %v1725 = vmax.f32 %v1324, %v1651
    %v1726 = vmax.f32 %v1329, %v1656
    %v1727 = vmax.f32 %v1334, %v1661
    %v1728 = vmax.f32 %v1339, %v1666
    %v1729 = vmax.f32 %v1344, %v1671
    %v1730 = vmax.f32 %v1349, %v1676
    %v1731 = vmax.f32 %v1354, %v1681
    %v1732 = vmax.f32 %v1684, %v1696
    %v1733 = vmax.f32 %v1685, %v1697
    %v1734 = vmax.f32 %v1686, %v1698
    %v1735 = vmax.f32 %v1687, %v1699
    %v1736 = vmax.f32 %v1688, %v1700
    %v1737 = vmax.f32 %v1689, %v1701
    %v1738 = vmax.f32 %v1690, %v1702
    %v1739 = vmax.f32 %v1691, %v1703
    %v1740 = vmax.f32 %v1692, %v1704
    %v1741 = vmax.f32 %v1693, %v1705
    %v1742 = vmax.f32 %v1694, %v1706
    %v1743 = vmax.f32 %v1695, %v1707
    %v1745 = vlaneseq
    %v1746 = vshrl.u32 %v1745, 7
    %v1747 = vsub.s32 0, %v1746
    %v1748 = vrot.slane %v47, %v1747
    %v1750 = vadd.f32 %v1732, %v1748
    %v1751 = vadd.f32 %v1733, %v1748
    %v1752 = vadd.f32 %v1734, %v1748
    %v1753 = vadd.f32 %v1735, %v1748
    %v1754 = vadd.f32 %v1736, %v1748
    %v1755 = vadd.f32 %v1737, %v1748
    %v1756 = vadd.f32 %v1738, %v1748
    %v1757 = vadd.f32 %v1739, %v1748
    %v1758 = vadd.f32 %v1740, %v1748
    %v1759 = vadd.f32 %v1741, %v1748
    %v1760 = vadd.f32 %v1742, %v1748
    %v1761 = vadd.f32 %v1743, %v1748
    %v1762 = vmax.f32 %v1750, 0.0
    %v1763 = vmax.f32 %v1751, 0.0
    %v1764 = vmax.f32 %v1752, 0.0
    %v1765 = vmax.f32 %v1753, 0.0
    %v1766 = vmax.f32 %v1754, 0.0
    %v1767 = vmax.f32 %v1755, 0.0
    %v1768 = vmax.f32 %v1756, 0.0
    %v1769 = vmax.f32 %v1757, 0.0
    %v1770 = vmax.f32 %v1758, 0.0
    %v1771 = vmax.f32 %v1759, 0.0
    %v1772 = vmax.f32 %v1760, 0.0
    %v1773 = vmax.f32 %v1761, 0.0
    %v1774 = vmax.f32 %v1708, %v1720
    %v1775 = vmax.f32 %v1709, %v1721
    %v1776 = vmax.f32 %v1710, %v1722
    %v1777 = vmax.f32 %v1711, %v1723
    %v1778 = vmax.f32 %v1712, %v1724
    %v1779 = vmax.f32 %v1713, %v1725
    %v1780 = vmax.f32 %v1714, %v1726
    %v1781 = vmax.f32 %v1715, %v1727
    %v1782 = vmax.f32 %v1716, %v1728
    %v1783 = vmax.f32 %v1717, %v1729
    %v1784 = vmax.f32 %v1718, %v1730
    %v1785 = vmax.f32 %v1719, %v1731
    %v1786 = vadd.f32 %v1774, %v1748
    %v1787 = vadd.f32 %v1775, %v1748
    %v1788 = vadd.f32 %v1776, %v1748
    %v1789 = vadd.f32 %v1777, %v1748
    %v1790 = vadd.f32 %v1778, %v1748
    %v1791 = vadd.f32 %v1779, %v1748
    %v1792 = vadd.f32 %v1780, %v1748
    %v1793 = vadd.f32 %v1781, %v1748
    %v1794 = vadd.f32 %v1782, %v1748
    %v1795 = vadd.f32 %v1783, %v1748
    %v1796 = vadd.f32 %v1784, %v1748
    %v1797 = vadd.f32 %v1785, %v1748
    %v1798 = vmax.f32 %v1786, 0.0
    %v1799 = vmax.f32 %v1787, 0.0
    %v1800 = vmax.f32 %v1788, 0.0
    %v1801 = vmax.f32 %v1789, 0.0
    %v1802 = vmax.f32 %v1790, 0.0
    %v1803 = vmax.f32 %v1791, 0.0
    %v1804 = vmax.f32 %v1792, 0.0
    %v1805 = vmax.f32 %v1793, 0.0
    %v1806 = vmax.f32 %v1794, 0.0
    %v1807 = vmax.f32 %v1795, 0.0
    %v1808 = vmax.f32 %v1796, 0.0
    %v1809 = vmax.f32 %v1797, 0.0
    %v1810 = vld [vmem:[%s3] sm:$0xff]
    %v1811 = vld [vmem:[%s3 + $0x8] sm:$0xff]
    %v1812 = vld [vmem:[%s3 + $0x10] sm:$0xff]
    %v1813 = vld [vmem:[%s3 + $0x18] sm:$0xff]
    %v1814 = vld [vmem:[%s3 + $0x20] sm:$0xff]
    %v1815 = vld [vmem:[%s3 + $0x28] sm:$0xff]
    %v1816 = vld [vmem:[%s3 + $0x30] sm:$0xff]
    %v1817 = vld [vmem:[%s3 + $0x38] sm:$0xff]
    %v1818 = vld [vmem:[%s3 + $0x40] sm:$0xff]
    %v1819 = vld [vmem:[%s3 + $0x48] sm:$0xff]
    %v1820 = vld [vmem:[%s3 + $0x50] sm:$0xff]
    %v1821 = vld [vmem:[%s3 + $0x58] sm:$0xff]
    %v1822 = vld [vmem:[%s3 + $0x60] sm:$0xff]
    %v1823 = vld [vmem:[%s3 + $0x68] sm:$0xff]
    %v1824 = vld [vmem:[%s3 + $0x70] sm:$0xff]
    %v1825 = vld [vmem:[%s3 + $0x78] sm:$0xff]
    %v1826 = vld [vmem:[%s3 + $0x80] sm:$0xff]
    %v1827 = vld [vmem:[%s3 + $0x88] sm:$0xff]
    %v1828 = vld [vmem:[%s3 + $0x90] sm:$0xff]
    %v1829 = vld [vmem:[%s3 + $0x98] sm:$0xff]
    %v1830 = vld [vmem:[%s3 + $0xa0] sm:$0xff]
    %v1831 = vld [vmem:[%s3 + $0xa8] sm:$0xff]
    %v1832 = vld [vmem:[%s3 + $0xb0] sm:$0xff]
    %v1833 = vld [vmem:[%s3 + $0xb8] sm:$0xff]
    %v1834 = vld [vmem:[%s3 + $0xc0] sm:$0xff]
    %v1835 = vld [vmem:[%s3 + $0xc8] sm:$0xff]
    %v1836 = vld [vmem:[%s3 + $0xd0] sm:$0xff]
    %v1837 = vld [vmem:[%s3 + $0xd8] sm:$0xff]
    %v1838 = vld [vmem:[%s3 + $0xe0] sm:$0xff]
    %v1839 = vld [vmem:[%s3 + $0xe8] sm:$0xff]
    %v1840 = vld [vmem:[%s3 + $0xf0] sm:$0xff]
    %v1841 = vld [vmem:[%s3 + $0xf8] sm:$0xff]
    %v1842 = vld [vmem:[%s3 + $0x100] sm:$0xff]
    %v1843 = vld [vmem:[%s3 + $0x108] sm:$0xff]
    %v1844 = vld [vmem:[%s3 + $0x110] sm:$0xff]
    %v1845 = vld [vmem:[%s3 + $0x118] sm:$0xff]
    %v1846 = vld [vmem:[%s3 + $0x120] sm:$0xff]
    %v1847 = vld [vmem:[%s3 + $0x128] sm:$0xff]
    %v1848 = vld [vmem:[%s3 + $0x130] sm:$0xff]
    %v1849 = vld [vmem:[%s3 + $0x138] sm:$0xff]
    %v1850 = vld [vmem:[%s3 + $0x140] sm:$0xff]
    %v1851 = vld [vmem:[%s3 + $0x148] sm:$0xff]
    %v1852 = vld [vmem:[%s3 + $0x150] sm:$0xff]
    %v1853 = vld [vmem:[%s3 + $0x158] sm:$0xff]
    %v1854 = vld [vmem:[%s3 + $0x160] sm:$0xff]
    %v1855 = vld [vmem:[%s3 + $0x168] sm:$0xff]
    %v1856 = vld [vmem:[%s3 + $0x170] sm:$0xff]
    %v1857 = vld [vmem:[%s3 + $0x178] sm:$0xff]
    %v1858 = vld [vmem:[%s3 + $0x180] sm:$0xff]
    %v1859 = vld [vmem:[%s3 + $0x188] sm:$0xff]
    %v1860 = vld [vmem:[%s3 + $0x190] sm:$0xff]
    %v1861 = vld [vmem:[%s3 + $0x198] sm:$0xff]
    %v1862 = vld [vmem:[%s3 + $0x1a0] sm:$0xff]
    %v1863 = vld [vmem:[%s3 + $0x1a8] sm:$0xff]
    %v1864 = vld [vmem:[%s3 + $0x1b0] sm:$0xff]
    %v1865 = vld [vmem:[%s3 + $0x1b8] sm:$0xff]
    %v1866 = vld [vmem:[%s3 + $0x1c0] sm:$0xff]
    %v1867 = vld [vmem:[%s3 + $0x1c8] sm:$0xff]
    %v1868 = vld [vmem:[%s3 + $0x1d0] sm:$0xff]
    %v1869 = vld [vmem:[%s3 + $0x1d8] sm:$0xff]
    %v1870 = vld [vmem:[%s3 + $0x1e0] sm:$0xff]
    %v1871 = vld [vmem:[%s3 + $0x1e8] sm:$0xff]
    %v1872 = vld [vmem:[%s3 + $0x1f0] sm:$0xff]
    %v1873 = vld [vmem:[%s3 + $0x1f8] sm:$0xff]
    %v1874 = vld [vmem:[%s3 + $0x200] sm:$0xff]
    %v1875 = vld [vmem:[%s3 + $0x208] sm:$0xff]
    %v1876 = vld [vmem:[%s3 + $0x210] sm:$0xff]
    %v1877 = vld [vmem:[%s3 + $0x218] sm:$0xff]
    %v1878 = vld [vmem:[%s3 + $0x220] sm:$0xff]
    %v1879 = vld [vmem:[%s3 + $0x228] sm:$0xff]
    %v1880 = vld [vmem:[%s3 + $0x230] sm:$0xff]
    %v1881 = vld [vmem:[%s3 + $0x238] sm:$0xff]
    %v1882 = vld [vmem:[%s3 + $0x240] sm:$0xff]
    %v1883 = vld [vmem:[%s3 + $0x248] sm:$0xff]
    %v1884 = vld [vmem:[%s3 + $0x250] sm:$0xff]
    %v1885 = vld [vmem:[%s3 + $0x258] sm:$0xff]
    %v1886 = vld [vmem:[%s3 + $0x260] sm:$0xff]
    %v1887 = vld [vmem:[%s3 + $0x268] sm:$0xff]
    %v1888 = vld [vmem:[%s3 + $0x270] sm:$0xff]
    %v1889 = vld [vmem:[%s3 + $0x278] sm:$0xff]
    %1890 = vmatprep.subr.mxu0 0.0
    %1891 = vmatpush1.msra.mxu0 %v1810
    %1892 = vmatprep.subr.mxu0 0.0
    %1893 = vmatpush1.msra.mxu0 %v1811
    %1894 = vmatprep.subr.mxu0 0.0
    %1895 = vmatpush1.msra.mxu0 %v1812
    %1896 = vmatprep.subr.mxu0 0.0
    %1897 = vmatpush1.msra.mxu0 %v1813
    %1898 = vmatprep.subr.mxu0 0.0
    %1899 = vmatpush1.msra.mxu0 %v1814
    %1900 = vmatprep.subr.mxu0 0.0
    %1901 = vmatpush1.msra.mxu0 %v1815
    %1902 = vmatprep.subr.mxu0 0.0
    %1903 = vmatpush1.msra.mxu0 %v1816
    %1904 = vmatprep.subr.mxu0 0.0
    %1905 = vmatpush1.msra.mxu0 %v1817
    %1906 = vmatprep.subr.mxu0 0.0
    %1907 = vmatpush1.msra.mxu0 %v1818
    %1908 = vmatprep.subr.mxu0 0.0
    %1909 = vmatpush1.msra.mxu0 %v1819
    %1910 = vmatprep.subr.mxu0 0.0
    %1911 = vmatpush1.msra.mxu0 %v1820
    %1912 = vmatprep.subr.mxu0 0.0
    %1913 = vmatpush1.msra.mxu0 %v1821
    %1914 = vmatprep.subr.mxu0 0.0
    %1915 = vmatpush1.msra.mxu0 %v1822
    %1916 = vmatprep.subr.mxu0 0.0
    %1917 = vmatpush1.msra.mxu0 %v1823
    %1918 = vmatprep.subr.mxu0 0.0
    %1919 = vmatpush1.msra.mxu0 %v1824
    %1920 = vmatprep.subr.mxu0 0.0
    %1921 = vmatpush1.msra.mxu0 %v1825
    %1922 = vmatprep.subr.mxu0 0.0
    %1923 = vmatpush1.msra.mxu0 %v1826
    %1924 = vmatprep.subr.mxu0 0.0
    %1925 = vmatpush1.msra.mxu0 %v1827
    %1926 = vmatprep.subr.mxu0 0.0
    %1927 = vmatpush1.msra.mxu0 %v1828
    %1928 = vmatprep.subr.mxu0 0.0
    %1929 = vmatpush1.msra.mxu0 %v1829
    %1930 = vmatprep.subr.mxu0 0.0
    %1931 = vmatpush1.msra.mxu0 %v1830
    %1932 = vmatprep.subr.mxu0 0.0
    %1933 = vmatpush1.msra.mxu0 %v1831
    %1934 = vmatprep.subr.mxu0 0.0
    %1935 = vmatpush1.msra.mxu0 %v1832
    %1936 = vmatprep.subr.mxu0 0.0
    %1937 = vmatpush1.msra.mxu0 %v1833
    %1938 = vmatprep.subr.mxu0 0.0
    %1939 = vmatpush1.msra.mxu0 %v1834
    %1940 = vmatprep.subr.mxu0 0.0
    %1941 = vmatpush1.msra.mxu0 %v1835
    %1942 = vmatprep.subr.mxu0 0.0
    %1943 = vmatpush1.msra.mxu0 %v1836
    %1944 = vmatprep.subr.mxu0 0.0
    %1945 = vmatpush1.msra.mxu0 %v1837
    %1946 = vmatprep.subr.mxu0 0.0
    %1947 = vmatpush1.msra.mxu0 %v1838
    %1948 = vmatprep.subr.mxu0 0.0
    %1949 = vmatpush1.msra.mxu0 %v1839
    %1950 = vmatprep.subr.mxu0 0.0
    %1951 = vmatpush1.msra.mxu0 %v1840
    %1952 = vmatprep.subr.mxu0 0.0
    %1953 = vmatpush1.msra.mxu0 %v1841
    %1954 = vmatprep.mubr.f32.mxu0 %v1798
    %1955 = vmatmul.mubr.f32.gmra.mrb[0].mxu0 %v1762
    %v1956 = vpop.f32.mrb[0].mxu0
    %v1957 = vadd.f32 0.0, %v1956
    %v1958 = vpop.f32.mrb[0].mxu0
    %1959 = vmatprep.mubr.f32.mxu0 %v1799
    %1960 = vmatmul.mubr.f32.gmra.mrb[0].mxu0 %v1763
    %v1961 = vpop.f32.mrb[0].mxu0
    %v1962 = vadd.f32 0.0, %v1961
    %v1963 = vpop.f32.mrb[0].mxu0
    %1964 = vmatprep.mubr.f32.mxu0 %v1800
    %1965 = vmatmul.mubr.f32.gmra.mrb[0].mxu0 %v1764
    %v1966 = vpop.f32.mrb[0].mxu0
    %v1967 = vadd.f32 0.0, %v1966
    %v1968 = vpop.f32.mrb[0].mxu0
    %1969 = vmatprep.mubr.f32.mxu0 %v1801
    %1970 = vmatmul.mubr.f32.gmra.mrb[0].mxu0 %v1765
    %v1971 = vpop.f32.mrb[0].mxu0
    %v1972 = vadd.f32 0.0, %v1971
    %v1973 = vpop.f32.mrb[0].mxu0
    %1974 = vmatprep.mubr.f32.mxu0 %v1802
    %1975 = vmatmul.mubr.f32.gmra.mrb[0].mxu0 %v1766
    %v1976 = vpop.f32.mrb[0].mxu0
    %v1977 = vadd.f32 0.0, %v1976
    %v1978 = vpop.f32.mrb[0].mxu0
    %1979 = vmatprep.mubr.f32.mxu0 %v1803
    %1980 = vmatmul.mubr.f32.gmra.mrb[0].mxu0 %v1767
    %v1981 = vpop.f32.mrb[0].mxu0
    %v1982 = vadd.f32 0.0, %v1981
    %v1983 = vpop.f32.mrb[0].mxu0
    %1984 = vmatprep.mubr.f32.mxu0 %v1804
    %1985 = vmatmul.mubr.f32.gmra.mrb[0].mxu0 %v1768
    %v1986 = vpop.f32.mrb[0].mxu0
    %v1987 = vadd.f32 0.0, %v1986
    %v1988 = vpop.f32.mrb[0].mxu0
    %1989 = vmatprep.mubr.f32.mxu0 %v1805
    %1990 = vmatmul.mubr.f32.gmra.mrb[0].mxu0 %v1769
    %v1991 = vpop.f32.mrb[0].mxu0
    %v1992 = vadd.f32 0.0, %v1991
    %v1993 = vpop.f32.mrb[0].mxu0
    %1994 = vmatprep.mubr.f32.mxu0 %v1764
    %1995 = vmatmul.mubr.f32.gmra.mrb[0].mxu0 %v1798
    %v1996 = vpop.f32.mrb[0].mxu0
    %v1997 = vadd.f32 0.0, %v1996
    %v1998 = vpop.f32.mrb[0].mxu0
    %1999 = vmatprep.mubr.f32.mxu0 %v1765
    %2000 = vmatmul.mubr.f32.gmra.mrb[0].mxu0 %v1799
    %v2001 = vpop.f32.mrb[0].mxu0
    %v2002 = vadd.f32 0.0, %v2001
    %v2003 = vpop.f32.mrb[0].mxu0
    %2004 = vmatprep.mubr.f32.mxu0 %v1766
    %2005 = vmatmul.mubr.f32.gmra.mrb[0].mxu0 %v1800
    %v2006 = vpop.f32.mrb[0].mxu0
    %v2007 = vadd.f32 0.0, %v2006
    %v2008 = vpop.f32.mrb[0].mxu0
    %2009 = vmatprep.mubr.f32.mxu0 %v1767
    %2010 = vmatmul.mubr.f32.gmra.mrb[0].mxu0 %v1801
    %v2011 = vpop.f32.mrb[0].mxu0
    %v2012 = vadd.f32 0.0, %v2011
    %v2013 = vpop.f32.mrb[0].mxu0
    %2014 = vmatprep.mubr.f32.mxu0 %v1768
    %2015 = vmatmul.mubr.f32.gmra.mrb[0].mxu0 %v1802
    %v2016 = vpop.f32.mrb[0].mxu0
    %v2017 = vadd.f32 0.0, %v2016
    %v2018 = vpop.f32.mrb[0].mxu0
    %2019 = vmatprep.mubr.f32.mxu0 %v1769
    %2020 = vmatmul.mubr.f32.gmra.mrb[0].mxu0 %v1803
    %v2021 = vpop.f32.mrb[0].mxu0
    %v2022 = vadd.f32 0.0, %v2021
    %v2023 = vpop.f32.mrb[0].mxu0
    %2024 = vmatprep.mubr.f32.mxu0 %v1770
    %2025 = vmatmul.mubr.f32.gmra.mrb[0].mxu0 %v1804
    %v2026 = vpop.f32.mrb[0].mxu0
    %v2027 = vadd.f32 0.0, %v2026
    %v2028 = vpop.f32.mrb[0].mxu0
    %2029 = vmatprep.mubr.f32.mxu0 %v1771
    %2030 = vmatmul.mubr.f32.gmra.mrb[0].mxu0 %v1805
    %v2031 = vpop.f32.mrb[0].mxu0
    %v2032 = vadd.f32 0.0, %v2031
    %v2033 = vpop.f32.mrb[0].mxu0
    %2034 = vdwg.mxu0
    %2035 = vmatprep.subr.mxu0 0.0
    %2036 = vmatpush1.msra.mxu0 %v1842
    %2037 = vmatprep.subr.mxu0 0.0
    %2038 = vmatpush1.msra.mxu0 %v1843
    %2039 = vmatprep.subr.mxu0 0.0
    %2040 = vmatpush1.msra.mxu0 %v1844
    %2041 = vmatprep.subr.mxu0 0.0
    %2042 = vmatpush1.msra.mxu0 %v1845
    %2043 = vmatprep.subr.mxu0 0.0
    %2044 = vmatpush1.msra.mxu0 %v1846
    %2045 = vmatprep.subr.mxu0 0.0
    %2046 = vmatpush1.msra.mxu0 %v1847
    %2047 = vmatprep.subr.mxu0 0.0
    %2048 = vmatpush1.msra.mxu0 %v1848
    %2049 = vmatprep.subr.mxu0 0.0
    %2050 = vmatpush1.msra.mxu0 %v1849
    %2051 = vmatprep.subr.mxu0 0.0
    %2052 = vmatpush1.msra.mxu0 %v1850
    %2053 = vmatprep.subr.mxu0 0.0
    %2054 = vmatpush1.msra.mxu0 %v1851
    %2055 = vmatprep.subr.mxu0 0.0
    %2056 = vmatpush1.msra.mxu0 %v1852
    %2057 = vmatprep.subr.mxu0 0.0
    %2058 = vmatpush1.msra.mxu0 %v1853
    %2059 = vmatprep.subr.mxu0 0.0
    %2060 = vmatpush1.msra.mxu0 %v1854
    %2061 = vmatprep.subr.mxu0 0.0
    %2062 = vmatpush1.msra.mxu0 %v1855
    %2063 = vmatprep.subr.mxu0 0.0
    %2064 = vmatpush1.msra.mxu0 %v1856
    %2065 = vmatprep.subr.mxu0 0.0
    %2066 = vmatpush1.msra.mxu0 %v1857
    %2067 = vmatprep.subr.mxu0 0.0
    %2068 = vmatpush1.msra.mxu0 %v1858
    %2069 = vmatprep.subr.mxu0 0.0
    %2070 = vmatpush1.msra.mxu0 %v1859
    %2071 = vmatprep.subr.mxu0 0.0
    %2072 = vmatpush1.msra.mxu0 %v1860
    %2073 = vmatprep.subr.mxu0 0.0
    %2074 = vmatpush1.msra.mxu0 %v1861
    %2075 = vmatprep.subr.mxu0 0.0
    %2076 = vmatpush1.msra.mxu0 %v1862
    %2077 = vmatprep.subr.mxu0 0.0
    %2078 = vmatpush1.msra.mxu0 %v1863
    %2079 = vmatprep.subr.mxu0 0.0
    %2080 = vmatpush1.msra.mxu0 %v1864
    %2081 = vmatprep.subr.mxu0 0.0
    %2082 = vmatpush1.msra.mxu0 %v1865
    %2083 = vmatprep.subr.mxu0 0.0
    %2084 = vmatpush1.msra.mxu0 %v1866
    %2085 = vmatprep.subr.mxu0 0.0
    %2086 = vmatpush1.msra.mxu0 %v1867
    %2087 = vmatprep.subr.mxu0 0.0
    %2088 = vmatpush1.msra.mxu0 %v1868
    %2089 = vmatprep.subr.mxu0 0.0
    %2090 = vmatpush1.msra.mxu0 %v1869
    %2091 = vmatprep.subr.mxu0 0.0
    %2092 = vmatpush1.msra.mxu0 %v1870
    %2093 = vmatprep.subr.mxu0 0.0
    %2094 = vmatpush1.msra.mxu0 %v1871
    %2095 = vmatprep.subr.mxu0 0.0
    %2096 = vmatpush1.msra.mxu0 %v1872
    %2097 = vmatprep.subr.mxu0 0.0
    %2098 = vmatpush1.msra.mxu0 %v1873
    %2099 = vmatprep.mubr.f32.mxu0 %v1800
    %2100 = vmatmul.mubr.f32.gmra.mrb[0].mxu0 %v1764
    %v2101 = vpop.f32.mrb[0].mxu0
    %v2102 = vadd.f32 %v1957, %v2101
    %v2103 = vpop.f32.mrb[0].mxu0
    %2104 = vmatprep.mubr.f32.mxu0 %v1801
    %2105 = vmatmul.mubr.f32.gmra.mrb[0].mxu0 %v1765
    %v2106 = vpop.f32.mrb[0].mxu0
    %v2107 = vadd.f32 %v1962, %v2106
    %v2108 = vpop.f32.mrb[0].mxu0
    %2109 = vmatprep.mubr.f32.mxu0 %v1802
    %2110 = vmatmul.mubr.f32.gmra.mrb[0].mxu0 %v1766
    %v2111 = vpop.f32.mrb[0].mxu0
    %v2112 = vadd.f32 %v1967, %v2111
    %v2113 = vpop.f32.mrb[0].mxu0
    %2114 = vmatprep.mubr.f32.mxu0 %v1803
    %2115 = vmatmul.mubr.f32.gmra.mrb[0].mxu0 %v1767
    %v2116 = vpop.f32.mrb[0].mxu0
    %v2117 = vadd.f32 %v1972, %v2116
    %v2118 = vpop.f32.mrb[0].mxu0
    %2119 = vmatprep.mubr.f32.mxu0 %v1804
    %2120 = vmatmul.mubr.f32.gmra.mrb[0].mxu0 %v1768
    %v2121 = vpop.f32.mrb[0].mxu0
    %v2122 = vadd.f32 %v1977, %v2121
    %v2123 = vpop.f32.mrb[0].mxu0
    %2124 = vmatprep.mubr.f32.mxu0 %v1805
    %2125 = vmatmul.mubr.f32.gmra.mrb[0].mxu0 %v1769
    %v2126 = vpop.f32.mrb[0].mxu0
    %v2127 = vadd.f32 %v1982, %v2126
    %v2128 = vpop.f32.mrb[0].mxu0
    %2129 = vmatprep.mubr.f32.mxu0 %v1806
    %2130 = vmatmul.mubr.f32.gmra.mrb[0].mxu0 %v1770
    %v2131 = vpop.f32.mrb[0].mxu0
    %v2132 = vadd.f32 %v1987, %v2131
    %v2133 = vpop.f32.mrb[0].mxu0
    %2134 = vmatprep.mubr.f32.mxu0 %v1807
    %2135 = vmatmul.mubr.f32.gmra.mrb[0].mxu0 %v1771
    %v2136 = vpop.f32.mrb[0].mxu0
    %v2137 = vadd.f32 %v1992, %v2136
    %v2138 = vpop.f32.mrb[0].mxu0
    %2139 = vmatprep.mubr.f32.mxu0 %v1766
    %2140 = vmatmul.mubr.f32.gmra.mrb[0].mxu0 %v1800
    %v2141 = vpop.f32.mrb[0].mxu0
    %v2142 = vadd.f32 %v1997, %v2141
    %v2143 = vpop.f32.mrb[0].mxu0
    %2144 = vmatprep.mubr.f32.mxu0 %v1767
    %2145 = vmatmul.mubr.f32.gmra.mrb[0].mxu0 %v1801
    %v2146 = vpop.f32.mrb[0].mxu0
    %v2147 = vadd.f32 %v2002, %v2146
    %v2148 = vpop.f32.mrb[0].mxu0
    %2149 = vmatprep.mubr.f32.mxu0 %v1768
    %2150 = vmatmul.mubr.f32.gmra.mrb[0].mxu0 %v1802
    %v2151 = vpop.f32.mrb[0].mxu0
    %v2152 = vadd.f32 %v2007, %v2151
    %v2153 = vpop.f32.mrb[0].mxu0
    %2154 = vmatprep.mubr.f32.mxu0 %v1769
    %2155 = vmatmul.mubr.f32.gmra.mrb[0].mxu0 %v1803
    %v2156 = vpop.f32.mrb[0].mxu0
    %v2157 = vadd.f32 %v2012, %v2156
    %v2158 = vpop.f32.mrb[0].mxu0
    %2159 = vmatprep.mubr.f32.mxu0 %v1770
    %2160 = vmatmul.mubr.f32.gmra.mrb[0].mxu0 %v1804
    %v2161 = vpop.f32.mrb[0].mxu0
    %v2162 = vadd.f32 %v2017, %v2161
    %v2163 = vpop.f32.mrb[0].mxu0
    %2164 = vmatprep.mubr.f32.mxu0 %v1771
    %2165 = vmatmul.mubr.f32.gmra.mrb[0].mxu0 %v1805
    %v2166 = vpop.f32.mrb[0].mxu0
    %v2167 = vadd.f32 %v2022, %v2166
    %v2168 = vpop.f32.mrb[0].mxu0
    %2169 = vmatprep.mubr.f32.mxu0 %v1772
    %2170 = vmatmul.mubr.f32.gmra.mrb[0].mxu0 %v1806
    %v2171 = vpop.f32.mrb[0].mxu0
    %v2172 = vadd.f32 %v2027, %v2171
    %v2173 = vpop.f32.mrb[0].mxu0
    %2174 = vmatprep.mubr.f32.mxu0 %v1773
    %2175 = vmatmul.mubr.f32.gmra.mrb[0].mxu0 %v1807
    %v2176 = vpop.f32.mrb[0].mxu0
    %v2177 = vadd.f32 %v2032, %v2176
    %v2178 = vpop.f32.mrb[0].mxu0
    %2179 = vdwg.mxu0
    %2180 = vmatprep.subr.mxu0 0.0
    %2181 = vmatpush1.msra.mxu0 %v1874
    %2182 = vmatprep.subr.mxu0 0.0
    %2183 = vmatpush1.msra.mxu0 %v1875
    %2184 = vmatprep.subr.mxu0 0.0
    %2185 = vmatpush1.msra.mxu0 %v1876
    %2186 = vmatprep.subr.mxu0 0.0
    %2187 = vmatpush1.msra.mxu0 %v1877
    %2188 = vmatprep.subr.mxu0 0.0
    %2189 = vmatpush1.msra.mxu0 %v1878
    %2190 = vmatprep.subr.mxu0 0.0
    %2191 = vmatpush1.msra.mxu0 %v1879
    %2192 = vmatprep.subr.mxu0 0.0
    %2193 = vmatpush1.msra.mxu0 %v1880
    %2194 = vmatprep.subr.mxu0 0.0
    %2195 = vmatpush1.msra.mxu0 %v1881
    %2196 = vmatprep.subr.mxu0 0.0
    %2197 = vmatpush1.msra.mxu0 %v1882
    %2198 = vmatprep.subr.mxu0 0.0
    %2199 = vmatpush1.msra.mxu0 %v1883
    %2200 = vmatprep.subr.mxu0 0.0
    %2201 = vmatpush1.msra.mxu0 %v1884
    %2202 = vmatprep.subr.mxu0 0.0
    %2203 = vmatpush1.msra.mxu0 %v1885
    %2204 = vmatprep.subr.mxu0 0.0
    %2205 = vmatpush1.msra.mxu0 %v1886
    %2206 = vmatprep.subr.mxu0 0.0
    %2207 = vmatpush1.msra.mxu0 %v1887
    %2208 = vmatprep.subr.mxu0 0.0
    %2209 = vmatpush1.msra.mxu0 %v1888
    %2210 = vmatprep.subr.mxu0 0.0
    %2211 = vmatpush1.msra.mxu0 %v1889
    %2212 = vmatprep.subr.mxu0 0.0
    %2213 = vmatpush1.msra.mxu0 0.0
    %2214 = vmatprep.subr.mxu0 0.0
    %2215 = vmatpush1.msra.mxu0 0.0
    %2216 = vmatprep.subr.mxu0 0.0
    %2217 = vmatpush1.msra.mxu0 0.0
    %2218 = vmatprep.subr.mxu0 0.0
    %2219 = vmatpush1.msra.mxu0 0.0
    %2220 = vmatprep.subr.mxu0 0.0
    %2221 = vmatpush1.msra.mxu0 0.0
    %2222 = vmatprep.subr.mxu0 0.0
    %2223 = vmatpush1.msra.mxu0 0.0
    %2224 = vmatprep.subr.mxu0 0.0
    %2225 = vmatpush1.msra.mxu0 0.0
    %2226 = vmatprep.subr.mxu0 0.0
    %2227 = vmatpush1.msra.mxu0 0.0
    %2228 = vmatprep.subr.mxu0 0.0
    %2229 = vmatpush1.msra.mxu0 0.0
    %2230 = vmatprep.subr.mxu0 0.0
    %2231 = vmatpush1.msra.mxu0 0.0
    %2232 = vmatprep.subr.mxu0 0.0
    %2233 = vmatpush1.msra.mxu0 0.0
    %2234 = vmatprep.subr.mxu0 0.0
    %2235 = vmatpush1.msra.mxu0 0.0
    %2236 = vmatprep.subr.mxu0 0.0
    %2237 = vmatpush1.msra.mxu0 0.0
    %2238 = vmatprep.subr.mxu0 0.0
    %2239 = vmatpush1.msra.mxu0 0.0
    %2240 = vmatprep.subr.mxu0 0.0
    %2241 = vmatpush1.msra.mxu0 0.0
    %2242 = vmatprep.subr.mxu0 0.0
    %2243 = vmatpush1.msra.mxu0 0.0
    %2244 = vmatprep.mubr.f32.mxu0 0.0
    %2245 = vmatmul.mubr.f32.gmra.mrb[0].mxu0 %v1766
    %v2246 = vpop.f32.mrb[0].mxu0
    %v2247 = vadd.f32 %v2102, %v2246
    %v2248 = vpop.f32.mrb[0].mxu0
    %2249 = vmatprep.mubr.f32.mxu0 0.0
    %2250 = vmatmul.mubr.f32.gmra.mrb[0].mxu0 %v1767
    %v2251 = vpop.f32.mrb[0].mxu0
    %v2252 = vadd.f32 %v2107, %v2251
    %v2253 = vpop.f32.mrb[0].mxu0
    %2254 = vmatprep.mubr.f32.mxu0 0.0
    %2255 = vmatmul.mubr.f32.gmra.mrb[0].mxu0 %v1768
    %v2256 = vpop.f32.mrb[0].mxu0
    %v2257 = vadd.f32 %v2112, %v2256
    %v2258 = vpop.f32.mrb[0].mxu0
    %2259 = vmatprep.mubr.f32.mxu0 0.0
    %2260 = vmatmul.mubr.f32.gmra.mrb[0].mxu0 %v1769
    %v2261 = vpop.f32.mrb[0].mxu0
    %v2262 = vadd.f32 %v2117, %v2261
    %v2263 = vpop.f32.mrb[0].mxu0
    %2264 = vmatprep.mubr.f32.mxu0 0.0
    %2265 = vmatmul.mubr.f32.gmra.mrb[0].mxu0 %v1770
    %v2266 = vpop.f32.mrb[0].mxu0
    %v2267 = vadd.f32 %v2122, %v2266
    %v2268 = vpop.f32.mrb[0].mxu0
    %2269 = vmatprep.mubr.f32.mxu0 0.0
    %2270 = vmatmul.mubr.f32.gmra.mrb[0].mxu0 %v1771
    %v2271 = vpop.f32.mrb[0].mxu0
    %v2272 = vadd.f32 %v2127, %v2271
    %v2273 = vpop.f32.mrb[0].mxu0
    %2274 = vmatprep.mubr.f32.mxu0 0.0
    %2275 = vmatmul.mubr.f32.gmra.mrb[0].mxu0 %v1772
    %v2276 = vpop.f32.mrb[0].mxu0
    %v2277 = vadd.f32 %v2132, %v2276
    %v2278 = vpop.f32.mrb[0].mxu0
    %2279 = vmatprep.mubr.f32.mxu0 0.0
    %2280 = vmatmul.mubr.f32.gmra.mrb[0].mxu0 %v1773
    %v2281 = vpop.f32.mrb[0].mxu0
    %v2282 = vadd.f32 %v2137, %v2281
    %v2283 = vpop.f32.mrb[0].mxu0
    %2284 = vmatprep.mubr.f32.mxu0 0.0
    %2285 = vmatmul.mubr.f32.gmra.mrb[0].mxu0 %v1802
    %v2286 = vpop.f32.mrb[0].mxu0
    %v2287 = vadd.f32 %v2142, %v2286
    %v2288 = vpop.f32.mrb[0].mxu0
    %2289 = vmatprep.mubr.f32.mxu0 0.0
    %2290 = vmatmul.mubr.f32.gmra.mrb[0].mxu0 %v1803
    %v2291 = vpop.f32.mrb[0].mxu0
    %v2292 = vadd.f32 %v2147, %v2291
    %v2293 = vpop.f32.mrb[0].mxu0
    %2294 = vmatprep.mubr.f32.mxu0 0.0
    %2295 = vmatmul.mubr.f32.gmra.mrb[0].mxu0 %v1804
    %v2296 = vpop.f32.mrb[0].mxu0
    %v2297 = vadd.f32 %v2152, %v2296
    %v2298 = vpop.f32.mrb[0].mxu0
    %2299 = vmatprep.mubr.f32.mxu0 0.0
    %2300 = vmatmul.mubr.f32.gmra.mrb[0].mxu0 %v1805
    %v2301 = vpop.f32.mrb[0].mxu0
    %v2302 = vadd.f32 %v2157, %v2301
    %v2303 = vpop.f32.mrb[0].mxu0
    %2304 = vmatprep.mubr.f32.mxu0 0.0
    %2305 = vmatmul.mubr.f32.gmra.mrb[0].mxu0 %v1806
    %v2306 = vpop.f32.mrb[0].mxu0
    %v2307 = vadd.f32 %v2162, %v2306
    %v2308 = vpop.f32.mrb[0].mxu0
    %2309 = vmatprep.mubr.f32.mxu0 0.0
    %2310 = vmatmul.mubr.f32.gmra.mrb[0].mxu0 %v1807
    %v2311 = vpop.f32.mrb[0].mxu0
    %v2312 = vadd.f32 %v2167, %v2311
    %v2313 = vpop.f32.mrb[0].mxu0
    %2314 = vmatprep.mubr.f32.mxu0 0.0
    %2315 = vmatmul.mubr.f32.gmra.mrb[0].mxu0 %v1808
    %v2316 = vpop.f32.mrb[0].mxu0
    %v2317 = vadd.f32 %v2172, %v2316
    %v2318 = vpop.f32.mrb[0].mxu0
    %2319 = vmatprep.mubr.f32.mxu0 0.0
    %2320 = vmatmul.mubr.f32.gmra.mrb[0].mxu0 %v1809
    %v2321 = vpop.f32.mrb[0].mxu0
    %v2322 = vadd.f32 %v2177, %v2321
    %v2323 = vpop.f32.mrb[0].mxu0
    %2324 = vdwg.mxu0
    %s2325 = scalar_lea.vmem %s3, 640
    %v2326 = vld [vmem:[%s2325] sm:$0xff]
    %v2327 = vld [vmem:[%s2325 + $0x8] sm:$0xff]
    %v2328 = vld [vmem:[%s2325 + $0x10] sm:$0xff]
    %v2329 = vld [vmem:[%s2325 + $0x18] sm:$0xff]
    %v2330 = vld [vmem:[%s2325 + $0x20] sm:$0xff]
    %v2331 = vld [vmem:[%s2325 + $0x28] sm:$0xff]
    %v2332 = vld [vmem:[%s2325 + $0x30] sm:$0xff]
    %v2333 = vld [vmem:[%s2325 + $0x38] sm:$0xff]
    %v2334 = vld [vmem:[%s2325 + $0x40] sm:$0xff]
    %v2335 = vld [vmem:[%s2325 + $0x48] sm:$0xff]
    %v2336 = vld [vmem:[%s2325 + $0x50] sm:$0xff]
    %v2337 = vld [vmem:[%s2325 + $0x58] sm:$0xff]
    %v2338 = vld [vmem:[%s2325 + $0x60] sm:$0xff]
    %v2339 = vld [vmem:[%s2325 + $0x68] sm:$0xff]
    %v2340 = vld [vmem:[%s2325 + $0x70] sm:$0xff]
    %v2341 = vld [vmem:[%s2325 + $0x78] sm:$0xff]
    %v2342 = vld [vmem:[%s2325 + $0x80] sm:$0xff]
    %v2343 = vld [vmem:[%s2325 + $0x88] sm:$0xff]
    %v2344 = vld [vmem:[%s2325 + $0x90] sm:$0xff]
    %v2345 = vld [vmem:[%s2325 + $0x98] sm:$0xff]
    %v2346 = vld [vmem:[%s2325 + $0xa0] sm:$0xff]
    %v2347 = vld [vmem:[%s2325 + $0xa8] sm:$0xff]
    %v2348 = vld [vmem:[%s2325 + $0xb0] sm:$0xff]
    %v2349 = vld [vmem:[%s2325 + $0xb8] sm:$0xff]
    %v2350 = vld [vmem:[%s2325 + $0xc0] sm:$0xff]
    %v2351 = vld [vmem:[%s2325 + $0xc8] sm:$0xff]
    %v2352 = vld [vmem:[%s2325 + $0xd0] sm:$0xff]
    %v2353 = vld [vmem:[%s2325 + $0xd8] sm:$0xff]
    %v2354 = vld [vmem:[%s2325 + $0xe0] sm:$0xff]
    %v2355 = vld [vmem:[%s2325 + $0xe8] sm:$0xff]
    %v2356 = vld [vmem:[%s2325 + $0xf0] sm:$0xff]
    %v2357 = vld [vmem:[%s2325 + $0xf8] sm:$0xff]
    %v2358 = vld [vmem:[%s2325 + $0x100] sm:$0xff]
    %v2359 = vld [vmem:[%s2325 + $0x108] sm:$0xff]
    %v2360 = vld [vmem:[%s2325 + $0x110] sm:$0xff]
    %v2361 = vld [vmem:[%s2325 + $0x118] sm:$0xff]
    %v2362 = vld [vmem:[%s2325 + $0x120] sm:$0xff]
    %v2363 = vld [vmem:[%s2325 + $0x128] sm:$0xff]
    %v2364 = vld [vmem:[%s2325 + $0x130] sm:$0xff]
    %v2365 = vld [vmem:[%s2325 + $0x138] sm:$0xff]
    %v2366 = vld [vmem:[%s2325 + $0x140] sm:$0xff]
    %v2367 = vld [vmem:[%s2325 + $0x148] sm:$0xff]
    %v2368 = vld [vmem:[%s2325 + $0x150] sm:$0xff]
    %v2369 = vld [vmem:[%s2325 + $0x158] sm:$0xff]
    %v2370 = vld [vmem:[%s2325 + $0x160] sm:$0xff]
    %v2371 = vld [vmem:[%s2325 + $0x168] sm:$0xff]
    %v2372 = vld [vmem:[%s2325 + $0x170] sm:$0xff]
    %v2373 = vld [vmem:[%s2325 + $0x178] sm:$0xff]
    %v2374 = vld [vmem:[%s2325 + $0x180] sm:$0xff]
    %v2375 = vld [vmem:[%s2325 + $0x188] sm:$0xff]
    %v2376 = vld [vmem:[%s2325 + $0x190] sm:$0xff]
    %v2377 = vld [vmem:[%s2325 + $0x198] sm:$0xff]
    %v2378 = vld [vmem:[%s2325 + $0x1a0] sm:$0xff]
    %v2379 = vld [vmem:[%s2325 + $0x1a8] sm:$0xff]
    %v2380 = vld [vmem:[%s2325 + $0x1b0] sm:$0xff]
    %v2381 = vld [vmem:[%s2325 + $0x1b8] sm:$0xff]
    %v2382 = vld [vmem:[%s2325 + $0x1c0] sm:$0xff]
    %v2383 = vld [vmem:[%s2325 + $0x1c8] sm:$0xff]
    %v2384 = vld [vmem:[%s2325 + $0x1d0] sm:$0xff]
    %v2385 = vld [vmem:[%s2325 + $0x1d8] sm:$0xff]
    %v2386 = vld [vmem:[%s2325 + $0x1e0] sm:$0xff]
    %v2387 = vld [vmem:[%s2325 + $0x1e8] sm:$0xff]
    %v2388 = vld [vmem:[%s2325 + $0x1f0] sm:$0xff]
    %v2389 = vld [vmem:[%s2325 + $0x1f8] sm:$0xff]
    %v2390 = vld [vmem:[%s2325 + $0x200] sm:$0xff]
    %v2391 = vld [vmem:[%s2325 + $0x208] sm:$0xff]
    %v2392 = vld [vmem:[%s2325 + $0x210] sm:$0xff]
    %v2393 = vld [vmem:[%s2325 + $0x218] sm:$0xff]
    %v2394 = vld [vmem:[%s2325 + $0x220] sm:$0xff]
    %v2395 = vld [vmem:[%s2325 + $0x228] sm:$0xff]
    %v2396 = vld [vmem:[%s2325 + $0x230] sm:$0xff]
    %v2397 = vld [vmem:[%s2325 + $0x238] sm:$0xff]
    %v2398 = vld [vmem:[%s2325 + $0x240] sm:$0xff]
    %v2399 = vld [vmem:[%s2325 + $0x248] sm:$0xff]
    %v2400 = vld [vmem:[%s2325 + $0x250] sm:$0xff]
    %v2401 = vld [vmem:[%s2325 + $0x258] sm:$0xff]
    %v2402 = vld [vmem:[%s2325 + $0x260] sm:$0xff]
    %v2403 = vld [vmem:[%s2325 + $0x268] sm:$0xff]
    %v2404 = vld [vmem:[%s2325 + $0x270] sm:$0xff]
    %v2405 = vld [vmem:[%s2325 + $0x278] sm:$0xff]
    %2406 = vmatprep.subr.mxu0 0.0
    %2407 = vmatpush1.msra.mxu0 %v2326
    %2408 = vmatprep.subr.mxu0 0.0
    %2409 = vmatpush1.msra.mxu0 %v2327
    %2410 = vmatprep.subr.mxu0 0.0
    %2411 = vmatpush1.msra.mxu0 %v2328
    %2412 = vmatprep.subr.mxu0 0.0
    %2413 = vmatpush1.msra.mxu0 %v2329
    %2414 = vmatprep.subr.mxu0 0.0
    %2415 = vmatpush1.msra.mxu0 %v2330
    %2416 = vmatprep.subr.mxu0 0.0
    %2417 = vmatpush1.msra.mxu0 %v2331
    %2418 = vmatprep.subr.mxu0 0.0
    %2419 = vmatpush1.msra.mxu0 %v2332
    %2420 = vmatprep.subr.mxu0 0.0
    %2421 = vmatpush1.msra.mxu0 %v2333
    %2422 = vmatprep.subr.mxu0 0.0
    %2423 = vmatpush1.msra.mxu0 %v2334
    %2424 = vmatprep.subr.mxu0 0.0
    %2425 = vmatpush1.msra.mxu0 %v2335
    %2426 = vmatprep.subr.mxu0 0.0
    %2427 = vmatpush1.msra.mxu0 %v2336
    %2428 = vmatprep.subr.mxu0 0.0
    %2429 = vmatpush1.msra.mxu0 %v2337
    %2430 = vmatprep.subr.mxu0 0.0
    %2431 = vmatpush1.msra.mxu0 %v2338
    %2432 = vmatprep.subr.mxu0 0.0
    %2433 = vmatpush1.msra.mxu0 %v2339
    %2434 = vmatprep.subr.mxu0 0.0
    %2435 = vmatpush1.msra.mxu0 %v2340
    %2436 = vmatprep.subr.mxu0 0.0
    %2437 = vmatpush1.msra.mxu0 %v2341
    %2438 = vmatprep.subr.mxu0 0.0
    %2439 = vmatpush1.msra.mxu0 %v2342
    %2440 = vmatprep.subr.mxu0 0.0
    %2441 = vmatpush1.msra.mxu0 %v2343
    %2442 = vmatprep.subr.mxu0 0.0
    %2443 = vmatpush1.msra.mxu0 %v2344
    %2444 = vmatprep.subr.mxu0 0.0
    %2445 = vmatpush1.msra.mxu0 %v2345
    %2446 = vmatprep.subr.mxu0 0.0
    %2447 = vmatpush1.msra.mxu0 %v2346
    %2448 = vmatprep.subr.mxu0 0.0
    %2449 = vmatpush1.msra.mxu0 %v2347
    %2450 = vmatprep.subr.mxu0 0.0
    %2451 = vmatpush1.msra.mxu0 %v2348
    %2452 = vmatprep.subr.mxu0 0.0
    %2453 = vmatpush1.msra.mxu0 %v2349
    %2454 = vmatprep.subr.mxu0 0.0
    %2455 = vmatpush1.msra.mxu0 %v2350
    %2456 = vmatprep.subr.mxu0 0.0
    %2457 = vmatpush1.msra.mxu0 %v2351
    %2458 = vmatprep.subr.mxu0 0.0
    %2459 = vmatpush1.msra.mxu0 %v2352
    %2460 = vmatprep.subr.mxu0 0.0
    %2461 = vmatpush1.msra.mxu0 %v2353
    %2462 = vmatprep.subr.mxu0 0.0
    %2463 = vmatpush1.msra.mxu0 %v2354
    %2464 = vmatprep.subr.mxu0 0.0
    %2465 = vmatpush1.msra.mxu0 %v2355
    %2466 = vmatprep.subr.mxu0 0.0
    %2467 = vmatpush1.msra.mxu0 %v2356
    %2468 = vmatprep.subr.mxu0 0.0
    %2469 = vmatpush1.msra.mxu0 %v2357
    %2470 = vmatprep.mubr.f32.mxu0 %v1798
    %2471 = vmatmul.mubr.f32.gmra.mrb[0].mxu0 %v1762
    %v2472 = vpop.f32.mrb[0].mxu0
    %v2473 = vadd.f32 0.0, %v2472
    %v2474 = vpop.f32.mrb[0].mxu0
    %2475 = vmatprep.mubr.f32.mxu0 %v1799
    %2476 = vmatmul.mubr.f32.gmra.mrb[0].mxu0 %v1763
    %v2477 = vpop.f32.mrb[0].mxu0
    %v2478 = vadd.f32 0.0, %v2477
    %v2479 = vpop.f32.mrb[0].mxu0
    %2480 = vmatprep.mubr.f32.mxu0 %v1800
    %2481 = vmatmul.mubr.f32.gmra.mrb[0].mxu0 %v1764
    %v2482 = vpop.f32.mrb[0].mxu0
    %v2483 = vadd.f32 0.0, %v2482
    %v2484 = vpop.f32.mrb[0].mxu0
    %2485 = vmatprep.mubr.f32.mxu0 %v1801
    %2486 = vmatmul.mubr.f32.gmra.mrb[0].mxu0 %v1765
    %v2487 = vpop.f32.mrb[0].mxu0
    %v2488 = vadd.f32 0.0, %v2487
    %v2489 = vpop.f32.mrb[0].mxu0
    %2490 = vmatprep.mubr.f32.mxu0 %v1802
    %2491 = vmatmul.mubr.f32.gmra.mrb[0].mxu0 %v1766
    %v2492 = vpop.f32.mrb[0].mxu0
    %v2493 = vadd.f32 0.0, %v2492
    %v2494 = vpop.f32.mrb[0].mxu0
    %2495 = vmatprep.mubr.f32.mxu0 %v1803
    %2496 = vmatmul.mubr.f32.gmra.mrb[0].mxu0 %v1767
    %v2497 = vpop.f32.mrb[0].mxu0
    %v2498 = vadd.f32 0.0, %v2497
    %v2499 = vpop.f32.mrb[0].mxu0
    %2500 = vmatprep.mubr.f32.mxu0 %v1804
    %2501 = vmatmul.mubr.f32.gmra.mrb[0].mxu0 %v1768
    %v2502 = vpop.f32.mrb[0].mxu0
    %v2503 = vadd.f32 0.0, %v2502
    %v2504 = vpop.f32.mrb[0].mxu0
    %2505 = vmatprep.mubr.f32.mxu0 %v1805
    %2506 = vmatmul.mubr.f32.gmra.mrb[0].mxu0 %v1769
    %v2507 = vpop.f32.mrb[0].mxu0
    %v2508 = vadd.f32 0.0, %v2507
    %v2509 = vpop.f32.mrb[0].mxu0
    %2510 = vmatprep.mubr.f32.mxu0 %v1764
    %2511 = vmatmul.mubr.f32.gmra.mrb[0].mxu0 %v1798
    %v2512 = vpop.f32.mrb[0].mxu0
    %v2513 = vadd.f32 0.0, %v2512
    %v2514 = vpop.f32.mrb[0].mxu0
    %2515 = vmatprep.mubr.f32.mxu0 %v1765
    %2516 = vmatmul.mubr.f32.gmra.mrb[0].mxu0 %v1799
    %v2517 = vpop.f32.mrb[0].mxu0
    %v2518 = vadd.f32 0.0, %v2517
    %v2519 = vpop.f32.mrb[0].mxu0
    %2520 = vmatprep.mubr.f32.mxu0 %v1766
    %2521 = vmatmul.mubr.f32.gmra.mrb[0].mxu0 %v1800
    %v2522 = vpop.f32.mrb[0].mxu0
    %v2523 = vadd.f32 0.0, %v2522
    %v2524 = vpop.f32.mrb[0].mxu0
    %2525 = vmatprep.mubr.f32.mxu0 %v1767
    %2526 = vmatmul.mubr.f32.gmra.mrb[0].mxu0 %v1801
    %v2527 = vpop.f32.mrb[0].mxu0
    %v2528 = vadd.f32 0.0, %v2527
    %v2529 = vpop.f32.mrb[0].mxu0
    %2530 = vmatprep.mubr.f32.mxu0 %v1768
    %2531 = vmatmul.mubr.f32.gmra.mrb[0].mxu0 %v1802
    %v2532 = vpop.f32.mrb[0].mxu0
    %v2533 = vadd.f32 0.0, %v2532
    %v2534 = vpop.f32.mrb[0].mxu0
    %2535 = vmatprep.mubr.f32.mxu0 %v1769
    %2536 = vmatmul.mubr.f32.gmra.mrb[0].mxu0 %v1803
    %v2537 = vpop.f32.mrb[0].mxu0
    %v2538 = vadd.f32 0.0, %v2537
    %v2539 = vpop.f32.mrb[0].mxu0
    %2540 = vmatprep.mubr.f32.mxu0 %v1770
    %2541 = vmatmul.mubr.f32.gmra.mrb[0].mxu0 %v1804
    %v2542 = vpop.f32.mrb[0].mxu0
    %v2543 = vadd.f32 0.0, %v2542
    %v2544 = vpop.f32.mrb[0].mxu0
    %2545 = vmatprep.mubr.f32.mxu0 %v1771
    %2546 = vmatmul.mubr.f32.gmra.mrb[0].mxu0 %v1805
    %v2547 = vpop.f32.mrb[0].mxu0
    %v2548 = vadd.f32 0.0, %v2547
    %v2549 = vpop.f32.mrb[0].mxu0
    %2550 = vdwg.mxu0
    %2551 = vmatprep.subr.mxu0 0.0
    %2552 = vmatpush1.msra.mxu0 %v2358
    %2553 = vmatprep.subr.mxu0 0.0
    %2554 = vmatpush1.msra.mxu0 %v2359
    %2555 = vmatprep.subr.mxu0 0.0
    %2556 = vmatpush1.msra.mxu0 %v2360
    %2557 = vmatprep.subr.mxu0 0.0
    %2558 = vmatpush1.msra.mxu0 %v2361
    %2559 = vmatprep.subr.mxu0 0.0
    %2560 = vmatpush1.msra.mxu0 %v2362
    %2561 = vmatprep.subr.mxu0 0.0
    %2562 = vmatpush1.msra.mxu0 %v2363
    %2563 = vmatprep.subr.mxu0 0.0
    %2564 = vmatpush1.msra.mxu0 %v2364
    %2565 = vmatprep.subr.mxu0 0.0
    %2566 = vmatpush1.msra.mxu0 %v2365
    %2567 = vmatprep.subr.mxu0 0.0
    %2568 = vmatpush1.msra.mxu0 %v2366
    %2569 = vmatprep.subr.mxu0 0.0
    %2570 = vmatpush1.msra.mxu0 %v2367
    %2571 = vmatprep.subr.mxu0 0.0
    %2572 = vmatpush1.msra.mxu0 %v2368
    %2573 = vmatprep.subr.mxu0 0.0
    %2574 = vmatpush1.msra.mxu0 %v2369
    %2575 = vmatprep.subr.mxu0 0.0
    %2576 = vmatpush1.msra.mxu0 %v2370
    %2577 = vmatprep.subr.mxu0 0.0
    %2578 = vmatpush1.msra.mxu0 %v2371
    %2579 = vmatprep.subr.mxu0 0.0
    %2580 = vmatpush1.msra.mxu0 %v2372
    %2581 = vmatprep.subr.mxu0 0.0
    %2582 = vmatpush1.msra.mxu0 %v2373
    %2583 = vmatprep.subr.mxu0 0.0
    %2584 = vmatpush1.msra.mxu0 %v2374
    %2585 = vmatprep.subr.mxu0 0.0
    %2586 = vmatpush1.msra.mxu0 %v2375
    %2587 = vmatprep.subr.mxu0 0.0
    %2588 = vmatpush1.msra.mxu0 %v2376
    %2589 = vmatprep.subr.mxu0 0.0
    %2590 = vmatpush1.msra.mxu0 %v2377
    %2591 = vmatprep.subr.mxu0 0.0
    %2592 = vmatpush1.msra.mxu0 %v2378
    %2593 = vmatprep.subr.mxu0 0.0
    %2594 = vmatpush1.msra.mxu0 %v2379
    %2595 = vmatprep.subr.mxu0 0.0
    %2596 = vmatpush1.msra.mxu0 %v2380
    %2597 = vmatprep.subr.mxu0 0.0
    %2598 = vmatpush1.msra.mxu0 %v2381
    %2599 = vmatprep.subr.mxu0 0.0
    %2600 = vmatpush1.msra.mxu0 %v2382
    %2601 = vmatprep.subr.mxu0 0.0
    %2602 = vmatpush1.msra.mxu0 %v2383
    %2603 = vmatprep.subr.mxu0 0.0
    %2604 = vmatpush1.msra.mxu0 %v2384
    %2605 = vmatprep.subr.mxu0 0.0
    %2606 = vmatpush1.msra.mxu0 %v2385
    %2607 = vmatprep.subr.mxu0 0.0
    %2608 = vmatpush1.msra.mxu0 %v2386
    %2609 = vmatprep.subr.mxu0 0.0
    %2610 = vmatpush1.msra.mxu0 %v2387
    %2611 = vmatprep.subr.mxu0 0.0
    %2612 = vmatpush1.msra.mxu0 %v2388
    %2613 = vmatprep.subr.mxu0 0.0
    %2614 = vmatpush1.msra.mxu0 %v2389
    %2615 = vmatprep.mubr.f32.mxu0 %v1800
    %2616 = vmatmul.mubr.f32.gmra.mrb[0].mxu0 %v1764
    %v2617 = vpop.f32.mrb[0].mxu0
    %v2618 = vadd.f32 %v2473, %v2617
    %v2619 = vpop.f32.mrb[0].mxu0
    %2620 = vmatprep.mubr.f32.mxu0 %v1801
    %2621 = vmatmul.mubr.f32.gmra.mrb[0].mxu0 %v1765
    %v2622 = vpop.f32.mrb[0].mxu0
    %v2623 = vadd.f32 %v2478, %v2622
    %v2624 = vpop.f32.mrb[0].mxu0
    %2625 = vmatprep.mubr.f32.mxu0 %v1802
    %2626 = vmatmul.mubr.f32.gmra.mrb[0].mxu0 %v1766
    %v2627 = vpop.f32.mrb[0].mxu0
    %v2628 = vadd.f32 %v2483, %v2627
    %v2629 = vpop.f32.mrb[0].mxu0
    %2630 = vmatprep.mubr.f32.mxu0 %v1803
    %2631 = vmatmul.mubr.f32.gmra.mrb[0].mxu0 %v1767
    %v2632 = vpop.f32.mrb[0].mxu0
    %v2633 = vadd.f32 %v2488, %v2632
    %v2634 = vpop.f32.mrb[0].mxu0
    %2635 = vmatprep.mubr.f32.mxu0 %v1804
    %2636 = vmatmul.mubr.f32.gmra.mrb[0].mxu0 %v1768
    %v2637 = vpop.f32.mrb[0].mxu0
    %v2638 = vadd.f32 %v2493, %v2637
    %v2639 = vpop.f32.mrb[0].mxu0
    %2640 = vmatprep.mubr.f32.mxu0 %v1805
    %2641 = vmatmul.mubr.f32.gmra.mrb[0].mxu0 %v1769
    %v2642 = vpop.f32.mrb[0].mxu0
    %v2643 = vadd.f32 %v2498, %v2642
    %v2644 = vpop.f32.mrb[0].mxu0
    %2645 = vmatprep.mubr.f32.mxu0 %v1806
    %2646 = vmatmul.mubr.f32.gmra.mrb[0].mxu0 %v1770
    %v2647 = vpop.f32.mrb[0].mxu0
    %v2648 = vadd.f32 %v2503, %v2647
    %v2649 = vpop.f32.mrb[0].mxu0
    %2650 = vmatprep.mubr.f32.mxu0 %v1807
    %2651 = vmatmul.mubr.f32.gmra.mrb[0].mxu0 %v1771
    %v2652 = vpop.f32.mrb[0].mxu0
    %v2653 = vadd.f32 %v2508, %v2652
    %v2654 = vpop.f32.mrb[0].mxu0
    %2655 = vmatprep.mubr.f32.mxu0 %v1766
    %2656 = vmatmul.mubr.f32.gmra.mrb[0].mxu0 %v1800
    %v2657 = vpop.f32.mrb[0].mxu0
    %v2658 = vadd.f32 %v2513, %v2657
    %v2659 = vpop.f32.mrb[0].mxu0
    %2660 = vmatprep.mubr.f32.mxu0 %v1767
    %2661 = vmatmul.mubr.f32.gmra.mrb[0].mxu0 %v1801
    %v2662 = vpop.f32.mrb[0].mxu0
    %v2663 = vadd.f32 %v2518, %v2662
    %v2664 = vpop.f32.mrb[0].mxu0
    %2665 = vmatprep.mubr.f32.mxu0 %v1768
    %2666 = vmatmul.mubr.f32.gmra.mrb[0].mxu0 %v1802
    %v2667 = vpop.f32.mrb[0].mxu0
    %v2668 = vadd.f32 %v2523, %v2667
    %v2669 = vpop.f32.mrb[0].mxu0
    %2670 = vmatprep.mubr.f32.mxu0 %v1769
    %2671 = vmatmul.mubr.f32.gmra.mrb[0].mxu0 %v1803
    %v2672 = vpop.f32.mrb[0].mxu0
    %v2673 = vadd.f32 %v2528, %v2672
    %v2674 = vpop.f32.mrb[0].mxu0
    %2675 = vmatprep.mubr.f32.mxu0 %v1770
    %2676 = vmatmul.mubr.f32.gmra.mrb[0].mxu0 %v1804
    %v2677 = vpop.f32.mrb[0].mxu0
    %v2678 = vadd.f32 %v2533, %v2677
    %v2679 = vpop.f32.mrb[0].mxu0
    %2680 = vmatprep.mubr.f32.mxu0 %v1771
    %2681 = vmatmul.mubr.f32.gmra.mrb[0].mxu0 %v1805
    %v2682 = vpop.f32.mrb[0].mxu0
    %v2683 = vadd.f32 %v2538, %v2682
    %v2684 = vpop.f32.mrb[0].mxu0
    %2685 = vmatprep.mubr.f32.mxu0 %v1772
    %2686 = vmatmul.mubr.f32.gmra.mrb[0].mxu0 %v1806
    %v2687 = vpop.f32.mrb[0].mxu0
    %v2688 = vadd.f32 %v2543, %v2687
    %v2689 = vpop.f32.mrb[0].mxu0
    %2690 = vmatprep.mubr.f32.mxu0 %v1773
    %2691 = vmatmul.mubr.f32.gmra.mrb[0].mxu0 %v1807
    %v2692 = vpop.f32.mrb[0].mxu0
    %v2693 = vadd.f32 %v2548, %v2692
    %v2694 = vpop.f32.mrb[0].mxu0
    %2695 = vdwg.mxu0
    %2696 = vmatprep.subr.mxu0 0.0
    %2697 = vmatpush1.msra.mxu0 %v2390
    %2698 = vmatprep.subr.mxu0 0.0
    %2699 = vmatpush1.msra.mxu0 %v2391
    %2700 = vmatprep.subr.mxu0 0.0
    %2701 = vmatpush1.msra.mxu0 %v2392
    %2702 = vmatprep.subr.mxu0 0.0
    %2703 = vmatpush1.msra.mxu0 %v2393
    %2704 = vmatprep.subr.mxu0 0.0
    %2705 = vmatpush1.msra.mxu0 %v2394
    %2706 = vmatprep.subr.mxu0 0.0
    %2707 = vmatpush1.msra.mxu0 %v2395
    %2708 = vmatprep.subr.mxu0 0.0
    %2709 = vmatpush1.msra.mxu0 %v2396
    %2710 = vmatprep.subr.mxu0 0.0
    %2711 = vmatpush1.msra.mxu0 %v2397
    %2712 = vmatprep.subr.mxu0 0.0
    %2713 = vmatpush1.msra.mxu0 %v2398
    %2714 = vmatprep.subr.mxu0 0.0
    %2715 = vmatpush1.msra.mxu0 %v2399
    %2716 = vmatprep.subr.mxu0 0.0
    %2717 = vmatpush1.msra.mxu0 %v2400
    %2718 = vmatprep.subr.mxu0 0.0
    %2719 = vmatpush1.msra.mxu0 %v2401
    %2720 = vmatprep.subr.mxu0 0.0
    %2721 = vmatpush1.msra.mxu0 %v2402
    %2722 = vmatprep.subr.mxu0 0.0
    %2723 = vmatpush1.msra.mxu0 %v2403
    %2724 = vmatprep.subr.mxu0 0.0
    %2725 = vmatpush1.msra.mxu0 %v2404
    %2726 = vmatprep.subr.mxu0 0.0
    %2727 = vmatpush1.msra.mxu0 %v2405
    %2728 = vmatprep.subr.mxu0 0.0
    %2729 = vmatpush1.msra.mxu0 0.0
    %2730 = vmatprep.subr.mxu0 0.0
    %2731 = vmatpush1.msra.mxu0 0.0
    %2732 = vmatprep.subr.mxu0 0.0
    %2733 = vmatpush1.msra.mxu0 0.0
    %2734 = vmatprep.subr.mxu0 0.0
    %2735 = vmatpush1.msra.mxu0 0.0
    %2736 = vmatprep.subr.mxu0 0.0
    %2737 = vmatpush1.msra.mxu0 0.0
    %2738 = vmatprep.subr.mxu0 0.0
    %2739 = vmatpush1.msra.mxu0 0.0
    %2740 = vmatprep.subr.mxu0 0.0
    %2741 = vmatpush1.msra.mxu0 0.0
    %2742 = vmatprep.subr.mxu0 0.0
    %2743 = vmatpush1.msra.mxu0 0.0
    %2744 = vmatprep.subr.mxu0 0.0
    %2745 = vmatpush1.msra.mxu0 0.0
    %2746 = vmatprep.subr.mxu0 0.0
    %2747 = vmatpush1.msra.mxu0 0.0
    %2748 = vmatprep.subr.mxu0 0.0
    %2749 = vmatpush1.msra.mxu0 0.0
    %2750 = vmatprep.subr.mxu0 0.0
    %2751 = vmatpush1.msra.mxu0 0.0
    %2752 = vmatprep.subr.mxu0 0.0
    %2753 = vmatpush1.msra.mxu0 0.0
    %2754 = vmatprep.subr.mxu0 0.0
    %2755 = vmatpush1.msra.mxu0 0.0
    %2756 = vmatprep.subr.mxu0 0.0
    %2757 = vmatpush1.msra.mxu0 0.0
    %2758 = vmatprep.subr.mxu0 0.0
    %2759 = vmatpush1.msra.mxu0 0.0
    %2760 = vmatprep.mubr.f32.mxu0 0.0
    %2761 = vmatmul.mubr.f32.gmra.mrb[0].mxu0 %v1766
    %v2762 = vpop.f32.mrb[0].mxu0
    %v2763 = vadd.f32 %v2618, %v2762
    %v2764 = vpop.f32.mrb[0].mxu0
    %2765 = vmatprep.mubr.f32.mxu0 0.0
    %2766 = vmatmul.mubr.f32.gmra.mrb[0].mxu0 %v1767
    %v2767 = vpop.f32.mrb[0].mxu0
    %v2768 = vadd.f32 %v2623, %v2767
    %v2769 = vpop.f32.mrb[0].mxu0
    %2770 = vmatprep.mubr.f32.mxu0 0.0
    %2771 = vmatmul.mubr.f32.gmra.mrb[0].mxu0 %v1768
    %v2772 = vpop.f32.mrb[0].mxu0
    %v2773 = vadd.f32 %v2628, %v2772
    %v2774 = vpop.f32.mrb[0].mxu0
    %2775 = vmatprep.mubr.f32.mxu0 0.0
    %2776 = vmatmul.mubr.f32.gmra.mrb[0].mxu0 %v1769
    %v2777 = vpop.f32.mrb[0].mxu0
    %v2778 = vadd.f32 %v2633, %v2777
    %v2779 = vpop.f32.mrb[0].mxu0
    %2780 = vmatprep.mubr.f32.mxu0 0.0
    %2781 = vmatmul.mubr.f32.gmra.mrb[0].mxu0 %v1770
    %v2782 = vpop.f32.mrb[0].mxu0
    %v2783 = vadd.f32 %v2638, %v2782
    %v2784 = vpop.f32.mrb[0].mxu0
    %2785 = vmatprep.mubr.f32.mxu0 0.0
    %2786 = vmatmul.mubr.f32.gmra.mrb[0].mxu0 %v1771
    %v2787 = vpop.f32.mrb[0].mxu0
    %v2788 = vadd.f32 %v2643, %v2787
    %v2789 = vpop.f32.mrb[0].mxu0
    %2790 = vmatprep.mubr.f32.mxu0 0.0
    %2791 = vmatmul.mubr.f32.gmra.mrb[0].mxu0 %v1772
    %v2792 = vpop.f32.mrb[0].mxu0
    %v2793 = vadd.f32 %v2648, %v2792
    %v2794 = vpop.f32.mrb[0].mxu0
    %2795 = vmatprep.mubr.f32.mxu0 0.0
    %2796 = vmatmul.mubr.f32.gmra.mrb[0].mxu0 %v1773
    %v2797 = vpop.f32.mrb[0].mxu0
    %v2798 = vadd.f32 %v2653, %v2797
    %v2799 = vpop.f32.mrb[0].mxu0
    %2800 = vmatprep.mubr.f32.mxu0 0.0
    %2801 = vmatmul.mubr.f32.gmra.mrb[0].mxu0 %v1802
    %v2802 = vpop.f32.mrb[0].mxu0
    %v2803 = vadd.f32 %v2658, %v2802
    %v2804 = vpop.f32.mrb[0].mxu0
    %2805 = vmatprep.mubr.f32.mxu0 0.0
    %2806 = vmatmul.mubr.f32.gmra.mrb[0].mxu0 %v1803
    %v2807 = vpop.f32.mrb[0].mxu0
    %v2808 = vadd.f32 %v2663, %v2807
    %v2809 = vpop.f32.mrb[0].mxu0
    %2810 = vmatprep.mubr.f32.mxu0 0.0
    %2811 = vmatmul.mubr.f32.gmra.mrb[0].mxu0 %v1804
    %v2812 = vpop.f32.mrb[0].mxu0
    %v2813 = vadd.f32 %v2668, %v2812
    %v2814 = vpop.f32.mrb[0].mxu0
    %2815 = vmatprep.mubr.f32.mxu0 0.0
    %2816 = vmatmul.mubr.f32.gmra.mrb[0].mxu0 %v1805
    %v2817 = vpop.f32.mrb[0].mxu0
    %v2818 = vadd.f32 %v2673, %v2817
    %v2819 = vpop.f32.mrb[0].mxu0
    %2820 = vmatprep.mubr.f32.mxu0 0.0
    %2821 = vmatmul.mubr.f32.gmra.mrb[0].mxu0 %v1806
    %v2822 = vpop.f32.mrb[0].mxu0
    %v2823 = vadd.f32 %v2678, %v2822
    %v2824 = vpop.f32.mrb[0].mxu0
    %2825 = vmatprep.mubr.f32.mxu0 0.0
    %2826 = vmatmul.mubr.f32.gmra.mrb[0].mxu0 %v1807
    %v2827 = vpop.f32.mrb[0].mxu0
    %v2828 = vadd.f32 %v2683, %v2827
    %v2829 = vpop.f32.mrb[0].mxu0
    %2830 = vmatprep.mubr.f32.mxu0 0.0
    %2831 = vmatmul.mubr.f32.gmra.mrb[0].mxu0 %v1808
    %v2832 = vpop.f32.mrb[0].mxu0
    %v2833 = vadd.f32 %v2688, %v2832
    %v2834 = vpop.f32.mrb[0].mxu0
    %2835 = vmatprep.mubr.f32.mxu0 0.0
    %2836 = vmatmul.mubr.f32.gmra.mrb[0].mxu0 %v1809
    %v2837 = vpop.f32.mrb[0].mxu0
    %v2838 = vadd.f32 %v2693, %v2837
    %v2839 = vpop.f32.mrb[0].mxu0
    %2840 = vdwg.mxu0
    %v2841 = vmax.f32 %v2247, %v2763
    %v2842 = vmax.f32 %v2252, %v2768
    %v2843 = vmax.f32 %v2257, %v2773
    %v2844 = vmax.f32 %v2262, %v2778
    %v2845 = vmax.f32 %v2267, %v2783
    %v2846 = vmax.f32 %v2272, %v2788
    %v2847 = vmax.f32 %v2277, %v2793
    %v2848 = vmax.f32 %v2282, %v2798
    %v2849 = vmax.f32 %v2287, %v2803
    %v2850 = vmax.f32 %v2292, %v2808
    %v2851 = vmax.f32 %v2297, %v2813
    %v2852 = vmax.f32 %v2302, %v2818
    %v2853 = vmax.f32 %v2307, %v2823
    %v2854 = vmax.f32 %v2312, %v2828
    %v2855 = vmax.f32 %v2317, %v2833
    %v2856 = vmax.f32 %v2322, %v2838
    %v2857 = vmax.f32 %v2841, %v2849
    %v2858 = vmax.f32 %v2842, %v2850
    %v2859 = vmax.f32 %v2843, %v2851
    %v2860 = vmax.f32 %v2844, %v2852
    %v2861 = vmax.f32 %v2845, %v2853
    %v2862 = vmax.f32 %v2846, %v2854
    %v2863 = vmax.f32 %v2847, %v2855
    %v2864 = vmax.f32 %v2848, %v2856
    %v2866 = vlaneseq
    %v2867 = vshrl.u32 %v2866, 7
    %v2868 = vsub.s32 0, %v2867
    %v2869 = vrot.slane %v48, %v2868
    %v2871 = vadd.f32 %v2857, %v2869
    %v2872 = vadd.f32 %v2858, %v2869
    %v2873 = vadd.f32 %v2859, %v2869
    %v2874 = vadd.f32 %v2860, %v2869
    %v2875 = vadd.f32 %v2861, %v2869
    %v2876 = vadd.f32 %v2862, %v2869
    %v2877 = vadd.f32 %v2863, %v2869
    %v2878 = vadd.f32 %v2864, %v2869
    %v2879 = vmax.f32 %v2871, 0.0
    %v2880 = vmax.f32 %v2872, 0.0
    %v2881 = vmax.f32 %v2873, 0.0
    %v2882 = vmax.f32 %v2874, 0.0
    %v2883 = vmax.f32 %v2875, 0.0
    %v2884 = vmax.f32 %v2876, 0.0
    %v2885 = vmax.f32 %v2877, 0.0
    %v2886 = vmax.f32 %v2878, 0.0
    %v2887 = vld [vmem:[%s5] sm:$0xff]
    %v2888 = vld [vmem:[%s5 + $0x8] sm:$0xff]
    %v2889 = vld [vmem:[%s5 + $0x10] sm:$0xff]
    %v2890 = vld [vmem:[%s5 + $0x18] sm:$0xff]
    %v2891 = vld [vmem:[%s5 + $0x20] sm:$0xff]
    %v2892 = vld [vmem:[%s5 + $0x28] sm:$0xff]
    %v2893 = vld [vmem:[%s5 + $0x30] sm:$0xff]
    %v2894 = vld [vmem:[%s5 + $0x38] sm:$0xff]
    %v2895 = vld [vmem:[%s5 + $0x40] sm:$0xff]
    %v2896 = vld [vmem:[%s5 + $0x48] sm:$0xff]
    %v2897 = vld [vmem:[%s5 + $0x50] sm:$0xff]
    %v2898 = vld [vmem:[%s5 + $0x58] sm:$0xff]
    %v2899 = vld [vmem:[%s5 + $0x60] sm:$0xff]
    %v2900 = vld [vmem:[%s5 + $0x68] sm:$0xff]
    %v2901 = vld [vmem:[%s5 + $0x70] sm:$0xff]
    %v2902 = vld [vmem:[%s5 + $0x78] sm:$0xff]
    %v2903 = vld [vmem:[%s5 + $0x80] sm:$0xff]
    %v2904 = vld [vmem:[%s5 + $0x88] sm:$0xff]
    %v2905 = vld [vmem:[%s5 + $0x90] sm:$0xff]
    %v2906 = vld [vmem:[%s5 + $0x98] sm:$0xff]
    %v2907 = vld [vmem:[%s5 + $0xa0] sm:$0xff]
    %v2908 = vld [vmem:[%s5 + $0xa8] sm:$0xff]
    %v2909 = vld [vmem:[%s5 + $0xb0] sm:$0xff]
    %v2910 = vld [vmem:[%s5 + $0xb8] sm:$0xff]
    %v2911 = vld [vmem:[%s5 + $0xc0] sm:$0xff]
    %v2912 = vld [vmem:[%s5 + $0xc8] sm:$0xff]
    %v2913 = vld [vmem:[%s5 + $0xd0] sm:$0xff]
    %v2914 = vld [vmem:[%s5 + $0xd8] sm:$0xff]
    %v2915 = vld [vmem:[%s5 + $0xe0] sm:$0xff]
    %v2916 = vld [vmem:[%s5 + $0xe8] sm:$0xff]
    %v2917 = vld [vmem:[%s5 + $0xf0] sm:$0xff]
    %v2918 = vld [vmem:[%s5 + $0xf8] sm:$0xff]
    %v2919 = vld [vmem:[%s5 + $0x100] sm:$0xff]
    %v2920 = vld [vmem:[%s5 + $0x108] sm:$0xff]
    %v2921 = vld [vmem:[%s5 + $0x110] sm:$0xff]
    %v2922 = vld [vmem:[%s5 + $0x118] sm:$0xff]
    %v2923 = vld [vmem:[%s5 + $0x120] sm:$0xff]
    %v2924 = vld [vmem:[%s5 + $0x128] sm:$0xff]
    %v2925 = vld [vmem:[%s5 + $0x130] sm:$0xff]
    %v2926 = vld [vmem:[%s5 + $0x138] sm:$0xff]
    %v2927 = vld [vmem:[%s5 + $0x140] sm:$0xff]
    %v2928 = vld [vmem:[%s5 + $0x148] sm:$0xff]
    %v2929 = vld [vmem:[%s5 + $0x150] sm:$0xff]
    %v2930 = vld [vmem:[%s5 + $0x158] sm:$0xff]
    %v2931 = vld [vmem:[%s5 + $0x160] sm:$0xff]
    %v2932 = vld [vmem:[%s5 + $0x168] sm:$0xff]
    %v2933 = vld [vmem:[%s5 + $0x170] sm:$0xff]
    %v2934 = vld [vmem:[%s5 + $0x178] sm:$0xff]
    %v2935 = vld [vmem:[%s5 + $0x180] sm:$0xff]
    %v2936 = vld [vmem:[%s5 + $0x188] sm:$0xff]
    %v2937 = vld [vmem:[%s5 + $0x190] sm:$0xff]
    %v2938 = vld [vmem:[%s5 + $0x198] sm:$0xff]
    %v2939 = vld [vmem:[%s5 + $0x1a0] sm:$0xff]
    %v2940 = vld [vmem:[%s5 + $0x1a8] sm:$0xff]
    %v2941 = vld [vmem:[%s5 + $0x1b0] sm:$0xff]
    %v2942 = vld [vmem:[%s5 + $0x1b8] sm:$0xff]
    %v2943 = vld [vmem:[%s5 + $0x1c0] sm:$0xff]
    %v2944 = vld [vmem:[%s5 + $0x1c8] sm:$0xff]
    %v2945 = vld [vmem:[%s5 + $0x1d0] sm:$0xff]
    %v2946 = vld [vmem:[%s5 + $0x1d8] sm:$0xff]
    %v2947 = vld [vmem:[%s5 + $0x1e0] sm:$0xff]
    %v2948 = vld [vmem:[%s5 + $0x1e8] sm:$0xff]
    %v2949 = vld [vmem:[%s5 + $0x1f0] sm:$0xff]
    %v2950 = vld [vmem:[%s5 + $0x1f8] sm:$0xff]
    %v2951 = vld [vmem:[%s5 + $0x200] sm:$0xff]
    %v2952 = vld [vmem:[%s5 + $0x208] sm:$0xff]
    %v2953 = vld [vmem:[%s5 + $0x210] sm:$0xff]
    %v2954 = vld [vmem:[%s5 + $0x218] sm:$0xff]
    %v2955 = vld [vmem:[%s5 + $0x220] sm:$0xff]
    %v2956 = vld [vmem:[%s5 + $0x228] sm:$0xff]
    %v2957 = vld [vmem:[%s5 + $0x230] sm:$0xff]
    %v2958 = vld [vmem:[%s5 + $0x238] sm:$0xff]
    %v2959 = vld [vmem:[%s5 + $0x240] sm:$0xff]
    %v2960 = vld [vmem:[%s5 + $0x248] sm:$0xff]
    %v2961 = vld [vmem:[%s5 + $0x250] sm:$0xff]
    %v2962 = vld [vmem:[%s5 + $0x258] sm:$0xff]
    %v2963 = vld [vmem:[%s5 + $0x260] sm:$0xff]
    %v2964 = vld [vmem:[%s5 + $0x268] sm:$0xff]
    %v2965 = vld [vmem:[%s5 + $0x270] sm:$0xff]
    %v2966 = vld [vmem:[%s5 + $0x278] sm:$0xff]
    %v2967 = vld [vmem:[%s5 + $0x280] sm:$0xff]
    %v2968 = vld [vmem:[%s5 + $0x288] sm:$0xff]
    %v2969 = vld [vmem:[%s5 + $0x290] sm:$0xff]
    %v2970 = vld [vmem:[%s5 + $0x298] sm:$0xff]
    %v2971 = vld [vmem:[%s5 + $0x2a0] sm:$0xff]
    %v2972 = vld [vmem:[%s5 + $0x2a8] sm:$0xff]
    %v2973 = vld [vmem:[%s5 + $0x2b0] sm:$0xff]
    %v2974 = vld [vmem:[%s5 + $0x2b8] sm:$0xff]
    %v2975 = vld [vmem:[%s5 + $0x2c0] sm:$0xff]
    %v2976 = vld [vmem:[%s5 + $0x2c8] sm:$0xff]
    %v2977 = vld [vmem:[%s5 + $0x2d0] sm:$0xff]
    %v2978 = vld [vmem:[%s5 + $0x2d8] sm:$0xff]
    %v2979 = vld [vmem:[%s5 + $0x2e0] sm:$0xff]
    %v2980 = vld [vmem:[%s5 + $0x2e8] sm:$0xff]
    %v2981 = vld [vmem:[%s5 + $0x2f0] sm:$0xff]
    %v2982 = vld [vmem:[%s5 + $0x2f8] sm:$0xff]
    %v2983 = vld [vmem:[%s5 + $0x300] sm:$0xff]
    %v2984 = vld [vmem:[%s5 + $0x308] sm:$0xff]
    %v2985 = vld [vmem:[%s5 + $0x310] sm:$0xff]
    %v2986 = vld [vmem:[%s5 + $0x318] sm:$0xff]
    %v2987 = vld [vmem:[%s5 + $0x320] sm:$0xff]
    %v2988 = vld [vmem:[%s5 + $0x328] sm:$0xff]
    %v2989 = vld [vmem:[%s5 + $0x330] sm:$0xff]
    %v2990 = vld [vmem:[%s5 + $0x338] sm:$0xff]
    %v2991 = vld [vmem:[%s5 + $0x340] sm:$0xff]
    %v2992 = vld [vmem:[%s5 + $0x348] sm:$0xff]
    %v2993 = vld [vmem:[%s5 + $0x350] sm:$0xff]
    %v2994 = vld [vmem:[%s5 + $0x358] sm:$0xff]
    %v2995 = vld [vmem:[%s5 + $0x360] sm:$0xff]
    %v2996 = vld [vmem:[%s5 + $0x368] sm:$0xff]
    %v2997 = vld [vmem:[%s5 + $0x370] sm:$0xff]
    %v2998 = vld [vmem:[%s5 + $0x378] sm:$0xff]
    %v2999 = vld [vmem:[%s5 + $0x380] sm:$0xff]
    %v3000 = vld [vmem:[%s5 + $0x388] sm:$0xff]
    %v3001 = vld [vmem:[%s5 + $0x390] sm:$0xff]
    %v3002 = vld [vmem:[%s5 + $0x398] sm:$0xff]
    %v3003 = vld [vmem:[%s5 + $0x3a0] sm:$0xff]
    %v3004 = vld [vmem:[%s5 + $0x3a8] sm:$0xff]
    %v3005 = vld [vmem:[%s5 + $0x3b0] sm:$0xff]
    %v3006 = vld [vmem:[%s5 + $0x3b8] sm:$0xff]
    %v3007 = vld [vmem:[%s5 + $0x3c0] sm:$0xff]
    %v3008 = vld [vmem:[%s5 + $0x3c8] sm:$0xff]
    %v3009 = vld [vmem:[%s5 + $0x3d0] sm:$0xff]
    %v3010 = vld [vmem:[%s5 + $0x3d8] sm:$0xff]
    %v3011 = vld [vmem:[%s5 + $0x3e0] sm:$0xff]
    %v3012 = vld [vmem:[%s5 + $0x3e8] sm:$0xff]
    %v3013 = vld [vmem:[%s5 + $0x3f0] sm:$0xff]
    %v3014 = vld [vmem:[%s5 + $0x3f8] sm:$0xff]
    %v3016 = vlaneseq
    %v3017 = vshrl.u32 %v3016, 7
    %v3018 = vsub.s32 0, %v3017
    %v3019 = vrot.slane %v49, %v3018
    %v3020 = vlaneseq
    %v3021 = vshrl.u32 %v3020, 7
    %v3022 = vsub.s32 1, %v3021
    %v3023 = vrot.slane %v49, %v3022
    %3026 = vmatprep.subr.mxu0 %v2888
    %3027 = vmatpush1.msra.mxu0 %v2887
    %3028 = vmatprep.subr.mxu0 %v2890
    %3029 = vmatpush1.msra.mxu0 %v2889
    %3030 = vmatprep.subr.mxu0 %v2892
    %3031 = vmatpush1.msra.mxu0 %v2891
    %3032 = vmatprep.subr.mxu0 %v2894
    %3033 = vmatpush1.msra.mxu0 %v2893
    %3034 = vmatprep.subr.mxu0 %v2896
    %3035 = vmatpush1.msra.mxu0 %v2895
    %3036 = vmatprep.subr.mxu0 %v2898
    %3037 = vmatpush1.msra.mxu0 %v2897
    %3038 = vmatprep.subr.mxu0 %v2900
    %3039 = vmatpush1.msra.mxu0 %v2899
    %3040 = vmatprep.subr.mxu0 %v2902
    %3041 = vmatpush1.msra.mxu0 %v2901
    %3042 = vmatprep.subr.mxu0 %v2904
    %3043 = vmatpush1.msra.mxu0 %v2903
    %3044 = vmatprep.subr.mxu0 %v2906
    %3045 = vmatpush1.msra.mxu0 %v2905
    %3046 = vmatprep.subr.mxu0 %v2908
    %3047 = vmatpush1.msra.mxu0 %v2907
    %3048 = vmatprep.subr.mxu0 %v2910
    %3049 = vmatpush1.msra.mxu0 %v2909
    %3050 = vmatprep.subr.mxu0 %v2912
    %3051 = vmatpush1.msra.mxu0 %v2911
    %3052 = vmatprep.subr.mxu0 %v2914
    %3053 = vmatpush1.msra.mxu0 %v2913
    %3054 = vmatprep.subr.mxu0 %v2916
    %3055 = vmatpush1.msra.mxu0 %v2915
    %3056 = vmatprep.subr.mxu0 %v2918
    %3057 = vmatpush1.msra.mxu0 %v2917
    %3058 = vmatprep.subr.mxu0 %v2920
    %3059 = vmatpush1.msra.mxu0 %v2919
    %3060 = vmatprep.subr.mxu0 %v2922
    %3061 = vmatpush1.msra.mxu0 %v2921
    %3062 = vmatprep.subr.mxu0 %v2924
    %3063 = vmatpush1.msra.mxu0 %v2923
    %3064 = vmatprep.subr.mxu0 %v2926
    %3065 = vmatpush1.msra.mxu0 %v2925
    %3066 = vmatprep.subr.mxu0 %v2928
    %3067 = vmatpush1.msra.mxu0 %v2927
    %3068 = vmatprep.subr.mxu0 %v2930
    %3069 = vmatpush1.msra.mxu0 %v2929
    %3070 = vmatprep.subr.mxu0 %v2932
    %3071 = vmatpush1.msra.mxu0 %v2931
    %3072 = vmatprep.subr.mxu0 %v2934
    %3073 = vmatpush1.msra.mxu0 %v2933
    %3074 = vmatprep.subr.mxu0 %v2936
    %3075 = vmatpush1.msra.mxu0 %v2935
    %3076 = vmatprep.subr.mxu0 %v2938
    %3077 = vmatpush1.msra.mxu0 %v2937
    %3078 = vmatprep.subr.mxu0 %v2940
    %3079 = vmatpush1.msra.mxu0 %v2939
    %3080 = vmatprep.subr.mxu0 %v2942
    %3081 = vmatpush1.msra.mxu0 %v2941
    %3082 = vmatprep.subr.mxu0 %v2944
    %3083 = vmatpush1.msra.mxu0 %v2943
    %3084 = vmatprep.subr.mxu0 %v2946
    %3085 = vmatpush1.msra.mxu0 %v2945
    %3086 = vmatprep.subr.mxu0 %v2948
    %3087 = vmatpush1.msra.mxu0 %v2947
    %3088 = vmatprep.subr.mxu0 %v2950
    %3089 = vmatpush1.msra.mxu0 %v2949
    %3090 = vmatprep.mubr.f32.mxu0 %v2881
    %3091 = vmatmul.mubr.f32.gmra.mrb[0].mxu0 %v2879
    %v3092 = vpop.f32.mrb[0].mxu0
    %v3093 = vadd.f32 %v3019, %v3092
    %v3094 = vpop.f32.mrb[0].mxu0
    %v3095 = vadd.f32 %v3023, %v3094
    %3096 = vmatprep.mubr.f32.mxu0 %v2882
    %3097 = vmatmul.mubr.f32.gmra.mrb[0].mxu0 %v2880
    %v3098 = vpop.f32.mrb[0].mxu0
    %v3099 = vadd.f32 %v3019, %v3098
    %v3100 = vpop.f32.mrb[0].mxu0
    %v3101 = vadd.f32 %v3023, %v3100
    %3102 = vdwg.mxu0
    %3103 = vmatprep.subr.mxu0 %v2952
    %3104 = vmatpush1.msra.mxu0 %v2951
    %3105 = vmatprep.subr.mxu0 %v2954
    %3106 = vmatpush1.msra.mxu0 %v2953
    %3107 = vmatprep.subr.mxu0 %v2956
    %3108 = vmatpush1.msra.mxu0 %v2955
    %3109 = vmatprep.subr.mxu0 %v2958
    %3110 = vmatpush1.msra.mxu0 %v2957
    %3111 = vmatprep.subr.mxu0 %v2960
    %3112 = vmatpush1.msra.mxu0 %v2959
    %3113 = vmatprep.subr.mxu0 %v2962
    %3114 = vmatpush1.msra.mxu0 %v2961
    %3115 = vmatprep.subr.mxu0 %v2964
    %3116 = vmatpush1.msra.mxu0 %v2963
    %3117 = vmatprep.subr.mxu0 %v2966
    %3118 = vmatpush1.msra.mxu0 %v2965
    %3119 = vmatprep.subr.mxu0 %v2968
    %3120 = vmatpush1.msra.mxu0 %v2967
    %3121 = vmatprep.subr.mxu0 %v2970
    %3122 = vmatpush1.msra.mxu0 %v2969
    %3123 = vmatprep.subr.mxu0 %v2972
    %3124 = vmatpush1.msra.mxu0 %v2971
    %3125 = vmatprep.subr.mxu0 %v2974
    %3126 = vmatpush1.msra.mxu0 %v2973
    %3127 = vmatprep.subr.mxu0 %v2976
    %3128 = vmatpush1.msra.mxu0 %v2975
    %3129 = vmatprep.subr.mxu0 %v2978
    %3130 = vmatpush1.msra.mxu0 %v2977
    %3131 = vmatprep.subr.mxu0 %v2980
    %3132 = vmatpush1.msra.mxu0 %v2979
    %3133 = vmatprep.subr.mxu0 %v2982
    %3134 = vmatpush1.msra.mxu0 %v2981
    %3135 = vmatprep.subr.mxu0 %v2984
    %3136 = vmatpush1.msra.mxu0 %v2983
    %3137 = vmatprep.subr.mxu0 %v2986
    %3138 = vmatpush1.msra.mxu0 %v2985
    %3139 = vmatprep.subr.mxu0 %v2988
    %3140 = vmatpush1.msra.mxu0 %v2987
    %3141 = vmatprep.subr.mxu0 %v2990
    %3142 = vmatpush1.msra.mxu0 %v2989
    %3143 = vmatprep.subr.mxu0 %v2992
    %3144 = vmatpush1.msra.mxu0 %v2991
    %3145 = vmatprep.subr.mxu0 %v2994
    %3146 = vmatpush1.msra.mxu0 %v2993
    %3147 = vmatprep.subr.mxu0 %v2996
    %3148 = vmatpush1.msra.mxu0 %v2995
    %3149 = vmatprep.subr.mxu0 %v2998
    %3150 = vmatpush1.msra.mxu0 %v2997
    %3151 = vmatprep.subr.mxu0 %v3000
    %3152 = vmatpush1.msra.mxu0 %v2999
    %3153 = vmatprep.subr.mxu0 %v3002
    %3154 = vmatpush1.msra.mxu0 %v3001
    %3155 = vmatprep.subr.mxu0 %v3004
    %3156 = vmatpush1.msra.mxu0 %v3003
    %3157 = vmatprep.subr.mxu0 %v3006
    %3158 = vmatpush1.msra.mxu0 %v3005
    %3159 = vmatprep.subr.mxu0 %v3008
    %3160 = vmatpush1.msra.mxu0 %v3007
    %3161 = vmatprep.subr.mxu0 %v3010
    %3162 = vmatpush1.msra.mxu0 %v3009
    %3163 = vmatprep.subr.mxu0 %v3012
    %3164 = vmatpush1.msra.mxu0 %v3011
    %3165 = vmatprep.subr.mxu0 %v3014
    %3166 = vmatpush1.msra.mxu0 %v3013
    %3167 = vmatprep.mubr.f32.mxu0 %v2885
    %3168 = vmatmul.mubr.f32.gmra.mrb[0].mxu0 %v2883
    %v3169 = vpop.f32.mrb[0].mxu0
    %v3170 = vadd.f32 %v3093, %v3169
    %v3171 = vpop.f32.mrb[0].mxu0
    %v3172 = vadd.f32 %v3095, %v3171
    %3173 = vmatprep.mubr.f32.mxu0 %v2886
    %3174 = vmatmul.mubr.f32.gmra.mrb[0].mxu0 %v2884
    %v3175 = vpop.f32.mrb[0].mxu0
    %v3176 = vadd.f32 %v3099, %v3175
    %v3177 = vpop.f32.mrb[0].mxu0
    %v3178 = vadd.f32 %v3101, %v3177
    %3179 = vdwg.mxu0
    %v3180 = vmax.f32 %v3170, 0.0
    %v3181 = vmax.f32 %v3172, 0.0
    %v3182 = vmax.f32 %v3176, 0.0
    %v3183 = vmax.f32 %v3178, 0.0
    %v3184 = vld [vmem:[#allocation2] sm:$0xff]
    %v3185 = vld [vmem:[#allocation2 + $0x8] sm:$0xff]
    %v3186 = vld [vmem:[#allocation2 + $0x10] sm:$0xff]
    %v3187 = vld [vmem:[#allocation2 + $0x18] sm:$0xff]
    %v3188 = vld [vmem:[#allocation2 + $0x20] sm:$0xff]
    %v3189 = vld [vmem:[#allocation2 + $0x28] sm:$0xff]
    %v3190 = vld [vmem:[#allocation2 + $0x30] sm:$0xff]
    %v3191 = vld [vmem:[#allocation2 + $0x38] sm:$0xff]
    %v3192 = vld [vmem:[#allocation2 + $0x40] sm:$0xff]
    %v3193 = vld [vmem:[#allocation2 + $0x48] sm:$0xff]
    %v3194 = vld [vmem:[#allocation2 + $0x50] sm:$0xff]
    %v3195 = vld [vmem:[#allocation2 + $0x58] sm:$0xff]
    %v3196 = vld [vmem:[#allocation2 + $0x60] sm:$0xff]
    %v3197 = vld [vmem:[#allocation2 + $0x68] sm:$0xff]
    %v3198 = vld [vmem:[#allocation2 + $0x70] sm:$0xff]
    %v3199 = vld [vmem:[#allocation2 + $0x78] sm:$0xff]
    %v3200 = vld [vmem:[#allocation2 + $0x80] sm:$0xff]
    %v3201 = vld [vmem:[#allocation2 + $0x88] sm:$0xff]
    %v3202 = vld [vmem:[#allocation2 + $0x90] sm:$0xff]
    %v3203 = vld [vmem:[#allocation2 + $0x98] sm:$0xff]
    %v3204 = vld [vmem:[#allocation2 + $0xa0] sm:$0xff]
    %v3205 = vld [vmem:[#allocation2 + $0xa8] sm:$0xff]
    %v3206 = vld [vmem:[#allocation2 + $0xb0] sm:$0xff]
    %v3207 = vld [vmem:[#allocation2 + $0xb8] sm:$0xff]
    %v3208 = vld [vmem:[#allocation2 + $0xc0] sm:$0xff]
    %v3209 = vld [vmem:[#allocation2 + $0xc8] sm:$0xff]
    %v3210 = vld [vmem:[#allocation2 + $0xd0] sm:$0xff]
    %v3211 = vld [vmem:[#allocation2 + $0xd8] sm:$0xff]
    %v3212 = vld [vmem:[#allocation2 + $0xe0] sm:$0xff]
    %v3213 = vld [vmem:[#allocation2 + $0xe8] sm:$0xff]
    %v3214 = vld [vmem:[#allocation2 + $0xf0] sm:$0xff]
    %v3215 = vld [vmem:[#allocation2 + $0xf8] sm:$0xff]
    %v3217 = vlaneseq
    %v3218 = vshrl.u32 %v3217, 7
    %v3219 = vsub.s32 0, %v3218
    %v3220 = vrot.slane %v50, %v3219
    %3222 = vmatprep.subr.mxu0 0.0
    %3223 = vmatpush1.msra.mxu0 %v3184
    %3224 = vmatprep.subr.mxu0 0.0
    %3225 = vmatpush1.msra.mxu0 %v3185
    %3226 = vmatprep.subr.mxu0 0.0
    %3227 = vmatpush1.msra.mxu0 %v3186
    %3228 = vmatprep.subr.mxu0 0.0
    %3229 = vmatpush1.msra.mxu0 %v3187
    %3230 = vmatprep.subr.mxu0 0.0
    %3231 = vmatpush1.msra.mxu0 %v3188
    %3232 = vmatprep.subr.mxu0 0.0
    %3233 = vmatpush1.msra.mxu0 %v3189
    %3234 = vmatprep.subr.mxu0 0.0
    %3235 = vmatpush1.msra.mxu0 %v3190
    %3236 = vmatprep.subr.mxu0 0.0
    %3237 = vmatpush1.msra.mxu0 %v3191
    %3238 = vmatprep.subr.mxu0 0.0
    %3239 = vmatpush1.msra.mxu0 %v3192
    %3240 = vmatprep.subr.mxu0 0.0
    %3241 = vmatpush1.msra.mxu0 %v3193
    %3242 = vmatprep.subr.mxu0 0.0
    %3243 = vmatpush1.msra.mxu0 %v3194
    %3244 = vmatprep.subr.mxu0 0.0
    %3245 = vmatpush1.msra.mxu0 %v3195
    %3246 = vmatprep.subr.mxu0 0.0
    %3247 = vmatpush1.msra.mxu0 %v3196
    %3248 = vmatprep.subr.mxu0 0.0
    %3249 = vmatpush1.msra.mxu0 %v3197
    %3250 = vmatprep.subr.mxu0 0.0
    %3251 = vmatpush1.msra.mxu0 %v3198
    %3252 = vmatprep.subr.mxu0 0.0
    %3253 = vmatpush1.msra.mxu0 %v3199
    %3254 = vmatprep.subr.mxu0 0.0
    %3255 = vmatpush1.msra.mxu0 %v3200
    %3256 = vmatprep.subr.mxu0 0.0
    %3257 = vmatpush1.msra.mxu0 %v3201
    %3258 = vmatprep.subr.mxu0 0.0
    %3259 = vmatpush1.msra.mxu0 %v3202
    %3260 = vmatprep.subr.mxu0 0.0
    %3261 = vmatpush1.msra.mxu0 %v3203
    %3262 = vmatprep.subr.mxu0 0.0
    %3263 = vmatpush1.msra.mxu0 %v3204
    %3264 = vmatprep.subr.mxu0 0.0
    %3265 = vmatpush1.msra.mxu0 %v3205
    %3266 = vmatprep.subr.mxu0 0.0
    %3267 = vmatpush1.msra.mxu0 %v3206
    %3268 = vmatprep.subr.mxu0 0.0
    %3269 = vmatpush1.msra.mxu0 %v3207
    %3270 = vmatprep.subr.mxu0 0.0
    %3271 = vmatpush1.msra.mxu0 %v3208
    %3272 = vmatprep.subr.mxu0 0.0
    %3273 = vmatpush1.msra.mxu0 %v3209
    %3274 = vmatprep.subr.mxu0 0.0
    %3275 = vmatpush1.msra.mxu0 %v3210
    %3276 = vmatprep.subr.mxu0 0.0
    %3277 = vmatpush1.msra.mxu0 %v3211
    %3278 = vmatprep.subr.mxu0 0.0
    %3279 = vmatpush1.msra.mxu0 %v3212
    %3280 = vmatprep.subr.mxu0 0.0
    %3281 = vmatpush1.msra.mxu0 %v3213
    %3282 = vmatprep.subr.mxu0 0.0
    %3283 = vmatpush1.msra.mxu0 %v3214
    %3284 = vmatprep.subr.mxu0 0.0
    %3285 = vmatpush1.msra.mxu0 %v3215
    %3286 = vmatprep.mubr.f32.mxu0 %v3181
    %3287 = vmatmul.mubr.f32.gmra.mrb[0].mxu0 %v3180
    %v3288 = vpop.f32.mrb[0].mxu0
    %v3289 = vadd.f32 %v3220, %v3288
    %v3290 = vpop.f32.mrb[0].mxu0
    %3291 = vmatprep.mubr.f32.mxu0 %v3183
    %3292 = vmatmul.mubr.f32.gmra.mrb[0].mxu0 %v3182
    %v3293 = vpop.f32.mrb[0].mxu0
    %v3294 = vadd.f32 %v3220, %v3293
    %v3295 = vpop.f32.mrb[0].mxu0
    %3296 = vdwg.mxu0
    %3297 = vst [vmem:[#allocation5] sm:$0xff] %v3289
    %3298 = vst [vmem:[#allocation5 + $0x8] sm:$0xff] %v3294
    // Predicated region
    $region42: #{mnist_encoder_forward.1} parent=1 // pred_check
      _
    $region43: #{mnist_encoder_forward.1} parent=1 // pred_check_branch
      %3300 = sbr.rel (0) target = $region45
    $region44: #{mnist_encoder_forward.1} parent=1 // pred_region
      %s3302 = ssub.s32 256, 256
      %3303 = vsyncadd [#allocation4], %s3302
      %s3304 = sshll.u32 [#allocation5], 4
      %s3305 = int_to_ptr.vmem [resolvable:$true] %s3304
      %3310 = dma.vmem_to_hbm [thread:$0]  %s3305, 256, %s9, [#allocation4], 128, 128, 8
    $region45: #{mnist_encoder_forward.1} parent=1 // pred_fallthru
      _
    // Predicated region
    $region46: #{mnist_encoder_forward.1} parent=1 // pred_check
      _
    $region47: #{mnist_encoder_forward.1} parent=1 // pred_check_branch
      %3312 = sbr.rel (0) target = $region49
    $region48: #{mnist_encoder_forward.1} parent=1 // pred_region
      %3313 = dma.done [#allocation4], 256
    $region49: #{mnist_encoder_forward.1} parent=1 // pred_fallthru
      _
    %3314 = vsyncpa [#allocation3], 1
    %3315 = vsyncpa [#allocation4], 1

</llo_original>
